<compile_context>
chip_gen: v6e
topology: v6e:2x2x1
jax: 0.10.0
libtpu: 0.0.40
codegen_flags: <defaults>
</compile_context>

<pallas_src>
import functools
import math

import jax
import jax.numpy as jnp
from jax.experimental import pallas as pl
from jax.experimental.pallas import tpu as pltpu  # noqa: F401  (TPU backend)


# ---------------------------------------------------------------------------
# Fused Pallas kernel: the full Coloring_Transformer forward pass.
# ---------------------------------------------------------------------------
def _fused_coloring_kernel(*refs, heads, n, couts):
    """refs layout:
         [0]          x         (N, Fin0)
         [1]          bd_bias   (H*N, H*N) additive attention mask
         [2+2*l]      layer l:  w_all (Fin, 3*H*C + C)   [wq|wk|wv|ws]
         [3+2*l]                b_all (1,   3*H*C + C)   [bq|bk|bv|bs]
         [2+2*L]      x5 output     (N, 5)
         [3+2*L]      final output  (N, couts[-1])
    """
    n_layers = len(couts)
    x_ref, bias_ref = refs[0], refs[1]
    x5_ref = refs[2 + 2 * n_layers]
    out_ref = refs[3 + 2 * n_layers]

    bd_bias = bias_ref[...]              # (H*N, H*N), reused by every layer/head
    inv_heads = jnp.float32(1.0 / heads)

    def conv_layer(x, w_ref, b_ref, cout):
        """One TransformerConv (concat=False, root_weight=True, bias) + ReLU."""
        hc = heads * cout
        # Fused q/k/v/skip projection: one (N, Fin) x (Fin, 3*H*C + C) MXU pass.
        proj = jnp.dot(x, w_ref[...],
                       preferred_element_type=jnp.float32) + b_ref[...]

        # Head-major stacking (H*N, C): heads go on the sublane axis so a
        # single matmul covers every head.
        def head_major(off):
            return jnp.concatenate(
                [proj[:, off + h * cout: off + (h + 1) * cout]
                 for h in range(heads)],
                axis=0)

        # Fold the 1/sqrt(C) attention scale into q (small tensor) rather
        # than into the (H*N, H*N) scores.
        q_hm = head_major(0) * jnp.float32(1.0 / math.sqrt(cout))
        k_hm = head_major(hc)
        v_hm = head_major(2 * hc)
        skip = proj[:, 3 * hc: 3 * hc + cout]            # lin_skip(x) + bias

        # scores[h*N+i, h'*N+j] = <q_h[i], k_h'[j]>; the block-diag additive
        # bias keeps only h == h' and existing edges j -> i.
        scores = jax.lax.dot_general(
            q_hm, k_hm, (((1,), (1,)), ((), ())),
            preferred_element_type=jnp.float32) + bd_bias

        # Masked softmax over incoming neighbors. The 1/heads head-mean factor
        # is folded into the normalization; rows with no valid (in-head,
        # in-graph) neighbor aggregate to exactly 0 (PyG semantics).
        m = jnp.max(scores, axis=-1, keepdims=True)
        p = jnp.exp(scores - m)
        denom = jnp.sum(p, axis=-1, keepdims=True)
        inv = jnp.where(m > jnp.float32(-1e29),
                        pl.reciprocal(denom, approx=True) * inv_heads,
                        jnp.float32(0.0))
        alpha = p * inv                                   # (H*N, H*N)

        o_hm = jnp.dot(alpha, v_hm, preferred_element_type=jnp.float32)

        # Head mean = sum of the H sublane blocks (1/H already applied above).
        o = o_hm[0:n]
        for h in range(1, heads):
            o = o + o_hm[h * n:(h + 1) * n]

        # Root (skip) connection, then ReLU (every conv in this model is ReLU'd).
        return jnp.maximum(o + skip, jnp.float32(0.0))

    def softmax_rows(t):
        mm = jnp.max(t, axis=-1, keepdims=True)
        e = jnp.exp(t - mm)
        return e / jnp.sum(e, axis=-1, keepdims=True)

    h = x_ref[...]
    for l in range(3):                       # conv11, conv12, conv13 (+ ReLU)
        h = conv_layer(h, refs[2 + 2 * l], refs[3 + 2 * l], couts[l])

    x5 = softmax_rows(h[:, :5])              # softmax over the first 5 columns
    x5_ref[...] = x5
    h = jnp.concatenate([x5, h[:, 5:]], axis=1)

    for l in range(3, 6):                    # conv21, conv22, conv23 (+ ReLU)
        h = conv_layer(h, refs[2 + 2 * l], refs[3 + 2 * l], couts[l])

    out_ref[...] = softmax_rows(h)           # final softmax over features


# ---------------------------------------------------------------------------
# Wrapper: pack parameters, build the shared block-diagonal mask, one call.
# ---------------------------------------------------------------------------
@jax.jit
def coloring_transformer_forward(x, adj, layers):
    assert len(layers) == 6
    n = x.shape[0]
    heads = layers[0]["wq"].shape[1] // layers[0]["ws"].shape[1]
    couts = tuple(int(p["ws"].shape[1]) for p in layers)

    # Additive attention mask, hoisted out of the kernel: 0 where (same head)
    # and (edge j -> i exists), -1e30 elsewhere. Shared by all heads & layers.
    valid = adj > 0.0                                            # (N, N)
    eye_h = jnp.eye(heads, dtype=bool)
    bd_valid = (eye_h[:, None, :, None] & valid[None, :, None, :]
                ).reshape(heads * n, heads * n)
    bd_bias = jnp.where(bd_valid, 0.0, -1e30).astype(jnp.float32)

    operands = [x.astype(jnp.float32), bd_bias]
    for p in layers:
        # Fuse q/k/v/skip weights (and biases) into one projection per layer.
        w_all = jnp.concatenate([p["wq"], p["wk"], p["wv"], p["ws"]], axis=1)
        b_all = jnp.concatenate([p["bq"], p["bk"], p["bv"], p["bs"]], axis=1)
        operands += [w_all, b_all]

    kernel = functools.partial(_fused_coloring_kernel,
                               heads=int(heads), n=int(n), couts=couts)

    x5, out = pl.pallas_call(
        kernel,
        # Gridless call: every operand/output is a full-array VMEM block;
        # nothing to pipeline or shard at this problem size.
        out_shape=(jax.ShapeDtypeStruct((n, 5), jnp.float32),
                   jax.ShapeDtypeStruct((n, couts[-1]), jnp.float32)),
    )(*operands)
    return x5, out


# ---------------------------------------------------------------------------
# Parameter init (deterministic, Glorot-uniform like PyG Linear)
# ---------------------------------------------------------------------------
def init_layer(key, fin, cout, heads):
    hc = heads * cout
    ks = jax.random.split(key, 8)

    def glorot(k, shape):
        fan_in, fan_out = shape
        lim = math.sqrt(6.0 / (fan_in + fan_out))
        return jax.random.uniform(k, shape, jnp.float32, -lim, lim)

    return dict(
        wq=glorot(ks[0], (fin, hc)),
        bq=0.01 * jax.random.normal(ks[1], (1, hc), jnp.float32),
        wk=glorot(ks[2], (fin, hc)),
        bk=0.01 * jax.random.normal(ks[3], (1, hc), jnp.float32),
        wv=glorot(ks[4], (fin, hc)),
        bv=0.01 * jax.random.normal(ks[5], (1, hc), jnp.float32),
        ws=glorot(ks[6], (fin, cout)),
        bs=0.01 * jax.random.normal(ks[7], (1, cout), jnp.float32),
    )


if __name__ == "__main__":
    N = 16           # number of graph nodes
    INPUT_DIM = 8    # must be > 5 (x[:, :5] split in the reference model)
    HIDDEN_DIM = 32
    HEADS = 4

    key = jax.random.PRNGKey(0)
    k_x, k_p = jax.random.split(key)

    # Node features (N, input_dim)
    x = jax.random.normal(k_x, (N, INPUT_DIM), jnp.float32)

    # Graph: bidirectional ring + chords.  edge_index[0]=src, edge_index[1]=dst.
    src, dst = [], []
    for i in range(N):
        src += [i, (i + 1) % N, i]
        dst += [(i + 1) % N, i, (i + 5) % N]
    edge_index = jnp.array([src, dst], dtype=jnp.int32)   # (2, E)

    # Dense adjacency mask: adj[dst, src] = 1 (message src -> dst).
    adj = jnp.zeros((N, N), jnp.float32).at[edge_index[1], edge_index[0]].set(1.0)

    # Layer dims: conv11..conv23
    dims = [(INPUT_DIM, HIDDEN_DIM)] + [(HIDDEN_DIM, HIDDEN_DIM)] * 4 \
        + [(HIDDEN_DIM, INPUT_DIM)]
    layer_keys = jax.random.split(k_p, len(dims))
    layers = [init_layer(k, fin, cout, HEADS)
              for k, (fin, cout) in zip(layer_keys, dims)]

    x_5, out = coloring_transformer_forward(x, adj, layers)
    jax.block_until_ready((x_5, out))

    assert x_5.shape == (N, 5)
    assert out.shape == (N, INPUT_DIM)
    assert bool(jnp.all(jnp.isfinite(x_5))) and bool(jnp.all(jnp.isfinite(out)))
    assert bool(jnp.allclose(jnp.sum(x_5, axis=1), 1.0, atol=1e-3))
    assert bool(jnp.allclose(jnp.sum(out, axis=1), 1.0, atol=1e-3))
    print("KERNEL_OK")
</pallas_src>

<mosaic_0001>
module attributes {stable_mosaic.version = 11 : i64} {
  func.func @_fused_coloring_kernel(%arg0: memref<16x8xf32, #tpu.memory_space<vmem>>, %arg1: memref<64x64xf32, #tpu.memory_space<vmem>>, %arg2: memref<8x416xf32, #tpu.memory_space<vmem>>, %arg3: memref<1x416xf32, #tpu.memory_space<vmem>>, %arg4: memref<32x416xf32, #tpu.memory_space<vmem>>, %arg5: memref<1x416xf32, #tpu.memory_space<vmem>>, %arg6: memref<32x416xf32, #tpu.memory_space<vmem>>, %arg7: memref<1x416xf32, #tpu.memory_space<vmem>>, %arg8: memref<32x416xf32, #tpu.memory_space<vmem>>, %arg9: memref<1x416xf32, #tpu.memory_space<vmem>>, %arg10: memref<32x416xf32, #tpu.memory_space<vmem>>, %arg11: memref<1x416xf32, #tpu.memory_space<vmem>>, %arg12: memref<32x104xf32, #tpu.memory_space<vmem>>, %arg13: memref<1x104xf32, #tpu.memory_space<vmem>>, %arg14: memref<16x5xf32, #tpu.memory_space<vmem>>, %arg15: memref<16x8xf32, #tpu.memory_space<vmem>>) attributes {dimension_semantics = [], scalar_prefetch = 0 : i64, scratch_operands = 0 : i64, tpu.core_type = #tpu.core_type<tc>} {
    %c0 = arith.constant 0 : index
    %c0_0 = arith.constant 0 : index
    %0 = vector.load %arg1[%c0, %c0_0] : memref<64x64xf32, #tpu.memory_space<vmem>>, vector<64x64xf32>
    %c0_1 = arith.constant 0 : index
    %c0_2 = arith.constant 0 : index
    %1 = vector.load %arg0[%c0_1, %c0_2] : memref<16x8xf32, #tpu.memory_space<vmem>>, vector<16x8xf32>
    %c0_3 = arith.constant 0 : index
    %c0_4 = arith.constant 0 : index
    %2 = vector.load %arg2[%c0_3, %c0_4] : memref<8x416xf32, #tpu.memory_space<vmem>>, vector<8x416xf32>
    %cst = arith.constant dense<0.000000e+00> : vector<16x416xf32>
    %3 = tpu.matmul %1, %2, %cst {dimension_numbers = #tpu.dot_dimension_numbers<[1], [0], [0], [1], [0, 0, 1, 1], [], []>} : vector<16x8xf32>, vector<8x416xf32>, vector<16x416xf32> -> vector<16x416xf32>
    %c0_5 = arith.constant 0 : index
    %c0_6 = arith.constant 0 : index
    %4 = vector.load %arg3[%c0_5, %c0_6] : memref<1x416xf32, #tpu.memory_space<vmem>>, vector<1x416xf32>
    %5 = vector.broadcast %4 : vector<1x416xf32> to vector<16x416xf32>
    %6 = arith.addf %3, %5 : vector<16x416xf32>
    %7 = vector.extract_strided_slice %6 {offsets = [0, 0], sizes = [16, 32], strides = [1, 1]} : vector<16x416xf32> to vector<16x32xf32>
    %8 = vector.extract_strided_slice %6 {offsets = [0, 32], sizes = [16, 32], strides = [1, 1]} : vector<16x416xf32> to vector<16x32xf32>
    %9 = vector.extract_strided_slice %6 {offsets = [0, 64], sizes = [16, 32], strides = [1, 1]} : vector<16x416xf32> to vector<16x32xf32>
    %10 = vector.extract_strided_slice %6 {offsets = [0, 96], sizes = [16, 32], strides = [1, 1]} : vector<16x416xf32> to vector<16x32xf32>
    %11 = tpu.concatenate %7, %8, %9, %10 in 0 : vector<16x32xf32>, vector<16x32xf32>, vector<16x32xf32>, vector<16x32xf32> -> vector<64x32xf32>
    %cst_7 = arith.constant 0.176776692 : f32
    %12 = vector.broadcast %cst_7 : f32 to vector<64x32xf32>
    %13 = arith.mulf %11, %12 : vector<64x32xf32>
    %14 = vector.extract_strided_slice %6 {offsets = [0, 128], sizes = [16, 32], strides = [1, 1]} : vector<16x416xf32> to vector<16x32xf32>
    %15 = vector.extract_strided_slice %6 {offsets = [0, 160], sizes = [16, 32], strides = [1, 1]} : vector<16x416xf32> to vector<16x32xf32>
    %16 = vector.extract_strided_slice %6 {offsets = [0, 192], sizes = [16, 32], strides = [1, 1]} : vector<16x416xf32> to vector<16x32xf32>
    %17 = vector.extract_strided_slice %6 {offsets = [0, 224], sizes = [16, 32], strides = [1, 1]} : vector<16x416xf32> to vector<16x32xf32>
    %18 = tpu.concatenate %14, %15, %16, %17 in 0 : vector<16x32xf32>, vector<16x32xf32>, vector<16x32xf32>, vector<16x32xf32> -> vector<64x32xf32>
    %19 = vector.extract_strided_slice %6 {offsets = [0, 256], sizes = [16, 32], strides = [1, 1]} : vector<16x416xf32> to vector<16x32xf32>
    %20 = vector.extract_strided_slice %6 {offsets = [0, 288], sizes = [16, 32], strides = [1, 1]} : vector<16x416xf32> to vector<16x32xf32>
    %21 = vector.extract_strided_slice %6 {offsets = [0, 320], sizes = [16, 32], strides = [1, 1]} : vector<16x416xf32> to vector<16x32xf32>
    %22 = vector.extract_strided_slice %6 {offsets = [0, 352], sizes = [16, 32], strides = [1, 1]} : vector<16x416xf32> to vector<16x32xf32>
    %23 = tpu.concatenate %19, %20, %21, %22 in 0 : vector<16x32xf32>, vector<16x32xf32>, vector<16x32xf32>, vector<16x32xf32> -> vector<64x32xf32>
    %24 = vector.extract_strided_slice %6 {offsets = [0, 384], sizes = [16, 32], strides = [1, 1]} : vector<16x416xf32> to vector<16x32xf32>
    %cst_8 = arith.constant dense<0.000000e+00> : vector<64x64xf32>
    %25 = tpu.matmul %13, %18, %cst_8 {dimension_numbers = #tpu.dot_dimension_numbers<[1], [1], [0], [0], [0, 0, 1, 0], [], []>} : vector<64x32xf32>, vector<64x32xf32>, vector<64x64xf32> -> vector<64x64xf32>
    %26 = arith.addf %25, %0 : vector<64x64xf32>
    %cst_9 = arith.constant dense<0xFF800000> : vector<64xf32>
    %27 = vector.multi_reduction <maximumf>, %26, %cst_9 [1] : vector<64x64xf32> to vector<64xf32>
    %28 = vector.shape_cast %27 : vector<64xf32> to vector<64x1xf32>
    %29 = vector.broadcast %28 : vector<64x1xf32> to vector<64x64xf32>
    %30 = arith.subf %26, %29 : vector<64x64xf32>
    %31 = math.exp %30 : vector<64x64xf32>
    %cst_10 = arith.constant dense<0.000000e+00> : vector<64xf32>
    %32 = vector.multi_reduction <add>, %31, %cst_10 [1] : vector<64x64xf32> to vector<64xf32>
    %33 = vector.shape_cast %32 : vector<64xf32> to vector<64x1xf32>
    %cst_11 = arith.constant -1.000000e+29 : f32
    %34 = vector.broadcast %cst_11 : f32 to vector<64x1xf32>
    %35 = arith.cmpf ogt, %28, %34 : vector<64x1xf32>
    %36 = tpu.reciprocal %33 {approx = true} : vector<64x1xf32> -> vector<64x1xf32>
    %cst_12 = arith.constant 2.500000e-01 : f32
    %37 = vector.broadcast %cst_12 : f32 to vector<64x1xf32>
    %38 = arith.mulf %36, %37 : vector<64x1xf32>
    %cst_13 = arith.constant 0.000000e+00 : f32
    %39 = vector.broadcast %cst_13 : f32 to vector<64x1xf32>
    %40 = arith.select %35, %38, %39 : vector<64x1xi1>, vector<64x1xf32>
    %41 = vector.broadcast %40 : vector<64x1xf32> to vector<64x64xf32>
    %42 = arith.mulf %31, %41 : vector<64x64xf32>
    %cst_14 = arith.constant dense<0.000000e+00> : vector<64x32xf32>
    %43 = tpu.matmul %42, %23, %cst_14 {dimension_numbers = #tpu.dot_dimension_numbers<[1], [0], [0], [1], [0, 0, 1, 1], [], []>} : vector<64x64xf32>, vector<64x32xf32>, vector<64x32xf32> -> vector<64x32xf32>
    %44 = vector.extract_strided_slice %43 {offsets = [0, 0], sizes = [16, 32], strides = [1, 1]} : vector<64x32xf32> to vector<16x32xf32>
    %45 = vector.extract_strided_slice %43 {offsets = [16, 0], sizes = [16, 32], strides = [1, 1]} : vector<64x32xf32> to vector<16x32xf32>
    %46 = arith.addf %44, %45 : vector<16x32xf32>
    %47 = vector.extract_strided_slice %43 {offsets = [32, 0], sizes = [16, 32], strides = [1, 1]} : vector<64x32xf32> to vector<16x32xf32>
    %48 = arith.addf %46, %47 : vector<16x32xf32>
    %49 = vector.extract_strided_slice %43 {offsets = [48, 0], sizes = [16, 32], strides = [1, 1]} : vector<64x32xf32> to vector<16x32xf32>
    %50 = arith.addf %48, %49 : vector<16x32xf32>
    %51 = arith.addf %50, %24 : vector<16x32xf32>
    %cst_15 = arith.constant 0.000000e+00 : f32
    %52 = vector.broadcast %cst_15 : f32 to vector<16x32xf32>
    %53 = arith.maximumf %51, %52 : vector<16x32xf32>
    %c0_16 = arith.constant 0 : index
    %c0_17 = arith.constant 0 : index
    %54 = vector.load %arg4[%c0_16, %c0_17] : memref<32x416xf32, #tpu.memory_space<vmem>>, vector<32x416xf32>
    %cst_18 = arith.constant dense<0.000000e+00> : vector<16x416xf32>
    %55 = tpu.matmul %53, %54, %cst_18 {dimension_numbers = #tpu.dot_dimension_numbers<[1], [0], [0], [1], [0, 0, 1, 1], [], []>} : vector<16x32xf32>, vector<32x416xf32>, vector<16x416xf32> -> vector<16x416xf32>
    %c0_19 = arith.constant 0 : index
    %c0_20 = arith.constant 0 : index
    %56 = vector.load %arg5[%c0_19, %c0_20] : memref<1x416xf32, #tpu.memory_space<vmem>>, vector<1x416xf32>
    %57 = vector.broadcast %56 : vector<1x416xf32> to vector<16x416xf32>
    %58 = arith.addf %55, %57 : vector<16x416xf32>
    %59 = vector.extract_strided_slice %58 {offsets = [0, 0], sizes = [16, 32], strides = [1, 1]} : vector<16x416xf32> to vector<16x32xf32>
    %60 = vector.extract_strided_slice %58 {offsets = [0, 32], sizes = [16, 32], strides = [1, 1]} : vector<16x416xf32> to vector<16x32xf32>
    %61 = vector.extract_strided_slice %58 {offsets = [0, 64], sizes = [16, 32], strides = [1, 1]} : vector<16x416xf32> to vector<16x32xf32>
    %62 = vector.extract_strided_slice %58 {offsets = [0, 96], sizes = [16, 32], strides = [1, 1]} : vector<16x416xf32> to vector<16x32xf32>
    %63 = tpu.concatenate %59, %60, %61, %62 in 0 : vector<16x32xf32>, vector<16x32xf32>, vector<16x32xf32>, vector<16x32xf32> -> vector<64x32xf32>
    %cst_21 = arith.constant 0.176776692 : f32
    %64 = vector.broadcast %cst_21 : f32 to vector<64x32xf32>
    %65 = arith.mulf %63, %64 : vector<64x32xf32>
    %66 = vector.extract_strided_slice %58 {offsets = [0, 128], sizes = [16, 32], strides = [1, 1]} : vector<16x416xf32> to vector<16x32xf32>
    %67 = vector.extract_strided_slice %58 {offsets = [0, 160], sizes = [16, 32], strides = [1, 1]} : vector<16x416xf32> to vector<16x32xf32>
    %68 = vector.extract_strided_slice %58 {offsets = [0, 192], sizes = [16, 32], strides = [1, 1]} : vector<16x416xf32> to vector<16x32xf32>
    %69 = vector.extract_strided_slice %58 {offsets = [0, 224], sizes = [16, 32], strides = [1, 1]} : vector<16x416xf32> to vector<16x32xf32>
    %70 = tpu.concatenate %66, %67, %68, %69 in 0 : vector<16x32xf32>, vector<16x32xf32>, vector<16x32xf32>, vector<16x32xf32> -> vector<64x32xf32>
    %71 = vector.extract_strided_slice %58 {offsets = [0, 256], sizes = [16, 32], strides = [1, 1]} : vector<16x416xf32> to vector<16x32xf32>
    %72 = vector.extract_strided_slice %58 {offsets = [0, 288], sizes = [16, 32], strides = [1, 1]} : vector<16x416xf32> to vector<16x32xf32>
    %73 = vector.extract_strided_slice %58 {offsets = [0, 320], sizes = [16, 32], strides = [1, 1]} : vector<16x416xf32> to vector<16x32xf32>
    %74 = vector.extract_strided_slice %58 {offsets = [0, 352], sizes = [16, 32], strides = [1, 1]} : vector<16x416xf32> to vector<16x32xf32>
    %75 = tpu.concatenate %71, %72, %73, %74 in 0 : vector<16x32xf32>, vector<16x32xf32>, vector<16x32xf32>, vector<16x32xf32> -> vector<64x32xf32>
    %76 = vector.extract_strided_slice %58 {offsets = [0, 384], sizes = [16, 32], strides = [1, 1]} : vector<16x416xf32> to vector<16x32xf32>
    %cst_22 = arith.constant dense<0.000000e+00> : vector<64x64xf32>
    %77 = tpu.matmul %65, %70, %cst_22 {dimension_numbers = #tpu.dot_dimension_numbers<[1], [1], [0], [0], [0, 0, 1, 0], [], []>} : vector<64x32xf32>, vector<64x32xf32>, vector<64x64xf32> -> vector<64x64xf32>
    %78 = arith.addf %77, %0 : vector<64x64xf32>
    %cst_23 = arith.constant dense<0xFF800000> : vector<64xf32>
    %79 = vector.multi_reduction <maximumf>, %78, %cst_23 [1] : vector<64x64xf32> to vector<64xf32>
    %80 = vector.shape_cast %79 : vector<64xf32> to vector<64x1xf32>
    %81 = vector.broadcast %80 : vector<64x1xf32> to vector<64x64xf32>
    %82 = arith.subf %78, %81 : vector<64x64xf32>
    %83 = math.exp %82 : vector<64x64xf32>
    %cst_24 = arith.constant dense<0.000000e+00> : vector<64xf32>
    %84 = vector.multi_reduction <add>, %83, %cst_24 [1] : vector<64x64xf32> to vector<64xf32>
    %85 = vector.shape_cast %84 : vector<64xf32> to vector<64x1xf32>
    %cst_25 = arith.constant -1.000000e+29 : f32
    %86 = vector.broadcast %cst_25 : f32 to vector<64x1xf32>
    %87 = arith.cmpf ogt, %80, %86 : vector<64x1xf32>
    %88 = tpu.reciprocal %85 {approx = true} : vector<64x1xf32> -> vector<64x1xf32>
    %cst_26 = arith.constant 2.500000e-01 : f32
    %89 = vector.broadcast %cst_26 : f32 to vector<64x1xf32>
    %90 = arith.mulf %88, %89 : vector<64x1xf32>
    %cst_27 = arith.constant 0.000000e+00 : f32
    %91 = vector.broadcast %cst_27 : f32 to vector<64x1xf32>
    %92 = arith.select %87, %90, %91 : vector<64x1xi1>, vector<64x1xf32>
    %93 = vector.broadcast %92 : vector<64x1xf32> to vector<64x64xf32>
    %94 = arith.mulf %83, %93 : vector<64x64xf32>
    %cst_28 = arith.constant dense<0.000000e+00> : vector<64x32xf32>
    %95 = tpu.matmul %94, %75, %cst_28 {dimension_numbers = #tpu.dot_dimension_numbers<[1], [0], [0], [1], [0, 0, 1, 1], [], []>} : vector<64x64xf32>, vector<64x32xf32>, vector<64x32xf32> -> vector<64x32xf32>
    %96 = vector.extract_strided_slice %95 {offsets = [0, 0], sizes = [16, 32], strides = [1, 1]} : vector<64x32xf32> to vector<16x32xf32>
    %97 = vector.extract_strided_slice %95 {offsets = [16, 0], sizes = [16, 32], strides = [1, 1]} : vector<64x32xf32> to vector<16x32xf32>
    %98 = arith.addf %96, %97 : vector<16x32xf32>
    %99 = vector.extract_strided_slice %95 {offsets = [32, 0], sizes = [16, 32], strides = [1, 1]} : vector<64x32xf32> to vector<16x32xf32>
    %100 = arith.addf %98, %99 : vector<16x32xf32>
    %101 = vector.extract_strided_slice %95 {offsets = [48, 0], sizes = [16, 32], strides = [1, 1]} : vector<64x32xf32> to vector<16x32xf32>
    %102 = arith.addf %100, %101 : vector<16x32xf32>
    %103 = arith.addf %102, %76 : vector<16x32xf32>
    %cst_29 = arith.constant 0.000000e+00 : f32
    %104 = vector.broadcast %cst_29 : f32 to vector<16x32xf32>
    %105 = arith.maximumf %103, %104 : vector<16x32xf32>
    %c0_30 = arith.constant 0 : index
    %c0_31 = arith.constant 0 : index
    %106 = vector.load %arg6[%c0_30, %c0_31] : memref<32x416xf32, #tpu.memory_space<vmem>>, vector<32x416xf32>
    %cst_32 = arith.constant dense<0.000000e+00> : vector<16x416xf32>
    %107 = tpu.matmul %105, %106, %cst_32 {dimension_numbers = #tpu.dot_dimension_numbers<[1], [0], [0], [1], [0, 0, 1, 1], [], []>} : vector<16x32xf32>, vector<32x416xf32>, vector<16x416xf32> -> vector<16x416xf32>
    %c0_33 = arith.constant 0 : index
    %c0_34 = arith.constant 0 : index
    %108 = vector.load %arg7[%c0_33, %c0_34] : memref<1x416xf32, #tpu.memory_space<vmem>>, vector<1x416xf32>
    %109 = vector.broadcast %108 : vector<1x416xf32> to vector<16x416xf32>
    %110 = arith.addf %107, %109 : vector<16x416xf32>
    %111 = vector.extract_strided_slice %110 {offsets = [0, 0], sizes = [16, 32], strides = [1, 1]} : vector<16x416xf32> to vector<16x32xf32>
    %112 = vector.extract_strided_slice %110 {offsets = [0, 32], sizes = [16, 32], strides = [1, 1]} : vector<16x416xf32> to vector<16x32xf32>
    %113 = vector.extract_strided_slice %110 {offsets = [0, 64], sizes = [16, 32], strides = [1, 1]} : vector<16x416xf32> to vector<16x32xf32>
    %114 = vector.extract_strided_slice %110 {offsets = [0, 96], sizes = [16, 32], strides = [1, 1]} : vector<16x416xf32> to vector<16x32xf32>
    %115 = tpu.concatenate %111, %112, %113, %114 in 0 : vector<16x32xf32>, vector<16x32xf32>, vector<16x32xf32>, vector<16x32xf32> -> vector<64x32xf32>
    %cst_35 = arith.constant 0.176776692 : f32
    %116 = vector.broadcast %cst_35 : f32 to vector<64x32xf32>
    %117 = arith.mulf %115, %116 : vector<64x32xf32>
    %118 = vector.extract_strided_slice %110 {offsets = [0, 128], sizes = [16, 32], strides = [1, 1]} : vector<16x416xf32> to vector<16x32xf32>
    %119 = vector.extract_strided_slice %110 {offsets = [0, 160], sizes = [16, 32], strides = [1, 1]} : vector<16x416xf32> to vector<16x32xf32>
    %120 = vector.extract_strided_slice %110 {offsets = [0, 192], sizes = [16, 32], strides = [1, 1]} : vector<16x416xf32> to vector<16x32xf32>
    %121 = vector.extract_strided_slice %110 {offsets = [0, 224], sizes = [16, 32], strides = [1, 1]} : vector<16x416xf32> to vector<16x32xf32>
    %122 = tpu.concatenate %118, %119, %120, %121 in 0 : vector<16x32xf32>, vector<16x32xf32>, vector<16x32xf32>, vector<16x32xf32> -> vector<64x32xf32>
    %123 = vector.extract_strided_slice %110 {offsets = [0, 256], sizes = [16, 32], strides = [1, 1]} : vector<16x416xf32> to vector<16x32xf32>
    %124 = vector.extract_strided_slice %110 {offsets = [0, 288], sizes = [16, 32], strides = [1, 1]} : vector<16x416xf32> to vector<16x32xf32>
    %125 = vector.extract_strided_slice %110 {offsets = [0, 320], sizes = [16, 32], strides = [1, 1]} : vector<16x416xf32> to vector<16x32xf32>
    %126 = vector.extract_strided_slice %110 {offsets = [0, 352], sizes = [16, 32], strides = [1, 1]} : vector<16x416xf32> to vector<16x32xf32>
    %127 = tpu.concatenate %123, %124, %125, %126 in 0 : vector<16x32xf32>, vector<16x32xf32>, vector<16x32xf32>, vector<16x32xf32> -> vector<64x32xf32>
    %128 = vector.extract_strided_slice %110 {offsets = [0, 384], sizes = [16, 32], strides = [1, 1]} : vector<16x416xf32> to vector<16x32xf32>
    %cst_36 = arith.constant dense<0.000000e+00> : vector<64x64xf32>
    %129 = tpu.matmul %117, %122, %cst_36 {dimension_numbers = #tpu.dot_dimension_numbers<[1], [1], [0], [0], [0, 0, 1, 0], [], []>} : vector<64x32xf32>, vector<64x32xf32>, vector<64x64xf32> -> vector<64x64xf32>
    %130 = arith.addf %129, %0 : vector<64x64xf32>
    %cst_37 = arith.constant dense<0xFF800000> : vector<64xf32>
    %131 = vector.multi_reduction <maximumf>, %130, %cst_37 [1] : vector<64x64xf32> to vector<64xf32>
    %132 = vector.shape_cast %131 : vector<64xf32> to vector<64x1xf32>
    %133 = vector.broadcast %132 : vector<64x1xf32> to vector<64x64xf32>
    %134 = arith.subf %130, %133 : vector<64x64xf32>
    %135 = math.exp %134 : vector<64x64xf32>
    %cst_38 = arith.constant dense<0.000000e+00> : vector<64xf32>
    %136 = vector.multi_reduction <add>, %135, %cst_38 [1] : vector<64x64xf32> to vector<64xf32>
    %137 = vector.shape_cast %136 : vector<64xf32> to vector<64x1xf32>
    %cst_39 = arith.constant -1.000000e+29 : f32
    %138 = vector.broadcast %cst_39 : f32 to vector<64x1xf32>
    %139 = arith.cmpf ogt, %132, %138 : vector<64x1xf32>
    %140 = tpu.reciprocal %137 {approx = true} : vector<64x1xf32> -> vector<64x1xf32>
    %cst_40 = arith.constant 2.500000e-01 : f32
    %141 = vector.broadcast %cst_40 : f32 to vector<64x1xf32>
    %142 = arith.mulf %140, %141 : vector<64x1xf32>
    %cst_41 = arith.constant 0.000000e+00 : f32
    %143 = vector.broadcast %cst_41 : f32 to vector<64x1xf32>
    %144 = arith.select %139, %142, %143 : vector<64x1xi1>, vector<64x1xf32>
    %145 = vector.broadcast %144 : vector<64x1xf32> to vector<64x64xf32>
    %146 = arith.mulf %135, %145 : vector<64x64xf32>
    %cst_42 = arith.constant dense<0.000000e+00> : vector<64x32xf32>
    %147 = tpu.matmul %146, %127, %cst_42 {dimension_numbers = #tpu.dot_dimension_numbers<[1], [0], [0], [1], [0, 0, 1, 1], [], []>} : vector<64x64xf32>, vector<64x32xf32>, vector<64x32xf32> -> vector<64x32xf32>
    %148 = vector.extract_strided_slice %147 {offsets = [0, 0], sizes = [16, 32], strides = [1, 1]} : vector<64x32xf32> to vector<16x32xf32>
    %149 = vector.extract_strided_slice %147 {offsets = [16, 0], sizes = [16, 32], strides = [1, 1]} : vector<64x32xf32> to vector<16x32xf32>
    %150 = arith.addf %148, %149 : vector<16x32xf32>
    %151 = vector.extract_strided_slice %147 {offsets = [32, 0], sizes = [16, 32], strides = [1, 1]} : vector<64x32xf32> to vector<16x32xf32>
    %152 = arith.addf %150, %151 : vector<16x32xf32>
    %153 = vector.extract_strided_slice %147 {offsets = [48, 0], sizes = [16, 32], strides = [1, 1]} : vector<64x32xf32> to vector<16x32xf32>
    %154 = arith.addf %152, %153 : vector<16x32xf32>
    %155 = arith.addf %154, %128 : vector<16x32xf32>
    %cst_43 = arith.constant 0.000000e+00 : f32
    %156 = vector.broadcast %cst_43 : f32 to vector<16x32xf32>
    %157 = arith.maximumf %155, %156 : vector<16x32xf32>
    %158 = vector.extract_strided_slice %157 {offsets = [0, 0], sizes = [16, 5], strides = [1, 1]} : vector<16x32xf32> to vector<16x5xf32>
    %cst_44 = arith.constant dense<0xFF800000> : vector<16xf32>
    %159 = vector.multi_reduction <maximumf>, %158, %cst_44 [1] : vector<16x5xf32> to vector<16xf32>
    %160 = vector.shape_cast %159 : vector<16xf32> to vector<16x1xf32>
    %161 = vector.broadcast %160 : vector<16x1xf32> to vector<16x5xf32>
    %162 = arith.subf %158, %161 : vector<16x5xf32>
    %163 = math.exp %162 : vector<16x5xf32>
    %cst_45 = arith.constant dense<0.000000e+00> : vector<16xf32>
    %164 = vector.multi_reduction <add>, %163, %cst_45 [1] : vector<16x5xf32> to vector<16xf32>
    %165 = vector.shape_cast %164 : vector<16xf32> to vector<16x1xf32>
    %166 = vector.broadcast %165 : vector<16x1xf32> to vector<16x5xf32>
    %167 = arith.divf %163, %166 : vector<16x5xf32>
    %c0_46 = arith.constant 0 : index
    %c0_47 = arith.constant 0 : index
    %168 = vector.load %arg14[%c0_46, %c0_47] : memref<16x5xf32, #tpu.memory_space<vmem>>, vector<16x5xf32>
    tpu.vector_store %arg14[%c0_46, %c0_47], %167 {strides = array<i32>} : memref<16x5xf32, #tpu.memory_space<vmem>>, vector<16x5xf32>,
    %169 = vector.extract_strided_slice %157 {offsets = [0, 5], sizes = [16, 27], strides = [1, 1]} : vector<16x32xf32> to vector<16x27xf32>
    %170 = tpu.concatenate %167, %169 in 1 : vector<16x5xf32>, vector<16x27xf32> -> vector<16x32xf32>
    %c0_48 = arith.constant 0 : index
    %c0_49 = arith.constant 0 : index
    %171 = vector.load %arg8[%c0_48, %c0_49] : memref<32x416xf32, #tpu.memory_space<vmem>>, vector<32x416xf32>
    %cst_50 = arith.constant dense<0.000000e+00> : vector<16x416xf32>
    %172 = tpu.matmul %170, %171, %cst_50 {dimension_numbers = #tpu.dot_dimension_numbers<[1], [0], [0], [1], [0, 0, 1, 1], [], []>} : vector<16x32xf32>, vector<32x416xf32>, vector<16x416xf32> -> vector<16x416xf32>
    %c0_51 = arith.constant 0 : index
    %c0_52 = arith.constant 0 : index
    %173 = vector.load %arg9[%c0_51, %c0_52] : memref<1x416xf32, #tpu.memory_space<vmem>>, vector<1x416xf32>
    %174 = vector.broadcast %173 : vector<1x416xf32> to vector<16x416xf32>
    %175 = arith.addf %172, %174 : vector<16x416xf32>
    %176 = vector.extract_strided_slice %175 {offsets = [0, 0], sizes = [16, 32], strides = [1, 1]} : vector<16x416xf32> to vector<16x32xf32>
    %177 = vector.extract_strided_slice %175 {offsets = [0, 32], sizes = [16, 32], strides = [1, 1]} : vector<16x416xf32> to vector<16x32xf32>
    %178 = vector.extract_strided_slice %175 {offsets = [0, 64], sizes = [16, 32], strides = [1, 1]} : vector<16x416xf32> to vector<16x32xf32>
    %179 = vector.extract_strided_slice %175 {offsets = [0, 96], sizes = [16, 32], strides = [1, 1]} : vector<16x416xf32> to vector<16x32xf32>
    %180 = tpu.concatenate %176, %177, %178, %179 in 0 : vector<16x32xf32>, vector<16x32xf32>, vector<16x32xf32>, vector<16x32xf32> -> vector<64x32xf32>
    %cst_53 = arith.constant 0.176776692 : f32
    %181 = vector.broadcast %cst_53 : f32 to vector<64x32xf32>
    %182 = arith.mulf %180, %181 : vector<64x32xf32>
    %183 = vector.extract_strided_slice %175 {offsets = [0, 128], sizes = [16, 32], strides = [1, 1]} : vector<16x416xf32> to vector<16x32xf32>
    %184 = vector.extract_strided_slice %175 {offsets = [0, 160], sizes = [16, 32], strides = [1, 1]} : vector<16x416xf32> to vector<16x32xf32>
    %185 = vector.extract_strided_slice %175 {offsets = [0, 192], sizes = [16, 32], strides = [1, 1]} : vector<16x416xf32> to vector<16x32xf32>
    %186 = vector.extract_strided_slice %175 {offsets = [0, 224], sizes = [16, 32], strides = [1, 1]} : vector<16x416xf32> to vector<16x32xf32>
    %187 = tpu.concatenate %183, %184, %185, %186 in 0 : vector<16x32xf32>, vector<16x32xf32>, vector<16x32xf32>, vector<16x32xf32> -> vector<64x32xf32>
    %188 = vector.extract_strided_slice %175 {offsets = [0, 256], sizes = [16, 32], strides = [1, 1]} : vector<16x416xf32> to vector<16x32xf32>
    %189 = vector.extract_strided_slice %175 {offsets = [0, 288], sizes = [16, 32], strides = [1, 1]} : vector<16x416xf32> to vector<16x32xf32>
    %190 = vector.extract_strided_slice %175 {offsets = [0, 320], sizes = [16, 32], strides = [1, 1]} : vector<16x416xf32> to vector<16x32xf32>
    %191 = vector.extract_strided_slice %175 {offsets = [0, 352], sizes = [16, 32], strides = [1, 1]} : vector<16x416xf32> to vector<16x32xf32>
    %192 = tpu.concatenate %188, %189, %190, %191 in 0 : vector<16x32xf32>, vector<16x32xf32>, vector<16x32xf32>, vector<16x32xf32> -> vector<64x32xf32>
    %193 = vector.extract_strided_slice %175 {offsets = [0, 384], sizes = [16, 32], strides = [1, 1]} : vector<16x416xf32> to vector<16x32xf32>
    %cst_54 = arith.constant dense<0.000000e+00> : vector<64x64xf32>
    %194 = tpu.matmul %182, %187, %cst_54 {dimension_numbers = #tpu.dot_dimension_numbers<[1], [1], [0], [0], [0, 0, 1, 0], [], []>} : vector<64x32xf32>, vector<64x32xf32>, vector<64x64xf32> -> vector<64x64xf32>
    %195 = arith.addf %194, %0 : vector<64x64xf32>
    %cst_55 = arith.constant dense<0xFF800000> : vector<64xf32>
    %196 = vector.multi_reduction <maximumf>, %195, %cst_55 [1] : vector<64x64xf32> to vector<64xf32>
    %197 = vector.shape_cast %196 : vector<64xf32> to vector<64x1xf32>
    %198 = vector.broadcast %197 : vector<64x1xf32> to vector<64x64xf32>
    %199 = arith.subf %195, %198 : vector<64x64xf32>
    %200 = math.exp %199 : vector<64x64xf32>
    %cst_56 = arith.constant dense<0.000000e+00> : vector<64xf32>
    %201 = vector.multi_reduction <add>, %200, %cst_56 [1] : vector<64x64xf32> to vector<64xf32>
    %202 = vector.shape_cast %201 : vector<64xf32> to vector<64x1xf32>
    %cst_57 = arith.constant -1.000000e+29 : f32
    %203 = vector.broadcast %cst_57 : f32 to vector<64x1xf32>
    %204 = arith.cmpf ogt, %197, %203 : vector<64x1xf32>
    %205 = tpu.reciprocal %202 {approx = true} : vector<64x1xf32> -> vector<64x1xf32>
    %cst_58 = arith.constant 2.500000e-01 : f32
    %206 = vector.broadcast %cst_58 : f32 to vector<64x1xf32>
    %207 = arith.mulf %205, %206 : vector<64x1xf32>
    %cst_59 = arith.constant 0.000000e+00 : f32
    %208 = vector.broadcast %cst_59 : f32 to vector<64x1xf32>
    %209 = arith.select %204, %207, %208 : vector<64x1xi1>, vector<64x1xf32>
    %210 = vector.broadcast %209 : vector<64x1xf32> to vector<64x64xf32>
    %211 = arith.mulf %200, %210 : vector<64x64xf32>
    %cst_60 = arith.constant dense<0.000000e+00> : vector<64x32xf32>
    %212 = tpu.matmul %211, %192, %cst_60 {dimension_numbers = #tpu.dot_dimension_numbers<[1], [0], [0], [1], [0, 0, 1, 1], [], []>} : vector<64x64xf32>, vector<64x32xf32>, vector<64x32xf32> -> vector<64x32xf32>
    %213 = vector.extract_strided_slice %212 {offsets = [0, 0], sizes = [16, 32], strides = [1, 1]} : vector<64x32xf32> to vector<16x32xf32>
    %214 = vector.extract_strided_slice %212 {offsets = [16, 0], sizes = [16, 32], strides = [1, 1]} : vector<64x32xf32> to vector<16x32xf32>
    %215 = arith.addf %213, %214 : vector<16x32xf32>
    %216 = vector.extract_strided_slice %212 {offsets = [32, 0], sizes = [16, 32], strides = [1, 1]} : vector<64x32xf32> to vector<16x32xf32>
    %217 = arith.addf %215, %216 : vector<16x32xf32>
    %218 = vector.extract_strided_slice %212 {offsets = [48, 0], sizes = [16, 32], strides = [1, 1]} : vector<64x32xf32> to vector<16x32xf32>
    %219 = arith.addf %217, %218 : vector<16x32xf32>
    %220 = arith.addf %219, %193 : vector<16x32xf32>
    %cst_61 = arith.constant 0.000000e+00 : f32
    %221 = vector.broadcast %cst_61 : f32 to vector<16x32xf32>
    %222 = arith.maximumf %220, %221 : vector<16x32xf32>
    %c0_62 = arith.constant 0 : index
    %c0_63 = arith.constant 0 : index
    %223 = vector.load %arg10[%c0_62, %c0_63] : memref<32x416xf32, #tpu.memory_space<vmem>>, vector<32x416xf32>
    %cst_64 = arith.constant dense<0.000000e+00> : vector<16x416xf32>
    %224 = tpu.matmul %222, %223, %cst_64 {dimension_numbers = #tpu.dot_dimension_numbers<[1], [0], [0], [1], [0, 0, 1, 1], [], []>} : vector<16x32xf32>, vector<32x416xf32>, vector<16x416xf32> -> vector<16x416xf32>
    %c0_65 = arith.constant 0 : index
    %c0_66 = arith.constant 0 : index
    %225 = vector.load %arg11[%c0_65, %c0_66] : memref<1x416xf32, #tpu.memory_space<vmem>>, vector<1x416xf32>
    %226 = vector.broadcast %225 : vector<1x416xf32> to vector<16x416xf32>
    %227 = arith.addf %224, %226 : vector<16x416xf32>
    %228 = vector.extract_strided_slice %227 {offsets = [0, 0], sizes = [16, 32], strides = [1, 1]} : vector<16x416xf32> to vector<16x32xf32>
    %229 = vector.extract_strided_slice %227 {offsets = [0, 32], sizes = [16, 32], strides = [1, 1]} : vector<16x416xf32> to vector<16x32xf32>
    %230 = vector.extract_strided_slice %227 {offsets = [0, 64], sizes = [16, 32], strides = [1, 1]} : vector<16x416xf32> to vector<16x32xf32>
    %231 = vector.extract_strided_slice %227 {offsets = [0, 96], sizes = [16, 32], strides = [1, 1]} : vector<16x416xf32> to vector<16x32xf32>
    %232 = tpu.concatenate %228, %229, %230, %231 in 0 : vector<16x32xf32>, vector<16x32xf32>, vector<16x32xf32>, vector<16x32xf32> -> vector<64x32xf32>
    %cst_67 = arith.constant 0.176776692 : f32
    %233 = vector.broadcast %cst_67 : f32 to vector<64x32xf32>
    %234 = arith.mulf %232, %233 : vector<64x32xf32>
    %235 = vector.extract_strided_slice %227 {offsets = [0, 128], sizes = [16, 32], strides = [1, 1]} : vector<16x416xf32> to vector<16x32xf32>
    %236 = vector.extract_strided_slice %227 {offsets = [0, 160], sizes = [16, 32], strides = [1, 1]} : vector<16x416xf32> to vector<16x32xf32>
    %237 = vector.extract_strided_slice %227 {offsets = [0, 192], sizes = [16, 32], strides = [1, 1]} : vector<16x416xf32> to vector<16x32xf32>
    %238 = vector.extract_strided_slice %227 {offsets = [0, 224], sizes = [16, 32], strides = [1, 1]} : vector<16x416xf32> to vector<16x32xf32>
    %239 = tpu.concatenate %235, %236, %237, %238 in 0 : vector<16x32xf32>, vector<16x32xf32>, vector<16x32xf32>, vector<16x32xf32> -> vector<64x32xf32>
    %240 = vector.extract_strided_slice %227 {offsets = [0, 256], sizes = [16, 32], strides = [1, 1]} : vector<16x416xf32> to vector<16x32xf32>
    %241 = vector.extract_strided_slice %227 {offsets = [0, 288], sizes = [16, 32], strides = [1, 1]} : vector<16x416xf32> to vector<16x32xf32>
    %242 = vector.extract_strided_slice %227 {offsets = [0, 320], sizes = [16, 32], strides = [1, 1]} : vector<16x416xf32> to vector<16x32xf32>
    %243 = vector.extract_strided_slice %227 {offsets = [0, 352], sizes = [16, 32], strides = [1, 1]} : vector<16x416xf32> to vector<16x32xf32>
    %244 = tpu.concatenate %240, %241, %242, %243 in 0 : vector<16x32xf32>, vector<16x32xf32>, vector<16x32xf32>, vector<16x32xf32> -> vector<64x32xf32>
    %245 = vector.extract_strided_slice %227 {offsets = [0, 384], sizes = [16, 32], strides = [1, 1]} : vector<16x416xf32> to vector<16x32xf32>
    %cst_68 = arith.constant dense<0.000000e+00> : vector<64x64xf32>
    %246 = tpu.matmul %234, %239, %cst_68 {dimension_numbers = #tpu.dot_dimension_numbers<[1], [1], [0], [0], [0, 0, 1, 0], [], []>} : vector<64x32xf32>, vector<64x32xf32>, vector<64x64xf32> -> vector<64x64xf32>
    %247 = arith.addf %246, %0 : vector<64x64xf32>
    %cst_69 = arith.constant dense<0xFF800000> : vector<64xf32>
    %248 = vector.multi_reduction <maximumf>, %247, %cst_69 [1] : vector<64x64xf32> to vector<64xf32>
    %249 = vector.shape_cast %248 : vector<64xf32> to vector<64x1xf32>
    %250 = vector.broadcast %249 : vector<64x1xf32> to vector<64x64xf32>
    %251 = arith.subf %247, %250 : vector<64x64xf32>
    %252 = math.exp %251 : vector<64x64xf32>
    %cst_70 = arith.constant dense<0.000000e+00> : vector<64xf32>
    %253 = vector.multi_reduction <add>, %252, %cst_70 [1] : vector<64x64xf32> to vector<64xf32>
    %254 = vector.shape_cast %253 : vector<64xf32> to vector<64x1xf32>
    %cst_71 = arith.constant -1.000000e+29 : f32
    %255 = vector.broadcast %cst_71 : f32 to vector<64x1xf32>
    %256 = arith.cmpf ogt, %249, %255 : vector<64x1xf32>
    %257 = tpu.reciprocal %254 {approx = true} : vector<64x1xf32> -> vector<64x1xf32>
    %cst_72 = arith.constant 2.500000e-01 : f32
    %258 = vector.broadcast %cst_72 : f32 to vector<64x1xf32>
    %259 = arith.mulf %257, %258 : vector<64x1xf32>
    %cst_73 = arith.constant 0.000000e+00 : f32
    %260 = vector.broadcast %cst_73 : f32 to vector<64x1xf32>
    %261 = arith.select %256, %259, %260 : vector<64x1xi1>, vector<64x1xf32>
    %262 = vector.broadcast %261 : vector<64x1xf32> to vector<64x64xf32>
    %263 = arith.mulf %252, %262 : vector<64x64xf32>
    %cst_74 = arith.constant dense<0.000000e+00> : vector<64x32xf32>
    %264 = tpu.matmul %263, %244, %cst_74 {dimension_numbers = #tpu.dot_dimension_numbers<[1], [0], [0], [1], [0, 0, 1, 1], [], []>} : vector<64x64xf32>, vector<64x32xf32>, vector<64x32xf32> -> vector<64x32xf32>
    %265 = vector.extract_strided_slice %264 {offsets = [0, 0], sizes = [16, 32], strides = [1, 1]} : vector<64x32xf32> to vector<16x32xf32>
    %266 = vector.extract_strided_slice %264 {offsets = [16, 0], sizes = [16, 32], strides = [1, 1]} : vector<64x32xf32> to vector<16x32xf32>
    %267 = arith.addf %265, %266 : vector<16x32xf32>
    %268 = vector.extract_strided_slice %264 {offsets = [32, 0], sizes = [16, 32], strides = [1, 1]} : vector<64x32xf32> to vector<16x32xf32>
    %269 = arith.addf %267, %268 : vector<16x32xf32>
    %270 = vector.extract_strided_slice %264 {offsets = [48, 0], sizes = [16, 32], strides = [1, 1]} : vector<64x32xf32> to vector<16x32xf32>
    %271 = arith.addf %269, %270 : vector<16x32xf32>
    %272 = arith.addf %271, %245 : vector<16x32xf32>
    %cst_75 = arith.constant 0.000000e+00 : f32
    %273 = vector.broadcast %cst_75 : f32 to vector<16x32xf32>
    %274 = arith.maximumf %272, %273 : vector<16x32xf32>
    %c0_76 = arith.constant 0 : index
    %c0_77 = arith.constant 0 : index
    %275 = vector.load %arg12[%c0_76, %c0_77] : memref<32x104xf32, #tpu.memory_space<vmem>>, vector<32x104xf32>
    %cst_78 = arith.constant dense<0.000000e+00> : vector<16x104xf32>
    %276 = tpu.matmul %274, %275, %cst_78 {dimension_numbers = #tpu.dot_dimension_numbers<[1], [0], [0], [1], [0, 0, 1, 1], [], []>} : vector<16x32xf32>, vector<32x104xf32>, vector<16x104xf32> -> vector<16x104xf32>
    %c0_79 = arith.constant 0 : index
    %c0_80 = arith.constant 0 : index
    %277 = vector.load %arg13[%c0_79, %c0_80] : memref<1x104xf32, #tpu.memory_space<vmem>>, vector<1x104xf32>
    %278 = vector.broadcast %277 : vector<1x104xf32> to vector<16x104xf32>
    %279 = arith.addf %276, %278 : vector<16x104xf32>
    %280 = vector.extract_strided_slice %279 {offsets = [0, 0], sizes = [16, 8], strides = [1, 1]} : vector<16x104xf32> to vector<16x8xf32>
    %281 = vector.extract_strided_slice %279 {offsets = [0, 8], sizes = [16, 8], strides = [1, 1]} : vector<16x104xf32> to vector<16x8xf32>
    %282 = vector.extract_strided_slice %279 {offsets = [0, 16], sizes = [16, 8], strides = [1, 1]} : vector<16x104xf32> to vector<16x8xf32>
    %283 = vector.extract_strided_slice %279 {offsets = [0, 24], sizes = [16, 8], strides = [1, 1]} : vector<16x104xf32> to vector<16x8xf32>
    %284 = tpu.concatenate %280, %281, %282, %283 in 0 : vector<16x8xf32>, vector<16x8xf32>, vector<16x8xf32>, vector<16x8xf32> -> vector<64x8xf32>
    %cst_81 = arith.constant 0.353553385 : f32
    %285 = vector.broadcast %cst_81 : f32 to vector<64x8xf32>
    %286 = arith.mulf %284, %285 : vector<64x8xf32>
    %287 = vector.extract_strided_slice %279 {offsets = [0, 32], sizes = [16, 8], strides = [1, 1]} : vector<16x104xf32> to vector<16x8xf32>
    %288 = vector.extract_strided_slice %279 {offsets = [0, 40], sizes = [16, 8], strides = [1, 1]} : vector<16x104xf32> to vector<16x8xf32>
    %289 = vector.extract_strided_slice %279 {offsets = [0, 48], sizes = [16, 8], strides = [1, 1]} : vector<16x104xf32> to vector<16x8xf32>
    %290 = vector.extract_strided_slice %279 {offsets = [0, 56], sizes = [16, 8], strides = [1, 1]} : vector<16x104xf32> to vector<16x8xf32>
    %291 = tpu.concatenate %287, %288, %289, %290 in 0 : vector<16x8xf32>, vector<16x8xf32>, vector<16x8xf32>, vector<16x8xf32> -> vector<64x8xf32>
    %292 = vector.extract_strided_slice %279 {offsets = [0, 64], sizes = [16, 8], strides = [1, 1]} : vector<16x104xf32> to vector<16x8xf32>
    %293 = vector.extract_strided_slice %279 {offsets = [0, 72], sizes = [16, 8], strides = [1, 1]} : vector<16x104xf32> to vector<16x8xf32>
    %294 = vector.extract_strided_slice %279 {offsets = [0, 80], sizes = [16, 8], strides = [1, 1]} : vector<16x104xf32> to vector<16x8xf32>
    %295 = vector.extract_strided_slice %279 {offsets = [0, 88], sizes = [16, 8], strides = [1, 1]} : vector<16x104xf32> to vector<16x8xf32>
    %296 = tpu.concatenate %292, %293, %294, %295 in 0 : vector<16x8xf32>, vector<16x8xf32>, vector<16x8xf32>, vector<16x8xf32> -> vector<64x8xf32>
    %297 = vector.extract_strided_slice %279 {offsets = [0, 96], sizes = [16, 8], strides = [1, 1]} : vector<16x104xf32> to vector<16x8xf32>
    %cst_82 = arith.constant dense<0.000000e+00> : vector<64x64xf32>
    %298 = tpu.matmul %286, %291, %cst_82 {dimension_numbers = #tpu.dot_dimension_numbers<[1], [1], [0], [0], [0, 0, 1, 0], [], []>} : vector<64x8xf32>, vector<64x8xf32>, vector<64x64xf32> -> vector<64x64xf32>
    %299 = arith.addf %298, %0 : vector<64x64xf32>
    %cst_83 = arith.constant dense<0xFF800000> : vector<64xf32>
    %300 = vector.multi_reduction <maximumf>, %299, %cst_83 [1] : vector<64x64xf32> to vector<64xf32>
    %301 = vector.shape_cast %300 : vector<64xf32> to vector<64x1xf32>
    %302 = vector.broadcast %301 : vector<64x1xf32> to vector<64x64xf32>
    %303 = arith.subf %299, %302 : vector<64x64xf32>
    %304 = math.exp %303 : vector<64x64xf32>
    %cst_84 = arith.constant dense<0.000000e+00> : vector<64xf32>
    %305 = vector.multi_reduction <add>, %304, %cst_84 [1] : vector<64x64xf32> to vector<64xf32>
    %306 = vector.shape_cast %305 : vector<64xf32> to vector<64x1xf32>
    %cst_85 = arith.constant -1.000000e+29 : f32
    %307 = vector.broadcast %cst_85 : f32 to vector<64x1xf32>
    %308 = arith.cmpf ogt, %301, %307 : vector<64x1xf32>
    %309 = tpu.reciprocal %306 {approx = true} : vector<64x1xf32> -> vector<64x1xf32>
    %cst_86 = arith.constant 2.500000e-01 : f32
    %310 = vector.broadcast %cst_86 : f32 to vector<64x1xf32>
    %311 = arith.mulf %309, %310 : vector<64x1xf32>
    %cst_87 = arith.constant 0.000000e+00 : f32
    %312 = vector.broadcast %cst_87 : f32 to vector<64x1xf32>
    %313 = arith.select %308, %311, %312 : vector<64x1xi1>, vector<64x1xf32>
    %314 = vector.broadcast %313 : vector<64x1xf32> to vector<64x64xf32>
    %315 = arith.mulf %304, %314 : vector<64x64xf32>
    %cst_88 = arith.constant dense<0.000000e+00> : vector<64x8xf32>
    %316 = tpu.matmul %315, %296, %cst_88 {dimension_numbers = #tpu.dot_dimension_numbers<[1], [0], [0], [1], [0, 0, 1, 1], [], []>} : vector<64x64xf32>, vector<64x8xf32>, vector<64x8xf32> -> vector<64x8xf32>
    %317 = vector.extract_strided_slice %316 {offsets = [0, 0], sizes = [16, 8], strides = [1, 1]} : vector<64x8xf32> to vector<16x8xf32>
    %318 = vector.extract_strided_slice %316 {offsets = [16, 0], sizes = [16, 8], strides = [1, 1]} : vector<64x8xf32> to vector<16x8xf32>
    %319 = arith.addf %317, %318 : vector<16x8xf32>
    %320 = vector.extract_strided_slice %316 {offsets = [32, 0], sizes = [16, 8], strides = [1, 1]} : vector<64x8xf32> to vector<16x8xf32>
    %321 = arith.addf %319, %320 : vector<16x8xf32>
    %322 = vector.extract_strided_slice %316 {offsets = [48, 0], sizes = [16, 8], strides = [1, 1]} : vector<64x8xf32> to vector<16x8xf32>
    %323 = arith.addf %321, %322 : vector<16x8xf32>
    %324 = arith.addf %323, %297 : vector<16x8xf32>
    %cst_89 = arith.constant 0.000000e+00 : f32
    %325 = vector.broadcast %cst_89 : f32 to vector<16x8xf32>
    %326 = arith.maximumf %324, %325 : vector<16x8xf32>
    %cst_90 = arith.constant dense<0xFF800000> : vector<16xf32>
    %327 = vector.multi_reduction <maximumf>, %326, %cst_90 [1] : vector<16x8xf32> to vector<16xf32>
    %328 = vector.shape_cast %327 : vector<16xf32> to vector<16x1xf32>
    %329 = vector.broadcast %328 : vector<16x1xf32> to vector<16x8xf32>
    %330 = arith.subf %326, %329 : vector<16x8xf32>
    %331 = math.exp %330 : vector<16x8xf32>
    %cst_91 = arith.constant dense<0.000000e+00> : vector<16xf32>
    %332 = vector.multi_reduction <add>, %331, %cst_91 [1] : vector<16x8xf32> to vector<16xf32>
    %333 = vector.shape_cast %332 : vector<16xf32> to vector<16x1xf32>
    %334 = vector.broadcast %333 : vector<16x1xf32> to vector<16x8xf32>
    %335 = arith.divf %331, %334 : vector<16x8xf32>
    %c0_92 = arith.constant 0 : index
    %c0_93 = arith.constant 0 : index
    %336 = vector.load %arg15[%c0_92, %c0_93] : memref<16x8xf32, #tpu.memory_space<vmem>>, vector<16x8xf32>
    tpu.vector_store %arg15[%c0_92, %c0_93], %335 {strides = array<i32>} : memref<16x8xf32, #tpu.memory_space<vmem>>, vector<16x8xf32>,
    return
  }
}

</mosaic_0001>

<llo_original>
// kernel: coloring_transformer_forward.1
$region0: #{coloring_transformer_forward.1}
  #allocation0 [shape = 'u32[]', space=smem, size = 0x4, offset = 0x4, fixed_abs, tag = 'smem constant byte address 0x4 - core index']
  #allocation1 [shape = 'u32[144,128]{1,0:T(1,128)}', space=vmem, size = 0x12000, scoped, tag = 'internal scratch']
  %s0 = inlined_call_operand.vmem [shape: f32[16,8], index: 0, kind: input, shape index: {}]
  %s1 = inlined_call_operand.vmem [shape: f32[64,64], index: 1, kind: input, shape index: {}]
  %s2 = inlined_call_operand.vmem [shape: f32[8,416], index: 2, kind: input, shape index: {}]
  %s3 = inlined_call_operand.vmem [shape: f32[1,416], index: 3, kind: input, shape index: {}]
  %s4 = inlined_call_operand.vmem [shape: f32[32,416], index: 4, kind: input, shape index: {}]
  %s5 = inlined_call_operand.vmem [shape: f32[1,416], index: 5, kind: input, shape index: {}]
  %s6 = inlined_call_operand.vmem [shape: f32[32,416], index: 6, kind: input, shape index: {}]
  %s7 = inlined_call_operand.vmem [shape: f32[1,416], index: 7, kind: input, shape index: {}]
  %s8 = inlined_call_operand.vmem [shape: f32[32,416], index: 8, kind: input, shape index: {}]
  %s9 = inlined_call_operand.vmem [shape: f32[1,416], index: 9, kind: input, shape index: {}]
  %s10 = inlined_call_operand.vmem [shape: f32[32,416], index: 10, kind: input, shape index: {}]
  %s11 = inlined_call_operand.vmem [shape: f32[1,416], index: 11, kind: input, shape index: {}]
  %s12 = inlined_call_operand.vmem [shape: f32[32,104], index: 12, kind: input, shape index: {}]
  %s13 = inlined_call_operand.vmem [shape: f32[1,104], index: 13, kind: input, shape index: {}]
  %s14 = inlined_call_operand.vmem [shape: f32[16,5], index: 14, kind: output, shape index: {0}]
  %s15 = inlined_call_operand.vmem [shape: f32[16,8], index: 15, kind: output, shape index: {1}]
  %16 = xla_tuple %s14, %s15
  %s17 = sld [smem:[#allocation0]]
  $region74: #{coloring_transformer_forward.1} parent=0
    _
  %s19 = ssub.s32 1, %s17
  %s20 = scalar_select 0, %s19, %s17
  // Predicated region
  $region2: #{coloring_transformer_forward.1} parent=0 // pred_check
    _
  $region3: #{coloring_transformer_forward.1} parent=0 // pred_check_branch
    %22 = sbr.rel (0) target = $region5
  $region4: #{coloring_transformer_forward.1} parent=0 // pred_region
    _
  $region5: #{coloring_transformer_forward.1} parent=0 // pred_fallthru
    _
  // Predicated region
  $region6: #{coloring_transformer_forward.1} parent=0 // pred_check
    _
  $region7: #{coloring_transformer_forward.1} parent=0 // pred_check_branch
    %24 = sbr.rel (0) target = $region9
  $region8: #{coloring_transformer_forward.1} parent=0 // pred_region
    _
  $region9: #{coloring_transformer_forward.1} parent=0 // pred_fallthru
    _
  // Predicated region
  $region10: #{coloring_transformer_forward.1} parent=0 // pred_check
    _
  $region11: #{coloring_transformer_forward.1} parent=0 // pred_check_branch
    %26 = sbr.rel (0) target = $region13
  $region12: #{coloring_transformer_forward.1} parent=0 // pred_region
    _
  $region13: #{coloring_transformer_forward.1} parent=0 // pred_fallthru
    _
  // Predicated region
  $region14: #{coloring_transformer_forward.1} parent=0 // pred_check
    _
  $region15: #{coloring_transformer_forward.1} parent=0 // pred_check_branch
    %28 = sbr.rel (0) target = $region17
  $region16: #{coloring_transformer_forward.1} parent=0 // pred_region
    _
  $region17: #{coloring_transformer_forward.1} parent=0 // pred_fallthru
    _
  // Predicated region
  $region18: #{coloring_transformer_forward.1} parent=0 // pred_check
    _
  $region19: #{coloring_transformer_forward.1} parent=0 // pred_check_branch
    %30 = sbr.rel (0) target = $region21
  $region20: #{coloring_transformer_forward.1} parent=0 // pred_region
    _
  $region21: #{coloring_transformer_forward.1} parent=0 // pred_fallthru
    _
  // Predicated region
  $region22: #{coloring_transformer_forward.1} parent=0 // pred_check
    _
  $region23: #{coloring_transformer_forward.1} parent=0 // pred_check_branch
    %32 = sbr.rel (0) target = $region25
  $region24: #{coloring_transformer_forward.1} parent=0 // pred_region
    _
  $region25: #{coloring_transformer_forward.1} parent=0 // pred_fallthru
    _
  // Predicated region
  $region26: #{coloring_transformer_forward.1} parent=0 // pred_check
    _
  $region27: #{coloring_transformer_forward.1} parent=0 // pred_check_branch
    %34 = sbr.rel (0) target = $region29
  $region28: #{coloring_transformer_forward.1} parent=0 // pred_region
    _
  $region29: #{coloring_transformer_forward.1} parent=0 // pred_fallthru
    _
  // Predicated region
  $region30: #{coloring_transformer_forward.1} parent=0 // pred_check
    _
  $region31: #{coloring_transformer_forward.1} parent=0 // pred_check_branch
    %36 = sbr.rel (0) target = $region33
  $region32: #{coloring_transformer_forward.1} parent=0 // pred_region
    _
  $region33: #{coloring_transformer_forward.1} parent=0 // pred_fallthru
    _
  // Predicated region
  $region34: #{coloring_transformer_forward.1} parent=0 // pred_check
    _
  $region35: #{coloring_transformer_forward.1} parent=0 // pred_check_branch
    %38 = sbr.rel (0) target = $region37
  $region36: #{coloring_transformer_forward.1} parent=0 // pred_region
    _
  $region37: #{coloring_transformer_forward.1} parent=0 // pred_fallthru
    _
  // Predicated region
  $region38: #{coloring_transformer_forward.1} parent=0 // pred_check
    _
  $region39: #{coloring_transformer_forward.1} parent=0 // pred_check_branch
    %40 = sbr.rel (0) target = $region41
  $region40: #{coloring_transformer_forward.1} parent=0 // pred_region
    _
  $region41: #{coloring_transformer_forward.1} parent=0 // pred_fallthru
    _
  // Predicated region
  $region42: #{coloring_transformer_forward.1} parent=0 // pred_check
    _
  $region43: #{coloring_transformer_forward.1} parent=0 // pred_check_branch
    %42 = sbr.rel (0) target = $region45
  $region44: #{coloring_transformer_forward.1} parent=0 // pred_region
    _
  $region45: #{coloring_transformer_forward.1} parent=0 // pred_fallthru
    _
  // Predicated region
  $region46: #{coloring_transformer_forward.1} parent=0 // pred_check
    _
  $region47: #{coloring_transformer_forward.1} parent=0 // pred_check_branch
    %44 = sbr.rel (0) target = $region49
  $region48: #{coloring_transformer_forward.1} parent=0 // pred_region
    _
  $region49: #{coloring_transformer_forward.1} parent=0 // pred_fallthru
    _
  // Predicated region
  $region50: #{coloring_transformer_forward.1} parent=0 // pred_check
    _
  $region51: #{coloring_transformer_forward.1} parent=0 // pred_check_branch
    %46 = sbr.rel (0) target = $region53
  $region52: #{coloring_transformer_forward.1} parent=0 // pred_region
    _
  $region53: #{coloring_transformer_forward.1} parent=0 // pred_fallthru
    _
  // Predicated region
  $region54: #{coloring_transformer_forward.1} parent=0 // pred_check
    _
  $region55: #{coloring_transformer_forward.1} parent=0 // pred_check_branch
    %48 = sbr.rel (0) target = $region57
  $region56: #{coloring_transformer_forward.1} parent=0 // pred_region
    _
  $region57: #{coloring_transformer_forward.1} parent=0 // pred_fallthru
    _
  %v49 = vld [vmem:[%s1] sm:$0xff]
  %v50 = vld [vmem:[%s1 + $0x8] sm:$0xff]
  %v51 = vld [vmem:[%s1 + $0x10] sm:$0xff]
  %v52 = vld [vmem:[%s1 + $0x18] sm:$0xff]
  %v53 = vld [vmem:[%s1 + $0x20] sm:$0xff]
  %v54 = vld [vmem:[%s1 + $0x28] sm:$0xff]
  %v55 = vld [vmem:[%s1 + $0x30] sm:$0xff]
  %v56 = vld [vmem:[%s1 + $0x38] sm:$0xff]
  %v57 = vld [vmem:[%s0] sm:$0xff]
  %v58 = vld [vmem:[%s0 + $0x8] sm:$0xff]
  %v59 = vld [vmem:[%s2] sm:$0xff]
  %v60 = vld [vmem:[%s2 + $0x8] sm:$0xff]
  %v61 = vld [vmem:[%s2 + $0x10] sm:$0xff]
  %v62 = vld [vmem:[%s2 + $0x18] sm:$0xff]
  %v63 = vld [vmem:[%s3] sm:$0xf]
  %v65 = vlaneseq
  %v66 = vshrl.u32 %v65, 7
  %v67 = vsub.s32 0, %v66
  %v68 = vrot.slane %v63, %v67
  %v69 = vlaneseq
  %v70 = vshrl.u32 %v69, 7
  %v71 = vsub.s32 1, %v70
  %v72 = vrot.slane %v63, %v71
  %v73 = vlaneseq
  %v74 = vshrl.u32 %v73, 7
  %v75 = vsub.s32 2, %v74
  %v76 = vrot.slane %v63, %v75
  %v77 = vlaneseq
  %v78 = vshrl.u32 %v77, 7
  %v79 = vsub.s32 3, %v78
  %v80 = vrot.slane %v63, %v79
  %vm85 = vcmask 64512
  %v87 = vsel %vm85, %v57, 0
  %v90 = vsel %vm85, %v58, 0
  %92 = vmatprep.subr.mxu0 0.0
  %93 = vmatpush1.msra.mxu0 0.0
  %94 = vmatprep.subr.mxu0 0.0
  %95 = vmatpush1.msra.mxu0 0.0
  %96 = vmatprep.subr.mxu0 0.0
  %97 = vmatpush1.msra.mxu0 0.0
  %98 = vmatprep.subr.mxu0 0.0
  %99 = vmatpush1.msra.mxu0 0.0
  %100 = vmatprep.subr.mxu0 0.0
  %101 = vmatpush1.msra.mxu0 0.0
  %102 = vmatprep.subr.mxu0 0.0
  %103 = vmatpush1.msra.mxu0 0.0
  %104 = vmatprep.subr.mxu0 0.0
  %105 = vmatpush1.msra.mxu0 0.0
  %106 = vmatprep.subr.mxu0 0.0
  %107 = vmatpush1.msra.mxu0 0.0
  %108 = vmatprep.subr.mxu0 0.0
  %109 = vmatpush1.msra.mxu0 0.0
  %110 = vmatprep.subr.mxu0 0.0
  %111 = vmatpush1.msra.mxu0 0.0
  %112 = vmatprep.subr.mxu0 0.0
  %113 = vmatpush1.msra.mxu0 0.0
  %114 = vmatprep.subr.mxu0 0.0
  %115 = vmatpush1.msra.mxu0 0.0
  %116 = vmatprep.subr.mxu0 0.0
  %117 = vmatpush1.msra.mxu0 0.0
  %118 = vmatprep.subr.mxu0 0.0
  %119 = vmatpush1.msra.mxu0 0.0
  %120 = vmatprep.subr.mxu0 0.0
  %121 = vmatpush1.msra.mxu0 0.0
  %122 = vmatprep.subr.mxu0 %v60
  %123 = vmatpush1.msra.mxu0 %v59
  %124 = vmatprep.subr.mxu0 0.0
  %125 = vmatpush2.msra.mxu0 0.0
  %126 = vmatprep.subr.mxu0 0.0
  %127 = vmatpush2.msra.mxu0 0.0
  %128 = vmatprep.subr.mxu0 0.0
  %129 = vmatpush2.msra.mxu0 0.0
  %130 = vmatprep.subr.mxu0 0.0
  %131 = vmatpush2.msra.mxu0 0.0
  %132 = vmatprep.subr.mxu0 0.0
  %133 = vmatpush2.msra.mxu0 0.0
  %134 = vmatprep.subr.mxu0 0.0
  %135 = vmatpush2.msra.mxu0 0.0
  %136 = vmatprep.subr.mxu0 0.0
  %137 = vmatpush2.msra.mxu0 0.0
  %138 = vmatprep.subr.mxu0 0.0
  %139 = vmatpush2.msra.mxu0 0.0
  %140 = vmatprep.subr.mxu0 0.0
  %141 = vmatpush2.msra.mxu0 0.0
  %142 = vmatprep.subr.mxu0 0.0
  %143 = vmatpush2.msra.mxu0 0.0
  %144 = vmatprep.subr.mxu0 0.0
  %145 = vmatpush2.msra.mxu0 0.0
  %146 = vmatprep.subr.mxu0 0.0
  %147 = vmatpush2.msra.mxu0 0.0
  %148 = vmatprep.subr.mxu0 0.0
  %149 = vmatpush2.msra.mxu0 0.0
  %150 = vmatprep.subr.mxu0 0.0
  %151 = vmatpush2.msra.mxu0 0.0
  %152 = vmatprep.subr.mxu0 0.0
  %153 = vmatpush2.msra.mxu0 0.0
  %154 = vmatprep.subr.mxu0 0.0
  %155 = vmatpush2.msra.mxu0 0.0
  %156 = vmatprep.mubr.f32.mxu0 0.0
  %157 = vmatmul.mubr.f32.gmra.mxu0 %v87
  %v158 = vpop.f32.mrf.mxu0
  %v159 = vadd.f32 %v68, %v158
  %v160 = vpop.f32.mrf.mxu0
  %v161 = vadd.f32 %v72, %v160
  %162 = vmatprep.mubr.f32.mxu0 0.0
  %163 = vmatmul.mubr.f32.gmra.mxu0 %v90
  %v164 = vpop.f32.mrf.mxu0
  %v165 = vadd.f32 %v68, %v164
  %v166 = vpop.f32.mrf.mxu0
  %v167 = vadd.f32 %v72, %v166
  %168 = vdwg.mxu0
  %169 = vmatprep.subr.mxu0 0.0
  %170 = vmatpush1.msra.mxu0 0.0
  %171 = vmatprep.subr.mxu0 0.0
  %172 = vmatpush1.msra.mxu0 0.0
  %173 = vmatprep.subr.mxu0 0.0
  %174 = vmatpush1.msra.mxu0 0.0
  %175 = vmatprep.subr.mxu0 0.0
  %176 = vmatpush1.msra.mxu0 0.0
  %177 = vmatprep.subr.mxu0 0.0
  %178 = vmatpush1.msra.mxu0 0.0
  %179 = vmatprep.subr.mxu0 0.0
  %180 = vmatpush1.msra.mxu0 0.0
  %181 = vmatprep.subr.mxu0 0.0
  %182 = vmatpush1.msra.mxu0 0.0
  %183 = vmatprep.subr.mxu0 0.0
  %184 = vmatpush1.msra.mxu0 0.0
  %185 = vmatprep.subr.mxu0 0.0
  %186 = vmatpush1.msra.mxu0 0.0
  %187 = vmatprep.subr.mxu0 0.0
  %188 = vmatpush1.msra.mxu0 0.0
  %189 = vmatprep.subr.mxu0 0.0
  %190 = vmatpush1.msra.mxu0 0.0
  %191 = vmatprep.subr.mxu0 0.0
  %192 = vmatpush1.msra.mxu0 0.0
  %193 = vmatprep.subr.mxu0 0.0
  %194 = vmatpush1.msra.mxu0 0.0
  %195 = vmatprep.subr.mxu0 0.0
  %196 = vmatpush1.msra.mxu0 0.0
  %197 = vmatprep.subr.mxu0 0.0
  %198 = vmatpush1.msra.mxu0 0.0
  %199 = vmatprep.subr.mxu0 %v62
  %200 = vmatpush1.msra.mxu0 %v61
  %201 = vmatprep.subr.mxu0 0.0
  %202 = vmatpush2.msra.mxu0 0.0
  %203 = vmatprep.subr.mxu0 0.0
  %204 = vmatpush2.msra.mxu0 0.0
  %205 = vmatprep.subr.mxu0 0.0
  %206 = vmatpush2.msra.mxu0 0.0
  %207 = vmatprep.subr.mxu0 0.0
  %208 = vmatpush2.msra.mxu0 0.0
  %209 = vmatprep.subr.mxu0 0.0
  %210 = vmatpush2.msra.mxu0 0.0
  %211 = vmatprep.subr.mxu0 0.0
  %212 = vmatpush2.msra.mxu0 0.0
  %213 = vmatprep.subr.mxu0 0.0
  %214 = vmatpush2.msra.mxu0 0.0
  %215 = vmatprep.subr.mxu0 0.0
  %216 = vmatpush2.msra.mxu0 0.0
  %217 = vmatprep.subr.mxu0 0.0
  %218 = vmatpush2.msra.mxu0 0.0
  %219 = vmatprep.subr.mxu0 0.0
  %220 = vmatpush2.msra.mxu0 0.0
  %221 = vmatprep.subr.mxu0 0.0
  %222 = vmatpush2.msra.mxu0 0.0
  %223 = vmatprep.subr.mxu0 0.0
  %224 = vmatpush2.msra.mxu0 0.0
  %225 = vmatprep.subr.mxu0 0.0
  %226 = vmatpush2.msra.mxu0 0.0
  %227 = vmatprep.subr.mxu0 0.0
  %228 = vmatpush2.msra.mxu0 0.0
  %229 = vmatprep.subr.mxu0 0.0
  %230 = vmatpush2.msra.mxu0 0.0
  %231 = vmatprep.subr.mxu0 0.0
  %232 = vmatpush2.msra.mxu0 0.0
  %233 = vmatprep.mubr.f32.mxu0 0.0
  %234 = vmatmul.mubr.f32.gmra.mxu0 %v87
  %v235 = vpop.f32.mrf.mxu0
  %v236 = vadd.f32 %v76, %v235
  %v237 = vpop.f32.mrf.mxu0
  %v238 = vadd.f32 %v80, %v237
  %239 = vmatprep.mubr.f32.mxu0 0.0
  %240 = vmatmul.mubr.f32.gmra.mxu0 %v90
  %v241 = vpop.f32.mrf.mxu0
  %v242 = vadd.f32 %v76, %v241
  %v243 = vpop.f32.mrf.mxu0
  %v244 = vadd.f32 %v80, %v243
  %245 = vdwg.mxu0
  %248 = vrot.lane.b32.xlu0 %v159, 96
  %v249 = vpop.permute.xlu0 %248
  %250 = vrot.lane.b32.xlu0 %v165, 96
  %v251 = vpop.permute.xlu0 %250
  %254 = vrot.lane.b32.xlu0 %v159, 64
  %v255 = vpop.permute.xlu0 %254
  %256 = vrot.lane.b32.xlu0 %v165, 64
  %v257 = vpop.permute.xlu0 %256
  %260 = vrot.lane.b32.xlu0 %v159, 32
  %v261 = vpop.permute.xlu0 %260
  %262 = vrot.lane.b32.xlu0 %v165, 32
  %v263 = vpop.permute.xlu0 %262
  %v266 = vmul.f32 %v159, 0.17677669
  %v267 = vmul.f32 %v165, 0.17677669
  %v268 = vmul.f32 %v249, 0.17677669
  %v269 = vmul.f32 %v251, 0.17677669
  %v270 = vmul.f32 %v255, 0.17677669
  %v271 = vmul.f32 %v257, 0.17677669
  %v272 = vmul.f32 %v261, 0.17677669
  %v273 = vmul.f32 %v263, 0.17677669
  %276 = vrot.lane.b32.xlu0 %v161, 96
  %v277 = vpop.permute.xlu0 %276
  %278 = vrot.lane.b32.xlu0 %v167, 96
  %v279 = vpop.permute.xlu0 %278
  %280 = vrot.lane.b32.xlu0 %v161, 64
  %v281 = vpop.permute.xlu0 %280
  %282 = vrot.lane.b32.xlu0 %v167, 64
  %v283 = vpop.permute.xlu0 %282
  %284 = vrot.lane.b32.xlu0 %v161, 32
  %v285 = vpop.permute.xlu0 %284
  %286 = vrot.lane.b32.xlu0 %v167, 32
  %v287 = vpop.permute.xlu0 %286
  %290 = vrot.lane.b32.xlu0 %v236, 96
  %v291 = vpop.permute.xlu0 %290
  %292 = vrot.lane.b32.xlu0 %v242, 96
  %v293 = vpop.permute.xlu0 %292
  %296 = vrot.lane.b32.xlu0 %v236, 64
  %v297 = vpop.permute.xlu0 %296
  %298 = vrot.lane.b32.xlu0 %v242, 64
  %v299 = vpop.permute.xlu0 %298
  %302 = vrot.lane.b32.xlu0 %v236, 32
  %v303 = vpop.permute.xlu0 %302
  %304 = vrot.lane.b32.xlu0 %v242, 32
  %v305 = vpop.permute.xlu0 %304
  %vm308 = vcmask 261120
  %v310 = vsel %vm308, %v266, 0
  %v313 = vsel %vm308, %v267, 0
  %v316 = vsel %vm308, %v268, 0
  %v319 = vsel %vm308, %v269, 0
  %v322 = vsel %vm308, %v270, 0
  %v325 = vsel %vm308, %v271, 0
  %v328 = vsel %vm308, %v272, 0
  %v331 = vsel %vm308, %v273, 0
  %v333 = vsel %vm308, %v161, 0
  %v335 = vsel %vm308, %v167, 0
  %v337 = vsel %vm308, %v277, 0
  %v339 = vsel %vm308, %v279, 0
  %v341 = vsel %vm308, %v281, 0
  %v343 = vsel %vm308, %v283, 0
  %v345 = vsel %vm308, %v285, 0
  %v347 = vsel %vm308, %v287, 0
  %349 = vmatprep.subr.mxu0 0.0
  %350 = vmatpush1.xpose.msra.mxu0 0.0
  %351 = vmatprep.subr.mxu0 0.0
  %352 = vmatpush1.xpose.msra.mxu0 0.0
  %353 = vmatprep.subr.mxu0 0.0
  %354 = vmatpush1.xpose.msra.mxu0 0.0
  %355 = vmatprep.subr.mxu0 0.0
  %356 = vmatpush1.xpose.msra.mxu0 0.0
  %357 = vmatprep.subr.mxu0 0.0
  %358 = vmatpush1.xpose.msra.mxu0 0.0
  %359 = vmatprep.subr.mxu0 0.0
  %360 = vmatpush1.xpose.msra.mxu0 0.0
  %361 = vmatprep.subr.mxu0 0.0
  %362 = vmatpush1.xpose.msra.mxu0 0.0
  %363 = vmatprep.subr.mxu0 0.0
  %364 = vmatpush1.xpose.msra.mxu0 0.0
  %365 = vmatprep.subr.mxu0 0.0
  %366 = vmatpush1.xpose.msra.mxu0 %v347
  %367 = vmatprep.subr.mxu0 0.0
  %368 = vmatpush1.xpose.msra.mxu0 %v345
  %369 = vmatprep.subr.mxu0 0.0
  %370 = vmatpush1.xpose.msra.mxu0 %v343
  %371 = vmatprep.subr.mxu0 0.0
  %372 = vmatpush1.xpose.msra.mxu0 %v341
  %373 = vmatprep.subr.mxu0 0.0
  %374 = vmatpush1.xpose.msra.mxu0 %v339
  %375 = vmatprep.subr.mxu0 0.0
  %376 = vmatpush1.xpose.msra.mxu0 %v337
  %377 = vmatprep.subr.mxu0 0.0
  %378 = vmatpush1.xpose.msra.mxu0 %v335
  %379 = vmatprep.subr.mxu0 0.0
  %380 = vmatpush1.xpose.msra.mxu0 %v333
  %381 = vmatprep.subr.mxu0 0.0
  %382 = vmatpush2.xpose.msra.mxu0 0.0
  %383 = vmatprep.subr.mxu0 0.0
  %384 = vmatpush2.xpose.msra.mxu0 0.0
  %385 = vmatprep.subr.mxu0 0.0
  %386 = vmatpush2.xpose.msra.mxu0 0.0
  %387 = vmatprep.subr.mxu0 0.0
  %388 = vmatpush2.xpose.msra.mxu0 0.0
  %389 = vmatprep.subr.mxu0 0.0
  %390 = vmatpush2.xpose.msra.mxu0 0.0
  %391 = vmatprep.subr.mxu0 0.0
  %392 = vmatpush2.xpose.msra.mxu0 0.0
  %393 = vmatprep.subr.mxu0 0.0
  %394 = vmatpush2.xpose.msra.mxu0 0.0
  %395 = vmatprep.subr.mxu0 0.0
  %396 = vmatpush2.xpose.msra.mxu0 0.0
  %397 = vmatprep.subr.mxu0 0.0
  %398 = vmatpush2.xpose.msra.mxu0 0.0
  %399 = vmatprep.subr.mxu0 0.0
  %400 = vmatpush2.xpose.msra.mxu0 0.0
  %401 = vmatprep.subr.mxu0 0.0
  %402 = vmatpush2.xpose.msra.mxu0 0.0
  %403 = vmatprep.subr.mxu0 0.0
  %404 = vmatpush2.xpose.msra.mxu0 0.0
  %405 = vmatprep.subr.mxu0 0.0
  %406 = vmatpush2.xpose.msra.mxu0 0.0
  %407 = vmatprep.subr.mxu0 0.0
  %408 = vmatpush2.xpose.msra.mxu0 0.0
  %409 = vmatprep.subr.mxu0 0.0
  %410 = vmatpush2.xpose.msra.mxu0 0.0
  %411 = vmatprep.subr.mxu0 0.0
  %412 = vmatpush2.xpose.msra.mxu0 0.0
  %413 = vmatprep.mubr.f32.mxu0 0.0
  %414 = vmatmul.mubr.f32.gmra.mxu0 %v310
  %v415 = vpop.f32.mrf.mxu0
  %v416 = vadd.f32 %v49, %v415
  %v417 = vpop.f32.mrf.mxu0
  %418 = vmatprep.mubr.f32.mxu0 0.0
  %419 = vmatmul.mubr.f32.gmra.mxu0 %v313
  %v420 = vpop.f32.mrf.mxu0
  %v421 = vadd.f32 %v50, %v420
  %v422 = vpop.f32.mrf.mxu0
  %423 = vmatprep.mubr.f32.mxu0 0.0
  %424 = vmatmul.mubr.f32.gmra.mxu0 %v316
  %v425 = vpop.f32.mrf.mxu0
  %v426 = vadd.f32 %v51, %v425
  %v427 = vpop.f32.mrf.mxu0
  %428 = vmatprep.mubr.f32.mxu0 0.0
  %429 = vmatmul.mubr.f32.gmra.mxu0 %v319
  %v430 = vpop.f32.mrf.mxu0
  %v431 = vadd.f32 %v52, %v430
  %v432 = vpop.f32.mrf.mxu0
  %433 = vmatprep.mubr.f32.mxu0 0.0
  %434 = vmatmul.mubr.f32.gmra.mxu0 %v322
  %v435 = vpop.f32.mrf.mxu0
  %v436 = vadd.f32 %v53, %v435
  %v437 = vpop.f32.mrf.mxu0
  %438 = vmatprep.mubr.f32.mxu0 0.0
  %439 = vmatmul.mubr.f32.gmra.mxu0 %v325
  %v440 = vpop.f32.mrf.mxu0
  %v441 = vadd.f32 %v54, %v440
  %v442 = vpop.f32.mrf.mxu0
  %443 = vmatprep.mubr.f32.mxu0 0.0
  %444 = vmatmul.mubr.f32.gmra.mxu0 %v328
  %v445 = vpop.f32.mrf.mxu0
  %v446 = vadd.f32 %v55, %v445
  %v447 = vpop.f32.mrf.mxu0
  %448 = vmatprep.mubr.f32.mxu0 0.0
  %449 = vmatmul.mubr.f32.gmra.mxu0 %v331
  %v450 = vpop.f32.mrf.mxu0
  %v451 = vadd.f32 %v56, %v450
  %v452 = vpop.f32.mrf.mxu0
  %453 = vdwg.mxu0
  %vm454 = vcmask 523264
  %v455 = vsel %vm454, %v416, -inf
  %456 = vmax.xlane.f32.xlu0 %v455
  %v457 = vpop.xlane.xlu0 %456
  %v458 = vsel %vm454, %v421, -inf
  %459 = vmax.xlane.f32.xlu0 %v458
  %v460 = vpop.xlane.xlu0 %459
  %v461 = vsel %vm454, %v426, -inf
  %462 = vmax.xlane.f32.xlu0 %v461
  %v463 = vpop.xlane.xlu0 %462
  %v464 = vsel %vm454, %v431, -inf
  %465 = vmax.xlane.f32.xlu0 %v464
  %v466 = vpop.xlane.xlu0 %465
  %v467 = vsel %vm454, %v436, -inf
  %468 = vmax.xlane.f32.xlu0 %v467
  %v469 = vpop.xlane.xlu0 %468
  %v470 = vsel %vm454, %v441, -inf
  %471 = vmax.xlane.f32.xlu0 %v470
  %v472 = vpop.xlane.xlu0 %471
  %v473 = vsel %vm454, %v446, -inf
  %474 = vmax.xlane.f32.xlu0 %v473
  %v475 = vpop.xlane.xlu0 %474
  %v476 = vsel %vm454, %v451, -inf
  %477 = vmax.xlane.f32.xlu0 %v476
  %v478 = vpop.xlane.xlu0 %477
  %v479 = vsub.f32 %v416, %v457
  %v480 = vsub.f32 %v421, %v460
  %v481 = vsub.f32 %v426, %v463
  %v482 = vsub.f32 %v431, %v466
  %v483 = vsub.f32 %v436, %v469
  %v484 = vsub.f32 %v441, %v472
  %v485 = vsub.f32 %v446, %v475
  %v486 = vsub.f32 %v451, %v478
  %v487 = vmul.f32 %v479, 1.442695
  %v488 = vpow.pop %v487
  %v489 = vmul.f32 %v480, 1.442695
  %v490 = vpow.pop %v489
  %v491 = vmul.f32 %v481, 1.442695
  %v492 = vpow.pop %v491
  %v493 = vmul.f32 %v482, 1.442695
  %v494 = vpow.pop %v493
  %v495 = vmul.f32 %v483, 1.442695
  %v496 = vpow.pop %v495
  %v497 = vmul.f32 %v484, 1.442695
  %v498 = vpow.pop %v497
  %v499 = vmul.f32 %v485, 1.442695
  %v500 = vpow.pop %v499
  %v501 = vmul.f32 %v486, 1.442695
  %v502 = vpow.pop %v501
  %v503 = vsel %vm454, %v488, 0.0
  %504 = vadd.xlane.f32.xlu0 %v503
  %v505 = vpop.xlane.xlu0 %504
  %v506 = vsel %vm454, %v490, 0.0
  %507 = vadd.xlane.f32.xlu0 %v506
  %v508 = vpop.xlane.xlu0 %507
  %v509 = vsel %vm454, %v492, 0.0
  %510 = vadd.xlane.f32.xlu0 %v509
  %v511 = vpop.xlane.xlu0 %510
  %v512 = vsel %vm454, %v494, 0.0
  %513 = vadd.xlane.f32.xlu0 %v512
  %v514 = vpop.xlane.xlu0 %513
  %v515 = vsel %vm454, %v496, 0.0
  %516 = vadd.xlane.f32.xlu0 %v515
  %v517 = vpop.xlane.xlu0 %516
  %v518 = vsel %vm454, %v498, 0.0
  %519 = vadd.xlane.f32.xlu0 %v518
  %v520 = vpop.xlane.xlu0 %519
  %v521 = vsel %vm454, %v500, 0.0
  %522 = vadd.xlane.f32.xlu0 %v521
  %v523 = vpop.xlane.xlu0 %522
  %v524 = vsel %vm454, %v502, 0.0
  %525 = vadd.xlane.f32.xlu0 %v524
  %v526 = vpop.xlane.xlu0 %525
  %vm527 = vcmp.gt.f32.partialorder %v457, -1e+29
  %vm528 = vcmp.gt.f32.partialorder %v460, -1e+29
  %vm529 = vcmp.gt.f32.partialorder %v463, -1e+29
  %vm530 = vcmp.gt.f32.partialorder %v466, -1e+29
  %vm531 = vcmp.gt.f32.partialorder %v469, -1e+29
  %vm532 = vcmp.gt.f32.partialorder %v472, -1e+29
  %vm533 = vcmp.gt.f32.partialorder %v475, -1e+29
  %vm534 = vcmp.gt.f32.partialorder %v478, -1e+29
  %v535 = vrcp.pop %v505
  %v536 = vrcp.pop %v508
  %v537 = vrcp.pop %v511
  %v538 = vrcp.pop %v514
  %v539 = vrcp.pop %v517
  %v540 = vrcp.pop %v520
  %v541 = vrcp.pop %v523
  %v542 = vrcp.pop %v526
  %v543 = vmul.f32 %v535, 0.25
  %v544 = vmul.f32 %v536, 0.25
  %v545 = vmul.f32 %v537, 0.25
  %v546 = vmul.f32 %v538, 0.25
  %v547 = vmul.f32 %v539, 0.25
  %v548 = vmul.f32 %v540, 0.25
  %v549 = vmul.f32 %v541, 0.25
  %v550 = vmul.f32 %v542, 0.25
  %v551 = vsel %vm527, %v543, 0.0
  %v552 = vsel %vm528, %v544, 0.0
  %v553 = vsel %vm529, %v545, 0.0
  %v554 = vsel %vm530, %v546, 0.0
  %v555 = vsel %vm531, %v547, 0.0
  %v556 = vsel %vm532, %v548, 0.0
  %v557 = vsel %vm533, %v549, 0.0
  %v558 = vsel %vm534, %v550, 0.0
  %v559 = vmul.f32 %v488, %v551
  %v560 = vmul.f32 %v490, %v552
  %v561 = vmul.f32 %v492, %v553
  %v562 = vmul.f32 %v494, %v554
  %v563 = vmul.f32 %v496, %v555
  %v564 = vmul.f32 %v498, %v556
  %v565 = vmul.f32 %v500, %v557
  %v566 = vmul.f32 %v502, %v558
  %v568 = vsel %vm454, %v559, 0
  %v571 = vsel %vm454, %v560, 0
  %v574 = vsel %vm454, %v561, 0
  %v577 = vsel %vm454, %v562, 0
  %v580 = vsel %vm454, %v563, 0
  %v583 = vsel %vm454, %v564, 0
  %v586 = vsel %vm454, %v565, 0
  %v589 = vsel %vm454, %v566, 0
  %591 = vmatprep.subr.mxu0 0.0
  %592 = vmatpush1.msra.mxu0 0.0
  %593 = vmatprep.subr.mxu0 0.0
  %594 = vmatpush1.msra.mxu0 0.0
  %595 = vmatprep.subr.mxu0 0.0
  %596 = vmatpush1.msra.mxu0 0.0
  %597 = vmatprep.subr.mxu0 0.0
  %598 = vmatpush1.msra.mxu0 0.0
  %599 = vmatprep.subr.mxu0 0.0
  %600 = vmatpush1.msra.mxu0 0.0
  %601 = vmatprep.subr.mxu0 0.0
  %602 = vmatpush1.msra.mxu0 0.0
  %603 = vmatprep.subr.mxu0 0.0
  %604 = vmatpush1.msra.mxu0 0.0
  %605 = vmatprep.subr.mxu0 0.0
  %606 = vmatpush1.msra.mxu0 0.0
  %607 = vmatprep.subr.mxu0 0.0
  %608 = vmatpush1.msra.mxu0 %v305
  %609 = vmatprep.subr.mxu0 0.0
  %610 = vmatpush1.msra.mxu0 %v303
  %611 = vmatprep.subr.mxu0 0.0
  %612 = vmatpush1.msra.mxu0 %v299
  %613 = vmatprep.subr.mxu0 0.0
  %614 = vmatpush1.msra.mxu0 %v297
  %615 = vmatprep.subr.mxu0 0.0
  %616 = vmatpush1.msra.mxu0 %v293
  %617 = vmatprep.subr.mxu0 0.0
  %618 = vmatpush1.msra.mxu0 %v291
  %619 = vmatprep.subr.mxu0 0.0
  %620 = vmatpush1.msra.mxu0 %v242
  %621 = vmatprep.subr.mxu0 0.0
  %622 = vmatpush1.msra.mxu0 %v236
  %623 = vmatprep.subr.mxu0 0.0
  %624 = vmatpush2.msra.mxu0 0.0
  %625 = vmatprep.subr.mxu0 0.0
  %626 = vmatpush2.msra.mxu0 0.0
  %627 = vmatprep.subr.mxu0 0.0
  %628 = vmatpush2.msra.mxu0 0.0
  %629 = vmatprep.subr.mxu0 0.0
  %630 = vmatpush2.msra.mxu0 0.0
  %631 = vmatprep.subr.mxu0 0.0
  %632 = vmatpush2.msra.mxu0 0.0
  %633 = vmatprep.subr.mxu0 0.0
  %634 = vmatpush2.msra.mxu0 0.0
  %635 = vmatprep.subr.mxu0 0.0
  %636 = vmatpush2.msra.mxu0 0.0
  %637 = vmatprep.subr.mxu0 0.0
  %638 = vmatpush2.msra.mxu0 0.0
  %639 = vmatprep.subr.mxu0 0.0
  %640 = vmatpush2.msra.mxu0 0.0
  %641 = vmatprep.subr.mxu0 0.0
  %642 = vmatpush2.msra.mxu0 0.0
  %643 = vmatprep.subr.mxu0 0.0
  %644 = vmatpush2.msra.mxu0 0.0
  %645 = vmatprep.subr.mxu0 0.0
  %646 = vmatpush2.msra.mxu0 0.0
  %647 = vmatprep.subr.mxu0 0.0
  %648 = vmatpush2.msra.mxu0 0.0
  %649 = vmatprep.subr.mxu0 0.0
  %650 = vmatpush2.msra.mxu0 0.0
  %651 = vmatprep.subr.mxu0 0.0
  %652 = vmatpush2.msra.mxu0 0.0
  %653 = vmatprep.subr.mxu0 0.0
  %654 = vmatpush2.msra.mxu0 0.0
  %655 = vmatprep.mubr.f32.mxu0 0.0
  %656 = vmatmul.mubr.f32.gmra.mxu0 %v568
  %v657 = vpop.f32.mrf.mxu0
  %v658 = vadd.f32 0.0, %v657
  %v659 = vpop.f32.mrf.mxu0
  %660 = vmatprep.mubr.f32.mxu0 0.0
  %661 = vmatmul.mubr.f32.gmra.mxu0 %v571
  %v662 = vpop.f32.mrf.mxu0
  %v663 = vadd.f32 0.0, %v662
  %v664 = vpop.f32.mrf.mxu0
  %665 = vmatprep.mubr.f32.mxu0 0.0
  %666 = vmatmul.mubr.f32.gmra.mxu0 %v574
  %v667 = vpop.f32.mrf.mxu0
  %v668 = vadd.f32 0.0, %v667
  %v669 = vpop.f32.mrf.mxu0
  %670 = vmatprep.mubr.f32.mxu0 0.0
  %671 = vmatmul.mubr.f32.gmra.mxu0 %v577
  %v672 = vpop.f32.mrf.mxu0
  %v673 = vadd.f32 0.0, %v672
  %v674 = vpop.f32.mrf.mxu0
  %675 = vmatprep.mubr.f32.mxu0 0.0
  %676 = vmatmul.mubr.f32.gmra.mxu0 %v580
  %v677 = vpop.f32.mrf.mxu0
  %v678 = vadd.f32 0.0, %v677
  %v679 = vpop.f32.mrf.mxu0
  %680 = vmatprep.mubr.f32.mxu0 0.0
  %681 = vmatmul.mubr.f32.gmra.mxu0 %v583
  %v682 = vpop.f32.mrf.mxu0
  %v683 = vadd.f32 0.0, %v682
  %v684 = vpop.f32.mrf.mxu0
  %685 = vmatprep.mubr.f32.mxu0 0.0
  %686 = vmatmul.mubr.f32.gmra.mxu0 %v586
  %v687 = vpop.f32.mrf.mxu0
  %v688 = vadd.f32 0.0, %v687
  %v689 = vpop.f32.mrf.mxu0
  %690 = vmatprep.mubr.f32.mxu0 0.0
  %691 = vmatmul.mubr.f32.gmra.mxu0 %v589
  %v692 = vpop.f32.mrf.mxu0
  %v693 = vadd.f32 0.0, %v692
  %v694 = vpop.f32.mrf.mxu0
  %695 = vdwg.mxu0
  %v696 = vadd.f32 %v658, %v668
  %v697 = vadd.f32 %v663, %v673
  %v698 = vadd.f32 %v696, %v678
  %v699 = vadd.f32 %v697, %v683
  %v700 = vadd.f32 %v698, %v688
  %v701 = vadd.f32 %v699, %v693
  %v702 = vadd.f32 %v700, %v238
  %v703 = vadd.f32 %v701, %v244
  %v704 = vmax.f32 %v702, 0.0
  %v705 = vmax.f32 %v703, 0.0
  %v706 = vld [vmem:[%s4] sm:$0xff]
  %v707 = vld [vmem:[%s4 + $0x8] sm:$0xff]
  %v708 = vld [vmem:[%s4 + $0x10] sm:$0xff]
  %v709 = vld [vmem:[%s4 + $0x18] sm:$0xff]
  %v710 = vld [vmem:[%s4 + $0x20] sm:$0xff]
  %v711 = vld [vmem:[%s4 + $0x28] sm:$0xff]
  %v712 = vld [vmem:[%s4 + $0x30] sm:$0xff]
  %v713 = vld [vmem:[%s4 + $0x38] sm:$0xff]
  %v714 = vld [vmem:[%s4 + $0x40] sm:$0xff]
  %v715 = vld [vmem:[%s4 + $0x48] sm:$0xff]
  %v716 = vld [vmem:[%s4 + $0x50] sm:$0xff]
  %v717 = vld [vmem:[%s4 + $0x58] sm:$0xff]
  %v718 = vld [vmem:[%s4 + $0x60] sm:$0xff]
  %v719 = vld [vmem:[%s4 + $0x68] sm:$0xff]
  %v720 = vld [vmem:[%s4 + $0x70] sm:$0xff]
  %v721 = vld [vmem:[%s4 + $0x78] sm:$0xff]
  %v722 = vld [vmem:[%s5] sm:$0xf]
  %v724 = vlaneseq
  %v725 = vshrl.u32 %v724, 7
  %v726 = vsub.s32 0, %v725
  %v727 = vrot.slane %v722, %v726
  %v728 = vlaneseq
  %v729 = vshrl.u32 %v728, 7
  %v730 = vsub.s32 1, %v729
  %v731 = vrot.slane %v722, %v730
  %v732 = vlaneseq
  %v733 = vshrl.u32 %v732, 7
  %v734 = vsub.s32 2, %v733
  %v735 = vrot.slane %v722, %v734
  %v736 = vlaneseq
  %v737 = vshrl.u32 %v736, 7
  %v738 = vsub.s32 3, %v737
  %v739 = vrot.slane %v722, %v738
  %v745 = vsel %vm308, %v704, 0
  %v748 = vsel %vm308, %v705, 0
  %750 = vmatprep.subr.mxu0 0.0
  %751 = vmatpush1.msra.mxu0 0.0
  %752 = vmatprep.subr.mxu0 0.0
  %753 = vmatpush1.msra.mxu0 0.0
  %754 = vmatprep.subr.mxu0 0.0
  %755 = vmatpush1.msra.mxu0 0.0
  %756 = vmatprep.subr.mxu0 0.0
  %757 = vmatpush1.msra.mxu0 0.0
  %758 = vmatprep.subr.mxu0 0.0
  %759 = vmatpush1.msra.mxu0 0.0
  %760 = vmatprep.subr.mxu0 0.0
  %761 = vmatpush1.msra.mxu0 0.0
  %762 = vmatprep.subr.mxu0 0.0
  %763 = vmatpush1.msra.mxu0 0.0
  %764 = vmatprep.subr.mxu0 0.0
  %765 = vmatpush1.msra.mxu0 0.0
  %766 = vmatprep.subr.mxu0 0.0
  %767 = vmatpush1.msra.mxu0 0.0
  %768 = vmatprep.subr.mxu0 0.0
  %769 = vmatpush1.msra.mxu0 0.0
  %770 = vmatprep.subr.mxu0 0.0
  %771 = vmatpush1.msra.mxu0 0.0
  %772 = vmatprep.subr.mxu0 0.0
  %773 = vmatpush1.msra.mxu0 0.0
  %774 = vmatprep.subr.mxu0 %v719
  %775 = vmatpush1.msra.mxu0 %v718
  %776 = vmatprep.subr.mxu0 %v715
  %777 = vmatpush1.msra.mxu0 %v714
  %778 = vmatprep.subr.mxu0 %v711
  %779 = vmatpush1.msra.mxu0 %v710
  %780 = vmatprep.subr.mxu0 %v707
  %781 = vmatpush1.msra.mxu0 %v706
  %782 = vmatprep.subr.mxu0 0.0
  %783 = vmatpush2.msra.mxu0 0.0
  %784 = vmatprep.subr.mxu0 0.0
  %785 = vmatpush2.msra.mxu0 0.0
  %786 = vmatprep.subr.mxu0 0.0
  %787 = vmatpush2.msra.mxu0 0.0
  %788 = vmatprep.subr.mxu0 0.0
  %789 = vmatpush2.msra.mxu0 0.0
  %790 = vmatprep.subr.mxu0 0.0
  %791 = vmatpush2.msra.mxu0 0.0
  %792 = vmatprep.subr.mxu0 0.0
  %793 = vmatpush2.msra.mxu0 0.0
  %794 = vmatprep.subr.mxu0 0.0
  %795 = vmatpush2.msra.mxu0 0.0
  %796 = vmatprep.subr.mxu0 0.0
  %797 = vmatpush2.msra.mxu0 0.0
  %798 = vmatprep.subr.mxu0 0.0
  %799 = vmatpush2.msra.mxu0 0.0
  %800 = vmatprep.subr.mxu0 0.0
  %801 = vmatpush2.msra.mxu0 0.0
  %802 = vmatprep.subr.mxu0 0.0
  %803 = vmatpush2.msra.mxu0 0.0
  %804 = vmatprep.subr.mxu0 0.0
  %805 = vmatpush2.msra.mxu0 0.0
  %806 = vmatprep.subr.mxu0 0.0
  %807 = vmatpush2.msra.mxu0 0.0
  %808 = vmatprep.subr.mxu0 0.0
  %809 = vmatpush2.msra.mxu0 0.0
  %810 = vmatprep.subr.mxu0 0.0
  %811 = vmatpush2.msra.mxu0 0.0
  %812 = vmatprep.subr.mxu0 0.0
  %813 = vmatpush2.msra.mxu0 0.0
  %814 = vmatprep.mubr.f32.mxu0 0.0
  %815 = vmatmul.mubr.f32.gmra.mxu0 %v745
  %v816 = vpop.f32.mrf.mxu0
  %v817 = vadd.f32 %v727, %v816
  %v818 = vpop.f32.mrf.mxu0
  %v819 = vadd.f32 %v731, %v818
  %820 = vmatprep.mubr.f32.mxu0 0.0
  %821 = vmatmul.mubr.f32.gmra.mxu0 %v748
  %v822 = vpop.f32.mrf.mxu0
  %v823 = vadd.f32 %v727, %v822
  %v824 = vpop.f32.mrf.mxu0
  %v825 = vadd.f32 %v731, %v824
  %826 = vdwg.mxu0
  %827 = vmatprep.subr.mxu0 0.0
  %828 = vmatpush1.msra.mxu0 0.0
  %829 = vmatprep.subr.mxu0 0.0
  %830 = vmatpush1.msra.mxu0 0.0
  %831 = vmatprep.subr.mxu0 0.0
  %832 = vmatpush1.msra.mxu0 0.0
  %833 = vmatprep.subr.mxu0 0.0
  %834 = vmatpush1.msra.mxu0 0.0
  %835 = vmatprep.subr.mxu0 0.0
  %836 = vmatpush1.msra.mxu0 0.0
  %837 = vmatprep.subr.mxu0 0.0
  %838 = vmatpush1.msra.mxu0 0.0
  %839 = vmatprep.subr.mxu0 0.0
  %840 = vmatpush1.msra.mxu0 0.0
  %841 = vmatprep.subr.mxu0 0.0
  %842 = vmatpush1.msra.mxu0 0.0
  %843 = vmatprep.subr.mxu0 0.0
  %844 = vmatpush1.msra.mxu0 0.0
  %845 = vmatprep.subr.mxu0 0.0
  %846 = vmatpush1.msra.mxu0 0.0
  %847 = vmatprep.subr.mxu0 0.0
  %848 = vmatpush1.msra.mxu0 0.0
  %849 = vmatprep.subr.mxu0 0.0
  %850 = vmatpush1.msra.mxu0 0.0
  %851 = vmatprep.subr.mxu0 %v721
  %852 = vmatpush1.msra.mxu0 %v720
  %853 = vmatprep.subr.mxu0 %v717
  %854 = vmatpush1.msra.mxu0 %v716
  %855 = vmatprep.subr.mxu0 %v713
  %856 = vmatpush1.msra.mxu0 %v712
  %857 = vmatprep.subr.mxu0 %v709
  %858 = vmatpush1.msra.mxu0 %v708
  %859 = vmatprep.subr.mxu0 0.0
  %860 = vmatpush2.msra.mxu0 0.0
  %861 = vmatprep.subr.mxu0 0.0
  %862 = vmatpush2.msra.mxu0 0.0
  %863 = vmatprep.subr.mxu0 0.0
  %864 = vmatpush2.msra.mxu0 0.0
  %865 = vmatprep.subr.mxu0 0.0
  %866 = vmatpush2.msra.mxu0 0.0
  %867 = vmatprep.subr.mxu0 0.0
  %868 = vmatpush2.msra.mxu0 0.0
  %869 = vmatprep.subr.mxu0 0.0
  %870 = vmatpush2.msra.mxu0 0.0
  %871 = vmatprep.subr.mxu0 0.0
  %872 = vmatpush2.msra.mxu0 0.0
  %873 = vmatprep.subr.mxu0 0.0
  %874 = vmatpush2.msra.mxu0 0.0
  %875 = vmatprep.subr.mxu0 0.0
  %876 = vmatpush2.msra.mxu0 0.0
  %877 = vmatprep.subr.mxu0 0.0
  %878 = vmatpush2.msra.mxu0 0.0
  %879 = vmatprep.subr.mxu0 0.0
  %880 = vmatpush2.msra.mxu0 0.0
  %881 = vmatprep.subr.mxu0 0.0
  %882 = vmatpush2.msra.mxu0 0.0
  %883 = vmatprep.subr.mxu0 0.0
  %884 = vmatpush2.msra.mxu0 0.0
  %885 = vmatprep.subr.mxu0 0.0
  %886 = vmatpush2.msra.mxu0 0.0
  %887 = vmatprep.subr.mxu0 0.0
  %888 = vmatpush2.msra.mxu0 0.0
  %889 = vmatprep.subr.mxu0 0.0
  %890 = vmatpush2.msra.mxu0 0.0
  %891 = vmatprep.mubr.f32.mxu0 0.0
  %892 = vmatmul.mubr.f32.gmra.mxu0 %v745
  %v893 = vpop.f32.mrf.mxu0
  %v894 = vadd.f32 %v735, %v893
  %v895 = vpop.f32.mrf.mxu0
  %v896 = vadd.f32 %v739, %v895
  %897 = vmatprep.mubr.f32.mxu0 0.0
  %898 = vmatmul.mubr.f32.gmra.mxu0 %v748
  %v899 = vpop.f32.mrf.mxu0
  %v900 = vadd.f32 %v735, %v899
  %v901 = vpop.f32.mrf.mxu0
  %v902 = vadd.f32 %v739, %v901
  %903 = vdwg.mxu0
  %906 = vrot.lane.b32.xlu0 %v817, 96
  %v907 = vpop.permute.xlu0 %906
  %908 = vrot.lane.b32.xlu0 %v823, 96
  %v909 = vpop.permute.xlu0 %908
  %912 = vrot.lane.b32.xlu0 %v817, 64
  %v913 = vpop.permute.xlu0 %912
  %914 = vrot.lane.b32.xlu0 %v823, 64
  %v915 = vpop.permute.xlu0 %914
  %918 = vrot.lane.b32.xlu0 %v817, 32
  %v919 = vpop.permute.xlu0 %918
  %920 = vrot.lane.b32.xlu0 %v823, 32
  %v921 = vpop.permute.xlu0 %920
  %v924 = vmul.f32 %v817, 0.17677669
  %v925 = vmul.f32 %v823, 0.17677669
  %v926 = vmul.f32 %v907, 0.17677669
  %v927 = vmul.f32 %v909, 0.17677669
  %v928 = vmul.f32 %v913, 0.17677669
  %v929 = vmul.f32 %v915, 0.17677669
  %v930 = vmul.f32 %v919, 0.17677669
  %v931 = vmul.f32 %v921, 0.17677669
  %934 = vrot.lane.b32.xlu0 %v819, 96
  %v935 = vpop.permute.xlu0 %934
  %936 = vrot.lane.b32.xlu0 %v825, 96
  %v937 = vpop.permute.xlu0 %936
  %938 = vrot.lane.b32.xlu0 %v819, 64
  %v939 = vpop.permute.xlu0 %938
  %940 = vrot.lane.b32.xlu0 %v825, 64
  %v941 = vpop.permute.xlu0 %940
  %942 = vrot.lane.b32.xlu0 %v819, 32
  %v943 = vpop.permute.xlu0 %942
  %944 = vrot.lane.b32.xlu0 %v825, 32
  %v945 = vpop.permute.xlu0 %944
  %948 = vrot.lane.b32.xlu0 %v894, 96
  %v949 = vpop.permute.xlu0 %948
  %950 = vrot.lane.b32.xlu0 %v900, 96
  %v951 = vpop.permute.xlu0 %950
  %954 = vrot.lane.b32.xlu0 %v894, 64
  %v955 = vpop.permute.xlu0 %954
  %956 = vrot.lane.b32.xlu0 %v900, 64
  %v957 = vpop.permute.xlu0 %956
  %960 = vrot.lane.b32.xlu0 %v894, 32
  %v961 = vpop.permute.xlu0 %960
  %962 = vrot.lane.b32.xlu0 %v900, 32
  %v963 = vpop.permute.xlu0 %962
  %v967 = vsel %vm308, %v924, 0
  %v970 = vsel %vm308, %v925, 0
  %v973 = vsel %vm308, %v926, 0
  %v976 = vsel %vm308, %v927, 0
  %v979 = vsel %vm308, %v928, 0
  %v982 = vsel %vm308, %v929, 0
  %v985 = vsel %vm308, %v930, 0
  %v988 = vsel %vm308, %v931, 0
  %v990 = vsel %vm308, %v819, 0
  %v992 = vsel %vm308, %v825, 0
  %v994 = vsel %vm308, %v935, 0
  %v996 = vsel %vm308, %v937, 0
  %v998 = vsel %vm308, %v939, 0
  %v1000 = vsel %vm308, %v941, 0
  %v1002 = vsel %vm308, %v943, 0
  %v1004 = vsel %vm308, %v945, 0
  %1006 = vmatprep.subr.mxu0 0.0
  %1007 = vmatpush1.xpose.msra.mxu0 0.0
  %1008 = vmatprep.subr.mxu0 0.0
  %1009 = vmatpush1.xpose.msra.mxu0 0.0
  %1010 = vmatprep.subr.mxu0 0.0
  %1011 = vmatpush1.xpose.msra.mxu0 0.0
  %1012 = vmatprep.subr.mxu0 0.0
  %1013 = vmatpush1.xpose.msra.mxu0 0.0
  %1014 = vmatprep.subr.mxu0 0.0
  %1015 = vmatpush1.xpose.msra.mxu0 0.0
  %1016 = vmatprep.subr.mxu0 0.0
  %1017 = vmatpush1.xpose.msra.mxu0 0.0
  %1018 = vmatprep.subr.mxu0 0.0
  %1019 = vmatpush1.xpose.msra.mxu0 0.0
  %1020 = vmatprep.subr.mxu0 0.0
  %1021 = vmatpush1.xpose.msra.mxu0 0.0
  %1022 = vmatprep.subr.mxu0 0.0
  %1023 = vmatpush1.xpose.msra.mxu0 %v1004
  %1024 = vmatprep.subr.mxu0 0.0
  %1025 = vmatpush1.xpose.msra.mxu0 %v1002
  %1026 = vmatprep.subr.mxu0 0.0
  %1027 = vmatpush1.xpose.msra.mxu0 %v1000
  %1028 = vmatprep.subr.mxu0 0.0
  %1029 = vmatpush1.xpose.msra.mxu0 %v998
  %1030 = vmatprep.subr.mxu0 0.0
  %1031 = vmatpush1.xpose.msra.mxu0 %v996
  %1032 = vmatprep.subr.mxu0 0.0
  %1033 = vmatpush1.xpose.msra.mxu0 %v994
  %1034 = vmatprep.subr.mxu0 0.0
  %1035 = vmatpush1.xpose.msra.mxu0 %v992
  %1036 = vmatprep.subr.mxu0 0.0
  %1037 = vmatpush1.xpose.msra.mxu0 %v990
  %1038 = vmatprep.subr.mxu0 0.0
  %1039 = vmatpush2.xpose.msra.mxu0 0.0
  %1040 = vmatprep.subr.mxu0 0.0
  %1041 = vmatpush2.xpose.msra.mxu0 0.0
  %1042 = vmatprep.subr.mxu0 0.0
  %1043 = vmatpush2.xpose.msra.mxu0 0.0
  %1044 = vmatprep.subr.mxu0 0.0
  %1045 = vmatpush2.xpose.msra.mxu0 0.0
  %1046 = vmatprep.subr.mxu0 0.0
  %1047 = vmatpush2.xpose.msra.mxu0 0.0
  %1048 = vmatprep.subr.mxu0 0.0
  %1049 = vmatpush2.xpose.msra.mxu0 0.0
  %1050 = vmatprep.subr.mxu0 0.0
  %1051 = vmatpush2.xpose.msra.mxu0 0.0
  %1052 = vmatprep.subr.mxu0 0.0
  %1053 = vmatpush2.xpose.msra.mxu0 0.0
  %1054 = vmatprep.subr.mxu0 0.0
  %1055 = vmatpush2.xpose.msra.mxu0 0.0
  %1056 = vmatprep.subr.mxu0 0.0
  %1057 = vmatpush2.xpose.msra.mxu0 0.0
  %1058 = vmatprep.subr.mxu0 0.0
  %1059 = vmatpush2.xpose.msra.mxu0 0.0
  %1060 = vmatprep.subr.mxu0 0.0
  %1061 = vmatpush2.xpose.msra.mxu0 0.0
  %1062 = vmatprep.subr.mxu0 0.0
  %1063 = vmatpush2.xpose.msra.mxu0 0.0
  %1064 = vmatprep.subr.mxu0 0.0
  %1065 = vmatpush2.xpose.msra.mxu0 0.0
  %1066 = vmatprep.subr.mxu0 0.0
  %1067 = vmatpush2.xpose.msra.mxu0 0.0
  %1068 = vmatprep.subr.mxu0 0.0
  %1069 = vmatpush2.xpose.msra.mxu0 0.0
  %1070 = vmatprep.mubr.f32.mxu0 0.0
  %1071 = vmatmul.mubr.f32.gmra.mxu0 %v967
  %v1072 = vpop.f32.mrf.mxu0
  %v1073 = vadd.f32 %v49, %v1072
  %v1074 = vpop.f32.mrf.mxu0
  %1075 = vmatprep.mubr.f32.mxu0 0.0
  %1076 = vmatmul.mubr.f32.gmra.mxu0 %v970
  %v1077 = vpop.f32.mrf.mxu0
  %v1078 = vadd.f32 %v50, %v1077
  %v1079 = vpop.f32.mrf.mxu0
  %1080 = vmatprep.mubr.f32.mxu0 0.0
  %1081 = vmatmul.mubr.f32.gmra.mxu0 %v973
  %v1082 = vpop.f32.mrf.mxu0
  %v1083 = vadd.f32 %v51, %v1082
  %v1084 = vpop.f32.mrf.mxu0
  %1085 = vmatprep.mubr.f32.mxu0 0.0
  %1086 = vmatmul.mubr.f32.gmra.mxu0 %v976
  %v1087 = vpop.f32.mrf.mxu0
  %v1088 = vadd.f32 %v52, %v1087
  %v1089 = vpop.f32.mrf.mxu0
  %1090 = vmatprep.mubr.f32.mxu0 0.0
  %1091 = vmatmul.mubr.f32.gmra.mxu0 %v979
  %v1092 = vpop.f32.mrf.mxu0
  %v1093 = vadd.f32 %v53, %v1092
  %v1094 = vpop.f32.mrf.mxu0
  %1095 = vmatprep.mubr.f32.mxu0 0.0
  %1096 = vmatmul.mubr.f32.gmra.mxu0 %v982
  %v1097 = vpop.f32.mrf.mxu0
  %v1098 = vadd.f32 %v54, %v1097
  %v1099 = vpop.f32.mrf.mxu0
  %1100 = vmatprep.mubr.f32.mxu0 0.0
  %1101 = vmatmul.mubr.f32.gmra.mxu0 %v985
  %v1102 = vpop.f32.mrf.mxu0
  %v1103 = vadd.f32 %v55, %v1102
  %v1104 = vpop.f32.mrf.mxu0
  %1105 = vmatprep.mubr.f32.mxu0 0.0
  %1106 = vmatmul.mubr.f32.gmra.mxu0 %v988
  %v1107 = vpop.f32.mrf.mxu0
  %v1108 = vadd.f32 %v56, %v1107
  %v1109 = vpop.f32.mrf.mxu0
  %1110 = vdwg.mxu0
  %v1111 = vsel %vm454, %v1073, -inf
  %1112 = vmax.xlane.f32.xlu0 %v1111
  %v1113 = vpop.xlane.xlu0 %1112
  %v1114 = vsel %vm454, %v1078, -inf
  %1115 = vmax.xlane.f32.xlu0 %v1114
  %v1116 = vpop.xlane.xlu0 %1115
  %v1117 = vsel %vm454, %v1083, -inf
  %1118 = vmax.xlane.f32.xlu0 %v1117
  %v1119 = vpop.xlane.xlu0 %1118
  %v1120 = vsel %vm454, %v1088, -inf
  %1121 = vmax.xlane.f32.xlu0 %v1120
  %v1122 = vpop.xlane.xlu0 %1121
  %v1123 = vsel %vm454, %v1093, -inf
  %1124 = vmax.xlane.f32.xlu0 %v1123
  %v1125 = vpop.xlane.xlu0 %1124
  %v1126 = vsel %vm454, %v1098, -inf
  %1127 = vmax.xlane.f32.xlu0 %v1126
  %v1128 = vpop.xlane.xlu0 %1127
  %v1129 = vsel %vm454, %v1103, -inf
  %1130 = vmax.xlane.f32.xlu0 %v1129
  %v1131 = vpop.xlane.xlu0 %1130
  %v1132 = vsel %vm454, %v1108, -inf
  %1133 = vmax.xlane.f32.xlu0 %v1132
  %v1134 = vpop.xlane.xlu0 %1133
  %v1135 = vsub.f32 %v1073, %v1113
  %v1136 = vsub.f32 %v1078, %v1116
  %v1137 = vsub.f32 %v1083, %v1119
  %v1138 = vsub.f32 %v1088, %v1122
  %v1139 = vsub.f32 %v1093, %v1125
  %v1140 = vsub.f32 %v1098, %v1128
  %v1141 = vsub.f32 %v1103, %v1131
  %v1142 = vsub.f32 %v1108, %v1134
  %v1143 = vmul.f32 %v1135, 1.442695
  %v1144 = vpow.pop %v1143
  %v1145 = vmul.f32 %v1136, 1.442695
  %v1146 = vpow.pop %v1145
  %v1147 = vmul.f32 %v1137, 1.442695
  %v1148 = vpow.pop %v1147
  %v1149 = vmul.f32 %v1138, 1.442695
  %v1150 = vpow.pop %v1149
  %v1151 = vmul.f32 %v1139, 1.442695
  %v1152 = vpow.pop %v1151
  %v1153 = vmul.f32 %v1140, 1.442695
  %v1154 = vpow.pop %v1153
  %v1155 = vmul.f32 %v1141, 1.442695
  %v1156 = vpow.pop %v1155
  %v1157 = vmul.f32 %v1142, 1.442695
  %v1158 = vpow.pop %v1157
  %v1159 = vsel %vm454, %v1144, 0.0
  %1160 = vadd.xlane.f32.xlu0 %v1159
  %v1161 = vpop.xlane.xlu0 %1160
  %v1162 = vsel %vm454, %v1146, 0.0
  %1163 = vadd.xlane.f32.xlu0 %v1162
  %v1164 = vpop.xlane.xlu0 %1163
  %v1165 = vsel %vm454, %v1148, 0.0
  %1166 = vadd.xlane.f32.xlu0 %v1165
  %v1167 = vpop.xlane.xlu0 %1166
  %v1168 = vsel %vm454, %v1150, 0.0
  %1169 = vadd.xlane.f32.xlu0 %v1168
  %v1170 = vpop.xlane.xlu0 %1169
  %v1171 = vsel %vm454, %v1152, 0.0
  %1172 = vadd.xlane.f32.xlu0 %v1171
  %v1173 = vpop.xlane.xlu0 %1172
  %v1174 = vsel %vm454, %v1154, 0.0
  %1175 = vadd.xlane.f32.xlu0 %v1174
  %v1176 = vpop.xlane.xlu0 %1175
  %v1177 = vsel %vm454, %v1156, 0.0
  %1178 = vadd.xlane.f32.xlu0 %v1177
  %v1179 = vpop.xlane.xlu0 %1178
  %v1180 = vsel %vm454, %v1158, 0.0
  %1181 = vadd.xlane.f32.xlu0 %v1180
  %v1182 = vpop.xlane.xlu0 %1181
  %vm1183 = vcmp.gt.f32.partialorder %v1113, -1e+29
  %vm1184 = vcmp.gt.f32.partialorder %v1116, -1e+29
  %vm1185 = vcmp.gt.f32.partialorder %v1119, -1e+29
  %vm1186 = vcmp.gt.f32.partialorder %v1122, -1e+29
  %vm1187 = vcmp.gt.f32.partialorder %v1125, -1e+29
  %vm1188 = vcmp.gt.f32.partialorder %v1128, -1e+29
  %vm1189 = vcmp.gt.f32.partialorder %v1131, -1e+29
  %vm1190 = vcmp.gt.f32.partialorder %v1134, -1e+29
  %v1191 = vrcp.pop %v1161
  %v1192 = vrcp.pop %v1164
  %v1193 = vrcp.pop %v1167
  %v1194 = vrcp.pop %v1170
  %v1195 = vrcp.pop %v1173
  %v1196 = vrcp.pop %v1176
  %v1197 = vrcp.pop %v1179
  %v1198 = vrcp.pop %v1182
  %v1199 = vmul.f32 %v1191, 0.25
  %v1200 = vmul.f32 %v1192, 0.25
  %v1201 = vmul.f32 %v1193, 0.25
  %v1202 = vmul.f32 %v1194, 0.25
  %v1203 = vmul.f32 %v1195, 0.25
  %v1204 = vmul.f32 %v1196, 0.25
  %v1205 = vmul.f32 %v1197, 0.25
  %v1206 = vmul.f32 %v1198, 0.25
  %v1207 = vsel %vm1183, %v1199, 0.0
  %v1208 = vsel %vm1184, %v1200, 0.0
  %v1209 = vsel %vm1185, %v1201, 0.0
  %v1210 = vsel %vm1186, %v1202, 0.0
  %v1211 = vsel %vm1187, %v1203, 0.0
  %v1212 = vsel %vm1188, %v1204, 0.0
  %v1213 = vsel %vm1189, %v1205, 0.0
  %v1214 = vsel %vm1190, %v1206, 0.0
  %v1215 = vmul.f32 %v1144, %v1207
  %v1216 = vmul.f32 %v1146, %v1208
  %v1217 = vmul.f32 %v1148, %v1209
  %v1218 = vmul.f32 %v1150, %v1210
  %v1219 = vmul.f32 %v1152, %v1211
  %v1220 = vmul.f32 %v1154, %v1212
  %v1221 = vmul.f32 %v1156, %v1213
  %v1222 = vmul.f32 %v1158, %v1214
  %v1224 = vsel %vm454, %v1215, 0
  %v1227 = vsel %vm454, %v1216, 0
  %v1230 = vsel %vm454, %v1217, 0
  %v1233 = vsel %vm454, %v1218, 0
  %v1236 = vsel %vm454, %v1219, 0
  %v1239 = vsel %vm454, %v1220, 0
  %v1242 = vsel %vm454, %v1221, 0
  %v1245 = vsel %vm454, %v1222, 0
  %1247 = vmatprep.subr.mxu0 0.0
  %1248 = vmatpush1.msra.mxu0 0.0
  %1249 = vmatprep.subr.mxu0 0.0
  %1250 = vmatpush1.msra.mxu0 0.0
  %1251 = vmatprep.subr.mxu0 0.0
  %1252 = vmatpush1.msra.mxu0 0.0
  %1253 = vmatprep.subr.mxu0 0.0
  %1254 = vmatpush1.msra.mxu0 0.0
  %1255 = vmatprep.subr.mxu0 0.0
  %1256 = vmatpush1.msra.mxu0 0.0
  %1257 = vmatprep.subr.mxu0 0.0
  %1258 = vmatpush1.msra.mxu0 0.0
  %1259 = vmatprep.subr.mxu0 0.0
  %1260 = vmatpush1.msra.mxu0 0.0
  %1261 = vmatprep.subr.mxu0 0.0
  %1262 = vmatpush1.msra.mxu0 0.0
  %1263 = vmatprep.subr.mxu0 0.0
  %1264 = vmatpush1.msra.mxu0 %v963
  %1265 = vmatprep.subr.mxu0 0.0
  %1266 = vmatpush1.msra.mxu0 %v961
  %1267 = vmatprep.subr.mxu0 0.0
  %1268 = vmatpush1.msra.mxu0 %v957
  %1269 = vmatprep.subr.mxu0 0.0
  %1270 = vmatpush1.msra.mxu0 %v955
  %1271 = vmatprep.subr.mxu0 0.0
  %1272 = vmatpush1.msra.mxu0 %v951
  %1273 = vmatprep.subr.mxu0 0.0
  %1274 = vmatpush1.msra.mxu0 %v949
  %1275 = vmatprep.subr.mxu0 0.0
  %1276 = vmatpush1.msra.mxu0 %v900
  %1277 = vmatprep.subr.mxu0 0.0
  %1278 = vmatpush1.msra.mxu0 %v894
  %1279 = vmatprep.subr.mxu0 0.0
  %1280 = vmatpush2.msra.mxu0 0.0
  %1281 = vmatprep.subr.mxu0 0.0
  %1282 = vmatpush2.msra.mxu0 0.0
  %1283 = vmatprep.subr.mxu0 0.0
  %1284 = vmatpush2.msra.mxu0 0.0
  %1285 = vmatprep.subr.mxu0 0.0
  %1286 = vmatpush2.msra.mxu0 0.0
  %1287 = vmatprep.subr.mxu0 0.0
  %1288 = vmatpush2.msra.mxu0 0.0
  %1289 = vmatprep.subr.mxu0 0.0
  %1290 = vmatpush2.msra.mxu0 0.0
  %1291 = vmatprep.subr.mxu0 0.0
  %1292 = vmatpush2.msra.mxu0 0.0
  %1293 = vmatprep.subr.mxu0 0.0
  %1294 = vmatpush2.msra.mxu0 0.0
  %1295 = vmatprep.subr.mxu0 0.0
  %1296 = vmatpush2.msra.mxu0 0.0
  %1297 = vmatprep.subr.mxu0 0.0
  %1298 = vmatpush2.msra.mxu0 0.0
  %1299 = vmatprep.subr.mxu0 0.0
  %1300 = vmatpush2.msra.mxu0 0.0
  %1301 = vmatprep.subr.mxu0 0.0
  %1302 = vmatpush2.msra.mxu0 0.0
  %1303 = vmatprep.subr.mxu0 0.0
  %1304 = vmatpush2.msra.mxu0 0.0
  %1305 = vmatprep.subr.mxu0 0.0
  %1306 = vmatpush2.msra.mxu0 0.0
  %1307 = vmatprep.subr.mxu0 0.0
  %1308 = vmatpush2.msra.mxu0 0.0
  %1309 = vmatprep.subr.mxu0 0.0
  %1310 = vmatpush2.msra.mxu0 0.0
  %1311 = vmatprep.mubr.f32.mxu0 0.0
  %1312 = vmatmul.mubr.f32.gmra.mxu0 %v1224
  %v1313 = vpop.f32.mrf.mxu0
  %v1314 = vadd.f32 0.0, %v1313
  %v1315 = vpop.f32.mrf.mxu0
  %1316 = vmatprep.mubr.f32.mxu0 0.0
  %1317 = vmatmul.mubr.f32.gmra.mxu0 %v1227
  %v1318 = vpop.f32.mrf.mxu0
  %v1319 = vadd.f32 0.0, %v1318
  %v1320 = vpop.f32.mrf.mxu0
  %1321 = vmatprep.mubr.f32.mxu0 0.0
  %1322 = vmatmul.mubr.f32.gmra.mxu0 %v1230
  %v1323 = vpop.f32.mrf.mxu0
  %v1324 = vadd.f32 0.0, %v1323
  %v1325 = vpop.f32.mrf.mxu0
  %1326 = vmatprep.mubr.f32.mxu0 0.0
  %1327 = vmatmul.mubr.f32.gmra.mxu0 %v1233
  %v1328 = vpop.f32.mrf.mxu0
  %v1329 = vadd.f32 0.0, %v1328
  %v1330 = vpop.f32.mrf.mxu0
  %1331 = vmatprep.mubr.f32.mxu0 0.0
  %1332 = vmatmul.mubr.f32.gmra.mxu0 %v1236
  %v1333 = vpop.f32.mrf.mxu0
  %v1334 = vadd.f32 0.0, %v1333
  %v1335 = vpop.f32.mrf.mxu0
  %1336 = vmatprep.mubr.f32.mxu0 0.0
  %1337 = vmatmul.mubr.f32.gmra.mxu0 %v1239
  %v1338 = vpop.f32.mrf.mxu0
  %v1339 = vadd.f32 0.0, %v1338
  %v1340 = vpop.f32.mrf.mxu0
  %1341 = vmatprep.mubr.f32.mxu0 0.0
  %1342 = vmatmul.mubr.f32.gmra.mxu0 %v1242
  %v1343 = vpop.f32.mrf.mxu0
  %v1344 = vadd.f32 0.0, %v1343
  %v1345 = vpop.f32.mrf.mxu0
  %1346 = vmatprep.mubr.f32.mxu0 0.0
  %1347 = vmatmul.mubr.f32.gmra.mxu0 %v1245
  %v1348 = vpop.f32.mrf.mxu0
  %v1349 = vadd.f32 0.0, %v1348
  %v1350 = vpop.f32.mrf.mxu0
  %1351 = vdwg.mxu0
  %v1352 = vadd.f32 %v1314, %v1324
  %v1353 = vadd.f32 %v1319, %v1329
  %v1354 = vadd.f32 %v1352, %v1334
  %v1355 = vadd.f32 %v1353, %v1339
  %v1356 = vadd.f32 %v1354, %v1344
  %v1357 = vadd.f32 %v1355, %v1349
  %v1358 = vadd.f32 %v1356, %v896
  %v1359 = vadd.f32 %v1357, %v902
  %v1360 = vmax.f32 %v1358, 0.0
  %v1361 = vmax.f32 %v1359, 0.0
  %v1362 = vld [vmem:[%s6] sm:$0xff]
  %v1363 = vld [vmem:[%s6 + $0x8] sm:$0xff]
  %v1364 = vld [vmem:[%s6 + $0x10] sm:$0xff]
  %v1365 = vld [vmem:[%s6 + $0x18] sm:$0xff]
  %v1366 = vld [vmem:[%s6 + $0x20] sm:$0xff]
  %v1367 = vld [vmem:[%s6 + $0x28] sm:$0xff]
  %v1368 = vld [vmem:[%s6 + $0x30] sm:$0xff]
  %v1369 = vld [vmem:[%s6 + $0x38] sm:$0xff]
  %v1370 = vld [vmem:[%s6 + $0x40] sm:$0xff]
  %v1371 = vld [vmem:[%s6 + $0x48] sm:$0xff]
  %v1372 = vld [vmem:[%s6 + $0x50] sm:$0xff]
  %v1373 = vld [vmem:[%s6 + $0x58] sm:$0xff]
  %v1374 = vld [vmem:[%s6 + $0x60] sm:$0xff]
  %v1375 = vld [vmem:[%s6 + $0x68] sm:$0xff]
  %v1376 = vld [vmem:[%s6 + $0x70] sm:$0xff]
  %v1377 = vld [vmem:[%s6 + $0x78] sm:$0xff]
  %v1378 = vld [vmem:[%s7] sm:$0xf]
  %v1380 = vlaneseq
  %v1381 = vshrl.u32 %v1380, 7
  %v1382 = vsub.s32 0, %v1381
  %v1383 = vrot.slane %v1378, %v1382
  %v1384 = vlaneseq
  %v1385 = vshrl.u32 %v1384, 7
  %v1386 = vsub.s32 1, %v1385
  %v1387 = vrot.slane %v1378, %v1386
  %v1388 = vlaneseq
  %v1389 = vshrl.u32 %v1388, 7
  %v1390 = vsub.s32 2, %v1389
  %v1391 = vrot.slane %v1378, %v1390
  %v1392 = vlaneseq
  %v1393 = vshrl.u32 %v1392, 7
  %v1394 = vsub.s32 3, %v1393
  %v1395 = vrot.slane %v1378, %v1394
  %v1401 = vsel %vm308, %v1360, 0
  %v1404 = vsel %vm308, %v1361, 0
  %1406 = vmatprep.subr.mxu0 0.0
  %1407 = vmatpush1.msra.mxu0 0.0
  %1408 = vmatprep.subr.mxu0 0.0
  %1409 = vmatpush1.msra.mxu0 0.0
  %1410 = vmatprep.subr.mxu0 0.0
  %1411 = vmatpush1.msra.mxu0 0.0
  %1412 = vmatprep.subr.mxu0 0.0
  %1413 = vmatpush1.msra.mxu0 0.0
  %1414 = vmatprep.subr.mxu0 0.0
  %1415 = vmatpush1.msra.mxu0 0.0
  %1416 = vmatprep.subr.mxu0 0.0
  %1417 = vmatpush1.msra.mxu0 0.0
  %1418 = vmatprep.subr.mxu0 0.0
  %1419 = vmatpush1.msra.mxu0 0.0
  %1420 = vmatprep.subr.mxu0 0.0
  %1421 = vmatpush1.msra.mxu0 0.0
  %1422 = vmatprep.subr.mxu0 0.0
  %1423 = vmatpush1.msra.mxu0 0.0
  %1424 = vmatprep.subr.mxu0 0.0
  %1425 = vmatpush1.msra.mxu0 0.0
  %1426 = vmatprep.subr.mxu0 0.0
  %1427 = vmatpush1.msra.mxu0 0.0
  %1428 = vmatprep.subr.mxu0 0.0
  %1429 = vmatpush1.msra.mxu0 0.0
  %1430 = vmatprep.subr.mxu0 %v1375
  %1431 = vmatpush1.msra.mxu0 %v1374
  %1432 = vmatprep.subr.mxu0 %v1371
  %1433 = vmatpush1.msra.mxu0 %v1370
  %1434 = vmatprep.subr.mxu0 %v1367
  %1435 = vmatpush1.msra.mxu0 %v1366
  %1436 = vmatprep.subr.mxu0 %v1363
  %1437 = vmatpush1.msra.mxu0 %v1362
  %1438 = vmatprep.subr.mxu0 0.0
  %1439 = vmatpush2.msra.mxu0 0.0
  %1440 = vmatprep.subr.mxu0 0.0
  %1441 = vmatpush2.msra.mxu0 0.0
  %1442 = vmatprep.subr.mxu0 0.0
  %1443 = vmatpush2.msra.mxu0 0.0
  %1444 = vmatprep.subr.mxu0 0.0
  %1445 = vmatpush2.msra.mxu0 0.0
  %1446 = vmatprep.subr.mxu0 0.0
  %1447 = vmatpush2.msra.mxu0 0.0
  %1448 = vmatprep.subr.mxu0 0.0
  %1449 = vmatpush2.msra.mxu0 0.0
  %1450 = vmatprep.subr.mxu0 0.0
  %1451 = vmatpush2.msra.mxu0 0.0
  %1452 = vmatprep.subr.mxu0 0.0
  %1453 = vmatpush2.msra.mxu0 0.0
  %1454 = vmatprep.subr.mxu0 0.0
  %1455 = vmatpush2.msra.mxu0 0.0
  %1456 = vmatprep.subr.mxu0 0.0
  %1457 = vmatpush2.msra.mxu0 0.0
  %1458 = vmatprep.subr.mxu0 0.0
  %1459 = vmatpush2.msra.mxu0 0.0
  %1460 = vmatprep.subr.mxu0 0.0
  %1461 = vmatpush2.msra.mxu0 0.0
  %1462 = vmatprep.subr.mxu0 0.0
  %1463 = vmatpush2.msra.mxu0 0.0
  %1464 = vmatprep.subr.mxu0 0.0
  %1465 = vmatpush2.msra.mxu0 0.0
  %1466 = vmatprep.subr.mxu0 0.0
  %1467 = vmatpush2.msra.mxu0 0.0
  %1468 = vmatprep.subr.mxu0 0.0
  %1469 = vmatpush2.msra.mxu0 0.0
  %1470 = vmatprep.mubr.f32.mxu0 0.0
  %1471 = vmatmul.mubr.f32.gmra.mxu0 %v1401
  %v1472 = vpop.f32.mrf.mxu0
  %v1473 = vadd.f32 %v1383, %v1472
  %v1474 = vpop.f32.mrf.mxu0
  %v1475 = vadd.f32 %v1387, %v1474
  %1476 = vmatprep.mubr.f32.mxu0 0.0
  %1477 = vmatmul.mubr.f32.gmra.mxu0 %v1404
  %v1478 = vpop.f32.mrf.mxu0
  %v1479 = vadd.f32 %v1383, %v1478
  %v1480 = vpop.f32.mrf.mxu0
  %v1481 = vadd.f32 %v1387, %v1480
  %1482 = vdwg.mxu0
  %1483 = vmatprep.subr.mxu0 0.0
  %1484 = vmatpush1.msra.mxu0 0.0
  %1485 = vmatprep.subr.mxu0 0.0
  %1486 = vmatpush1.msra.mxu0 0.0
  %1487 = vmatprep.subr.mxu0 0.0
  %1488 = vmatpush1.msra.mxu0 0.0
  %1489 = vmatprep.subr.mxu0 0.0
  %1490 = vmatpush1.msra.mxu0 0.0
  %1491 = vmatprep.subr.mxu0 0.0
  %1492 = vmatpush1.msra.mxu0 0.0
  %1493 = vmatprep.subr.mxu0 0.0
  %1494 = vmatpush1.msra.mxu0 0.0
  %1495 = vmatprep.subr.mxu0 0.0
  %1496 = vmatpush1.msra.mxu0 0.0
  %1497 = vmatprep.subr.mxu0 0.0
  %1498 = vmatpush1.msra.mxu0 0.0
  %1499 = vmatprep.subr.mxu0 0.0
  %1500 = vmatpush1.msra.mxu0 0.0
  %1501 = vmatprep.subr.mxu0 0.0
  %1502 = vmatpush1.msra.mxu0 0.0
  %1503 = vmatprep.subr.mxu0 0.0
  %1504 = vmatpush1.msra.mxu0 0.0
  %1505 = vmatprep.subr.mxu0 0.0
  %1506 = vmatpush1.msra.mxu0 0.0
  %1507 = vmatprep.subr.mxu0 %v1377
  %1508 = vmatpush1.msra.mxu0 %v1376
  %1509 = vmatprep.subr.mxu0 %v1373
  %1510 = vmatpush1.msra.mxu0 %v1372
  %1511 = vmatprep.subr.mxu0 %v1369
  %1512 = vmatpush1.msra.mxu0 %v1368
  %1513 = vmatprep.subr.mxu0 %v1365
  %1514 = vmatpush1.msra.mxu0 %v1364
  %1515 = vmatprep.subr.mxu0 0.0
  %1516 = vmatpush2.msra.mxu0 0.0
  %1517 = vmatprep.subr.mxu0 0.0
  %1518 = vmatpush2.msra.mxu0 0.0
  %1519 = vmatprep.subr.mxu0 0.0
  %1520 = vmatpush2.msra.mxu0 0.0
  %1521 = vmatprep.subr.mxu0 0.0
  %1522 = vmatpush2.msra.mxu0 0.0
  %1523 = vmatprep.subr.mxu0 0.0
  %1524 = vmatpush2.msra.mxu0 0.0
  %1525 = vmatprep.subr.mxu0 0.0
  %1526 = vmatpush2.msra.mxu0 0.0
  %1527 = vmatprep.subr.mxu0 0.0
  %1528 = vmatpush2.msra.mxu0 0.0
  %1529 = vmatprep.subr.mxu0 0.0
  %1530 = vmatpush2.msra.mxu0 0.0
  %1531 = vmatprep.subr.mxu0 0.0
  %1532 = vmatpush2.msra.mxu0 0.0
  %1533 = vmatprep.subr.mxu0 0.0
  %1534 = vmatpush2.msra.mxu0 0.0
  %1535 = vmatprep.subr.mxu0 0.0
  %1536 = vmatpush2.msra.mxu0 0.0
  %1537 = vmatprep.subr.mxu0 0.0
  %1538 = vmatpush2.msra.mxu0 0.0
  %1539 = vmatprep.subr.mxu0 0.0
  %1540 = vmatpush2.msra.mxu0 0.0
  %1541 = vmatprep.subr.mxu0 0.0
  %1542 = vmatpush2.msra.mxu0 0.0
  %1543 = vmatprep.subr.mxu0 0.0
  %1544 = vmatpush2.msra.mxu0 0.0
  %1545 = vmatprep.subr.mxu0 0.0
  %1546 = vmatpush2.msra.mxu0 0.0
  %1547 = vmatprep.mubr.f32.mxu0 0.0
  %1548 = vmatmul.mubr.f32.gmra.mxu0 %v1401
  %v1549 = vpop.f32.mrf.mxu0
  %v1550 = vadd.f32 %v1391, %v1549
  %v1551 = vpop.f32.mrf.mxu0
  %v1552 = vadd.f32 %v1395, %v1551
  %1553 = vmatprep.mubr.f32.mxu0 0.0
  %1554 = vmatmul.mubr.f32.gmra.mxu0 %v1404
  %v1555 = vpop.f32.mrf.mxu0
  %v1556 = vadd.f32 %v1391, %v1555
  %v1557 = vpop.f32.mrf.mxu0
  %v1558 = vadd.f32 %v1395, %v1557
  %1559 = vdwg.mxu0
  %1562 = vrot.lane.b32.xlu0 %v1473, 96
  %v1563 = vpop.permute.xlu0 %1562
  %1564 = vrot.lane.b32.xlu0 %v1479, 96
  %v1565 = vpop.permute.xlu0 %1564
  %1568 = vrot.lane.b32.xlu0 %v1473, 64
  %v1569 = vpop.permute.xlu0 %1568
  %1570 = vrot.lane.b32.xlu0 %v1479, 64
  %v1571 = vpop.permute.xlu0 %1570
  %1574 = vrot.lane.b32.xlu0 %v1473, 32
  %v1575 = vpop.permute.xlu0 %1574
  %1576 = vrot.lane.b32.xlu0 %v1479, 32
  %v1577 = vpop.permute.xlu0 %1576
  %v1580 = vmul.f32 %v1473, 0.17677669
  %v1581 = vmul.f32 %v1479, 0.17677669
  %v1582 = vmul.f32 %v1563, 0.17677669
  %v1583 = vmul.f32 %v1565, 0.17677669
  %v1584 = vmul.f32 %v1569, 0.17677669
  %v1585 = vmul.f32 %v1571, 0.17677669
  %v1586 = vmul.f32 %v1575, 0.17677669
  %v1587 = vmul.f32 %v1577, 0.17677669
  %1590 = vrot.lane.b32.xlu0 %v1475, 96
  %v1591 = vpop.permute.xlu0 %1590
  %1592 = vrot.lane.b32.xlu0 %v1481, 96
  %v1593 = vpop.permute.xlu0 %1592
  %1594 = vrot.lane.b32.xlu0 %v1475, 64
  %v1595 = vpop.permute.xlu0 %1594
  %1596 = vrot.lane.b32.xlu0 %v1481, 64
  %v1597 = vpop.permute.xlu0 %1596
  %1598 = vrot.lane.b32.xlu0 %v1475, 32
  %v1599 = vpop.permute.xlu0 %1598
  %1600 = vrot.lane.b32.xlu0 %v1481, 32
  %v1601 = vpop.permute.xlu0 %1600
  %1604 = vrot.lane.b32.xlu0 %v1550, 96
  %v1605 = vpop.permute.xlu0 %1604
  %1606 = vrot.lane.b32.xlu0 %v1556, 96
  %v1607 = vpop.permute.xlu0 %1606
  %1610 = vrot.lane.b32.xlu0 %v1550, 64
  %v1611 = vpop.permute.xlu0 %1610
  %1612 = vrot.lane.b32.xlu0 %v1556, 64
  %v1613 = vpop.permute.xlu0 %1612
  %1616 = vrot.lane.b32.xlu0 %v1550, 32
  %v1617 = vpop.permute.xlu0 %1616
  %1618 = vrot.lane.b32.xlu0 %v1556, 32
  %v1619 = vpop.permute.xlu0 %1618
  %v1623 = vsel %vm308, %v1580, 0
  %v1626 = vsel %vm308, %v1581, 0
  %v1629 = vsel %vm308, %v1582, 0
  %v1632 = vsel %vm308, %v1583, 0
  %v1635 = vsel %vm308, %v1584, 0
  %v1638 = vsel %vm308, %v1585, 0
  %v1641 = vsel %vm308, %v1586, 0
  %v1644 = vsel %vm308, %v1587, 0
  %v1646 = vsel %vm308, %v1475, 0
  %v1648 = vsel %vm308, %v1481, 0
  %v1650 = vsel %vm308, %v1591, 0
  %v1652 = vsel %vm308, %v1593, 0
  %v1654 = vsel %vm308, %v1595, 0
  %v1656 = vsel %vm308, %v1597, 0
  %v1658 = vsel %vm308, %v1599, 0
  %v1660 = vsel %vm308, %v1601, 0
  %1662 = vmatprep.subr.mxu0 0.0
  %1663 = vmatpush1.xpose.msra.mxu0 0.0
  %1664 = vmatprep.subr.mxu0 0.0
  %1665 = vmatpush1.xpose.msra.mxu0 0.0
  %1666 = vmatprep.subr.mxu0 0.0
  %1667 = vmatpush1.xpose.msra.mxu0 0.0
  %1668 = vmatprep.subr.mxu0 0.0
  %1669 = vmatpush1.xpose.msra.mxu0 0.0
  %1670 = vmatprep.subr.mxu0 0.0
  %1671 = vmatpush1.xpose.msra.mxu0 0.0
  %1672 = vmatprep.subr.mxu0 0.0
  %1673 = vmatpush1.xpose.msra.mxu0 0.0
  %1674 = vmatprep.subr.mxu0 0.0
  %1675 = vmatpush1.xpose.msra.mxu0 0.0
  %1676 = vmatprep.subr.mxu0 0.0
  %1677 = vmatpush1.xpose.msra.mxu0 0.0
  %1678 = vmatprep.subr.mxu0 0.0
  %1679 = vmatpush1.xpose.msra.mxu0 %v1660
  %1680 = vmatprep.subr.mxu0 0.0
  %1681 = vmatpush1.xpose.msra.mxu0 %v1658
  %1682 = vmatprep.subr.mxu0 0.0
  %1683 = vmatpush1.xpose.msra.mxu0 %v1656
  %1684 = vmatprep.subr.mxu0 0.0
  %1685 = vmatpush1.xpose.msra.mxu0 %v1654
  %1686 = vmatprep.subr.mxu0 0.0
  %1687 = vmatpush1.xpose.msra.mxu0 %v1652
  %1688 = vmatprep.subr.mxu0 0.0
  %1689 = vmatpush1.xpose.msra.mxu0 %v1650
  %1690 = vmatprep.subr.mxu0 0.0
  %1691 = vmatpush1.xpose.msra.mxu0 %v1648
  %1692 = vmatprep.subr.mxu0 0.0
  %1693 = vmatpush1.xpose.msra.mxu0 %v1646
  %1694 = vmatprep.subr.mxu0 0.0
  %1695 = vmatpush2.xpose.msra.mxu0 0.0
  %1696 = vmatprep.subr.mxu0 0.0
  %1697 = vmatpush2.xpose.msra.mxu0 0.0
  %1698 = vmatprep.subr.mxu0 0.0
  %1699 = vmatpush2.xpose.msra.mxu0 0.0
  %1700 = vmatprep.subr.mxu0 0.0
  %1701 = vmatpush2.xpose.msra.mxu0 0.0
  %1702 = vmatprep.subr.mxu0 0.0
  %1703 = vmatpush2.xpose.msra.mxu0 0.0
  %1704 = vmatprep.subr.mxu0 0.0
  %1705 = vmatpush2.xpose.msra.mxu0 0.0
  %1706 = vmatprep.subr.mxu0 0.0
  %1707 = vmatpush2.xpose.msra.mxu0 0.0
  %1708 = vmatprep.subr.mxu0 0.0
  %1709 = vmatpush2.xpose.msra.mxu0 0.0
  %1710 = vmatprep.subr.mxu0 0.0
  %1711 = vmatpush2.xpose.msra.mxu0 0.0
  %1712 = vmatprep.subr.mxu0 0.0
  %1713 = vmatpush2.xpose.msra.mxu0 0.0
  %1714 = vmatprep.subr.mxu0 0.0
  %1715 = vmatpush2.xpose.msra.mxu0 0.0
  %1716 = vmatprep.subr.mxu0 0.0
  %1717 = vmatpush2.xpose.msra.mxu0 0.0
  %1718 = vmatprep.subr.mxu0 0.0
  %1719 = vmatpush2.xpose.msra.mxu0 0.0
  %1720 = vmatprep.subr.mxu0 0.0
  %1721 = vmatpush2.xpose.msra.mxu0 0.0
  %1722 = vmatprep.subr.mxu0 0.0
  %1723 = vmatpush2.xpose.msra.mxu0 0.0
  %1724 = vmatprep.subr.mxu0 0.0
  %1725 = vmatpush2.xpose.msra.mxu0 0.0
  %1726 = vmatprep.mubr.f32.mxu0 0.0
  %1727 = vmatmul.mubr.f32.gmra.mxu0 %v1623
  %v1728 = vpop.f32.mrf.mxu0
  %v1729 = vadd.f32 %v49, %v1728
  %v1730 = vpop.f32.mrf.mxu0
  %1731 = vmatprep.mubr.f32.mxu0 0.0
  %1732 = vmatmul.mubr.f32.gmra.mxu0 %v1626
  %v1733 = vpop.f32.mrf.mxu0
  %v1734 = vadd.f32 %v50, %v1733
  %v1735 = vpop.f32.mrf.mxu0
  %1736 = vmatprep.mubr.f32.mxu0 0.0
  %1737 = vmatmul.mubr.f32.gmra.mxu0 %v1629
  %v1738 = vpop.f32.mrf.mxu0
  %v1739 = vadd.f32 %v51, %v1738
  %v1740 = vpop.f32.mrf.mxu0
  %1741 = vmatprep.mubr.f32.mxu0 0.0
  %1742 = vmatmul.mubr.f32.gmra.mxu0 %v1632
  %v1743 = vpop.f32.mrf.mxu0
  %v1744 = vadd.f32 %v52, %v1743
  %v1745 = vpop.f32.mrf.mxu0
  %1746 = vmatprep.mubr.f32.mxu0 0.0
  %1747 = vmatmul.mubr.f32.gmra.mxu0 %v1635
  %v1748 = vpop.f32.mrf.mxu0
  %v1749 = vadd.f32 %v53, %v1748
  %v1750 = vpop.f32.mrf.mxu0
  %1751 = vmatprep.mubr.f32.mxu0 0.0
  %1752 = vmatmul.mubr.f32.gmra.mxu0 %v1638
  %v1753 = vpop.f32.mrf.mxu0
  %v1754 = vadd.f32 %v54, %v1753
  %v1755 = vpop.f32.mrf.mxu0
  %1756 = vmatprep.mubr.f32.mxu0 0.0
  %1757 = vmatmul.mubr.f32.gmra.mxu0 %v1641
  %v1758 = vpop.f32.mrf.mxu0
  %v1759 = vadd.f32 %v55, %v1758
  %v1760 = vpop.f32.mrf.mxu0
  %1761 = vmatprep.mubr.f32.mxu0 0.0
  %1762 = vmatmul.mubr.f32.gmra.mxu0 %v1644
  %v1763 = vpop.f32.mrf.mxu0
  %v1764 = vadd.f32 %v56, %v1763
  %v1765 = vpop.f32.mrf.mxu0
  %1766 = vdwg.mxu0
  %v1767 = vsel %vm454, %v1729, -inf
  %1768 = vmax.xlane.f32.xlu0 %v1767
  %v1769 = vpop.xlane.xlu0 %1768
  %v1770 = vsel %vm454, %v1734, -inf
  %1771 = vmax.xlane.f32.xlu0 %v1770
  %v1772 = vpop.xlane.xlu0 %1771
  %v1773 = vsel %vm454, %v1739, -inf
  %1774 = vmax.xlane.f32.xlu0 %v1773
  %v1775 = vpop.xlane.xlu0 %1774
  %v1776 = vsel %vm454, %v1744, -inf
  %1777 = vmax.xlane.f32.xlu0 %v1776
  %v1778 = vpop.xlane.xlu0 %1777
  %v1779 = vsel %vm454, %v1749, -inf
  %1780 = vmax.xlane.f32.xlu0 %v1779
  %v1781 = vpop.xlane.xlu0 %1780
  %v1782 = vsel %vm454, %v1754, -inf
  %1783 = vmax.xlane.f32.xlu0 %v1782
  %v1784 = vpop.xlane.xlu0 %1783
  %v1785 = vsel %vm454, %v1759, -inf
  %1786 = vmax.xlane.f32.xlu0 %v1785
  %v1787 = vpop.xlane.xlu0 %1786
  %v1788 = vsel %vm454, %v1764, -inf
  %1789 = vmax.xlane.f32.xlu0 %v1788
  %v1790 = vpop.xlane.xlu0 %1789
  %v1791 = vsub.f32 %v1729, %v1769
  %v1792 = vsub.f32 %v1734, %v1772
  %v1793 = vsub.f32 %v1739, %v1775
  %v1794 = vsub.f32 %v1744, %v1778
  %v1795 = vsub.f32 %v1749, %v1781
  %v1796 = vsub.f32 %v1754, %v1784
  %v1797 = vsub.f32 %v1759, %v1787
  %v1798 = vsub.f32 %v1764, %v1790
  %v1799 = vmul.f32 %v1791, 1.442695
  %v1800 = vpow.pop %v1799
  %v1801 = vmul.f32 %v1792, 1.442695
  %v1802 = vpow.pop %v1801
  %v1803 = vmul.f32 %v1793, 1.442695
  %v1804 = vpow.pop %v1803
  %v1805 = vmul.f32 %v1794, 1.442695
  %v1806 = vpow.pop %v1805
  %v1807 = vmul.f32 %v1795, 1.442695
  %v1808 = vpow.pop %v1807
  %v1809 = vmul.f32 %v1796, 1.442695
  %v1810 = vpow.pop %v1809
  %v1811 = vmul.f32 %v1797, 1.442695
  %v1812 = vpow.pop %v1811
  %v1813 = vmul.f32 %v1798, 1.442695
  %v1814 = vpow.pop %v1813
  %v1815 = vsel %vm454, %v1800, 0.0
  %1816 = vadd.xlane.f32.xlu0 %v1815
  %v1817 = vpop.xlane.xlu0 %1816
  %v1818 = vsel %vm454, %v1802, 0.0
  %1819 = vadd.xlane.f32.xlu0 %v1818
  %v1820 = vpop.xlane.xlu0 %1819
  %v1821 = vsel %vm454, %v1804, 0.0
  %1822 = vadd.xlane.f32.xlu0 %v1821
  %v1823 = vpop.xlane.xlu0 %1822
  %v1824 = vsel %vm454, %v1806, 0.0
  %1825 = vadd.xlane.f32.xlu0 %v1824
  %v1826 = vpop.xlane.xlu0 %1825
  %v1827 = vsel %vm454, %v1808, 0.0
  %1828 = vadd.xlane.f32.xlu0 %v1827
  %v1829 = vpop.xlane.xlu0 %1828
  %v1830 = vsel %vm454, %v1810, 0.0
  %1831 = vadd.xlane.f32.xlu0 %v1830
  %v1832 = vpop.xlane.xlu0 %1831
  %v1833 = vsel %vm454, %v1812, 0.0
  %1834 = vadd.xlane.f32.xlu0 %v1833
  %v1835 = vpop.xlane.xlu0 %1834
  %v1836 = vsel %vm454, %v1814, 0.0
  %1837 = vadd.xlane.f32.xlu0 %v1836
  %v1838 = vpop.xlane.xlu0 %1837
  %vm1839 = vcmp.gt.f32.partialorder %v1769, -1e+29
  %vm1840 = vcmp.gt.f32.partialorder %v1772, -1e+29
  %vm1841 = vcmp.gt.f32.partialorder %v1775, -1e+29
  %vm1842 = vcmp.gt.f32.partialorder %v1778, -1e+29
  %vm1843 = vcmp.gt.f32.partialorder %v1781, -1e+29
  %vm1844 = vcmp.gt.f32.partialorder %v1784, -1e+29
  %vm1845 = vcmp.gt.f32.partialorder %v1787, -1e+29
  %vm1846 = vcmp.gt.f32.partialorder %v1790, -1e+29
  %v1847 = vrcp.pop %v1817
  %v1848 = vrcp.pop %v1820
  %v1849 = vrcp.pop %v1823
  %v1850 = vrcp.pop %v1826
  %v1851 = vrcp.pop %v1829
  %v1852 = vrcp.pop %v1832
  %v1853 = vrcp.pop %v1835
  %v1854 = vrcp.pop %v1838
  %v1855 = vmul.f32 %v1847, 0.25
  %v1856 = vmul.f32 %v1848, 0.25
  %v1857 = vmul.f32 %v1849, 0.25
  %v1858 = vmul.f32 %v1850, 0.25
  %v1859 = vmul.f32 %v1851, 0.25
  %v1860 = vmul.f32 %v1852, 0.25
  %v1861 = vmul.f32 %v1853, 0.25
  %v1862 = vmul.f32 %v1854, 0.25
  %v1863 = vsel %vm1839, %v1855, 0.0
  %v1864 = vsel %vm1840, %v1856, 0.0
  %v1865 = vsel %vm1841, %v1857, 0.0
  %v1866 = vsel %vm1842, %v1858, 0.0
  %v1867 = vsel %vm1843, %v1859, 0.0
  %v1868 = vsel %vm1844, %v1860, 0.0
  %v1869 = vsel %vm1845, %v1861, 0.0
  %v1870 = vsel %vm1846, %v1862, 0.0
  %v1871 = vmul.f32 %v1800, %v1863
  %v1872 = vmul.f32 %v1802, %v1864
  %v1873 = vmul.f32 %v1804, %v1865
  %v1874 = vmul.f32 %v1806, %v1866
  %v1875 = vmul.f32 %v1808, %v1867
  %v1876 = vmul.f32 %v1810, %v1868
  %v1877 = vmul.f32 %v1812, %v1869
  %v1878 = vmul.f32 %v1814, %v1870
  %v1880 = vsel %vm454, %v1871, 0
  %v1883 = vsel %vm454, %v1872, 0
  %v1886 = vsel %vm454, %v1873, 0
  %v1889 = vsel %vm454, %v1874, 0
  %v1892 = vsel %vm454, %v1875, 0
  %v1895 = vsel %vm454, %v1876, 0
  %v1898 = vsel %vm454, %v1877, 0
  %v1901 = vsel %vm454, %v1878, 0
  %1903 = vmatprep.subr.mxu0 0.0
  %1904 = vmatpush1.msra.mxu0 0.0
  %1905 = vmatprep.subr.mxu0 0.0
  %1906 = vmatpush1.msra.mxu0 0.0
  %1907 = vmatprep.subr.mxu0 0.0
  %1908 = vmatpush1.msra.mxu0 0.0
  %1909 = vmatprep.subr.mxu0 0.0
  %1910 = vmatpush1.msra.mxu0 0.0
  %1911 = vmatprep.subr.mxu0 0.0
  %1912 = vmatpush1.msra.mxu0 0.0
  %1913 = vmatprep.subr.mxu0 0.0
  %1914 = vmatpush1.msra.mxu0 0.0
  %1915 = vmatprep.subr.mxu0 0.0
  %1916 = vmatpush1.msra.mxu0 0.0
  %1917 = vmatprep.subr.mxu0 0.0
  %1918 = vmatpush1.msra.mxu0 0.0
  %1919 = vmatprep.subr.mxu0 0.0
  %1920 = vmatpush1.msra.mxu0 %v1619
  %1921 = vmatprep.subr.mxu0 0.0
  %1922 = vmatpush1.msra.mxu0 %v1617
  %1923 = vmatprep.subr.mxu0 0.0
  %1924 = vmatpush1.msra.mxu0 %v1613
  %1925 = vmatprep.subr.mxu0 0.0
  %1926 = vmatpush1.msra.mxu0 %v1611
  %1927 = vmatprep.subr.mxu0 0.0
  %1928 = vmatpush1.msra.mxu0 %v1607
  %1929 = vmatprep.subr.mxu0 0.0
  %1930 = vmatpush1.msra.mxu0 %v1605
  %1931 = vmatprep.subr.mxu0 0.0
  %1932 = vmatpush1.msra.mxu0 %v1556
  %1933 = vmatprep.subr.mxu0 0.0
  %1934 = vmatpush1.msra.mxu0 %v1550
  %1935 = vmatprep.subr.mxu0 0.0
  %1936 = vmatpush2.msra.mxu0 0.0
  %1937 = vmatprep.subr.mxu0 0.0
  %1938 = vmatpush2.msra.mxu0 0.0
  %1939 = vmatprep.subr.mxu0 0.0
  %1940 = vmatpush2.msra.mxu0 0.0
  %1941 = vmatprep.subr.mxu0 0.0
  %1942 = vmatpush2.msra.mxu0 0.0
  %1943 = vmatprep.subr.mxu0 0.0
  %1944 = vmatpush2.msra.mxu0 0.0
  %1945 = vmatprep.subr.mxu0 0.0
  %1946 = vmatpush2.msra.mxu0 0.0
  %1947 = vmatprep.subr.mxu0 0.0
  %1948 = vmatpush2.msra.mxu0 0.0
  %1949 = vmatprep.subr.mxu0 0.0
  %1950 = vmatpush2.msra.mxu0 0.0
  %1951 = vmatprep.subr.mxu0 0.0
  %1952 = vmatpush2.msra.mxu0 0.0
  %1953 = vmatprep.subr.mxu0 0.0
  %1954 = vmatpush2.msra.mxu0 0.0
  %1955 = vmatprep.subr.mxu0 0.0
  %1956 = vmatpush2.msra.mxu0 0.0
  %1957 = vmatprep.subr.mxu0 0.0
  %1958 = vmatpush2.msra.mxu0 0.0
  %1959 = vmatprep.subr.mxu0 0.0
  %1960 = vmatpush2.msra.mxu0 0.0
  %1961 = vmatprep.subr.mxu0 0.0
  %1962 = vmatpush2.msra.mxu0 0.0
  %1963 = vmatprep.subr.mxu0 0.0
  %1964 = vmatpush2.msra.mxu0 0.0
  %1965 = vmatprep.subr.mxu0 0.0
  %1966 = vmatpush2.msra.mxu0 0.0
  %1967 = vmatprep.mubr.f32.mxu0 0.0
  %1968 = vmatmul.mubr.f32.gmra.mxu0 %v1880
  %v1969 = vpop.f32.mrf.mxu0
  %v1970 = vadd.f32 0.0, %v1969
  %v1971 = vpop.f32.mrf.mxu0
  %1972 = vmatprep.mubr.f32.mxu0 0.0
  %1973 = vmatmul.mubr.f32.gmra.mxu0 %v1883
  %v1974 = vpop.f32.mrf.mxu0
  %v1975 = vadd.f32 0.0, %v1974
  %v1976 = vpop.f32.mrf.mxu0
  %1977 = vmatprep.mubr.f32.mxu0 0.0
  %1978 = vmatmul.mubr.f32.gmra.mxu0 %v1886
  %v1979 = vpop.f32.mrf.mxu0
  %v1980 = vadd.f32 0.0, %v1979
  %v1981 = vpop.f32.mrf.mxu0
  %1982 = vmatprep.mubr.f32.mxu0 0.0
  %1983 = vmatmul.mubr.f32.gmra.mxu0 %v1889
  %v1984 = vpop.f32.mrf.mxu0
  %v1985 = vadd.f32 0.0, %v1984
  %v1986 = vpop.f32.mrf.mxu0
  %1987 = vmatprep.mubr.f32.mxu0 0.0
  %1988 = vmatmul.mubr.f32.gmra.mxu0 %v1892
  %v1989 = vpop.f32.mrf.mxu0
  %v1990 = vadd.f32 0.0, %v1989
  %v1991 = vpop.f32.mrf.mxu0
  %1992 = vmatprep.mubr.f32.mxu0 0.0
  %1993 = vmatmul.mubr.f32.gmra.mxu0 %v1895
  %v1994 = vpop.f32.mrf.mxu0
  %v1995 = vadd.f32 0.0, %v1994
  %v1996 = vpop.f32.mrf.mxu0
  %1997 = vmatprep.mubr.f32.mxu0 0.0
  %1998 = vmatmul.mubr.f32.gmra.mxu0 %v1898
  %v1999 = vpop.f32.mrf.mxu0
  %v2000 = vadd.f32 0.0, %v1999
  %v2001 = vpop.f32.mrf.mxu0
  %2002 = vmatprep.mubr.f32.mxu0 0.0
  %2003 = vmatmul.mubr.f32.gmra.mxu0 %v1901
  %v2004 = vpop.f32.mrf.mxu0
  %v2005 = vadd.f32 0.0, %v2004
  %v2006 = vpop.f32.mrf.mxu0
  %2007 = vdwg.mxu0
  %v2008 = vadd.f32 %v1970, %v1980
  %v2009 = vadd.f32 %v1975, %v1985
  %v2010 = vadd.f32 %v2008, %v1990
  %v2011 = vadd.f32 %v2009, %v1995
  %v2012 = vadd.f32 %v2010, %v2000
  %v2013 = vadd.f32 %v2011, %v2005
  %v2014 = vadd.f32 %v2012, %v1552
  %v2015 = vadd.f32 %v2013, %v1558
  %v2016 = vmax.f32 %v2014, 0.0
  %v2017 = vmax.f32 %v2015, 0.0
  %vm2018 = vcmask 39936
  %v2019 = vsel %vm2018, %v2016, -inf
  %2020 = vmax.xlane.f32.xlu0 %v2019
  %v2021 = vpop.xlane.xlu0 %2020
  %v2022 = vsel %vm2018, %v2017, -inf
  %2023 = vmax.xlane.f32.xlu0 %v2022
  %v2024 = vpop.xlane.xlu0 %2023
  %v2025 = vsub.f32 %v2016, %v2021
  %v2026 = vsub.f32 %v2017, %v2024
  %v2027 = vmul.f32 %v2025, 1.442695
  %v2028 = vpow.pop %v2027
  %v2029 = vmul.f32 %v2026, 1.442695
  %v2030 = vpow.pop %v2029
  %v2031 = vsel %vm2018, %v2028, 0.0
  %2032 = vadd.xlane.f32.xlu0 %v2031
  %v2033 = vpop.xlane.xlu0 %2032
  %v2034 = vsel %vm2018, %v2030, 0.0
  %2035 = vadd.xlane.f32.xlu0 %v2034
  %v2036 = vpop.xlane.xlu0 %2035
  %v2037 = vrcp.pop %v2033
  %v2038 = vmul.f32 %v2028, %v2037
  %v2039 = vrcp.pop %v2036
  %v2040 = vmul.f32 %v2030, %v2039
  %2041 = vst.msk [vmem:[%s14] sm:$0xff] %vm2018, %v2038
  %2042 = vst.msk [vmem:[%s14 + $0x8] sm:$0xff] %vm2018, %v2040
  %v2043 = vsel %vm2018, %v2038, %v2016
  %v2044 = vsel %vm2018, %v2040, %v2017
  %v2045 = vld [vmem:[%s8] sm:$0xff]
  %v2046 = vld [vmem:[%s8 + $0x8] sm:$0xff]
  %v2047 = vld [vmem:[%s8 + $0x10] sm:$0xff]
  %v2048 = vld [vmem:[%s8 + $0x18] sm:$0xff]
  %v2049 = vld [vmem:[%s8 + $0x20] sm:$0xff]
  %v2050 = vld [vmem:[%s8 + $0x28] sm:$0xff]
  %v2051 = vld [vmem:[%s8 + $0x30] sm:$0xff]
  %v2052 = vld [vmem:[%s8 + $0x38] sm:$0xff]
  %v2053 = vld [vmem:[%s8 + $0x40] sm:$0xff]
  %v2054 = vld [vmem:[%s8 + $0x48] sm:$0xff]
  %v2055 = vld [vmem:[%s8 + $0x50] sm:$0xff]
  %v2056 = vld [vmem:[%s8 + $0x58] sm:$0xff]
  %v2057 = vld [vmem:[%s8 + $0x60] sm:$0xff]
  %v2058 = vld [vmem:[%s8 + $0x68] sm:$0xff]
  %v2059 = vld [vmem:[%s8 + $0x70] sm:$0xff]
  %v2060 = vld [vmem:[%s8 + $0x78] sm:$0xff]
  %v2061 = vld [vmem:[%s9] sm:$0xf]
  %v2063 = vlaneseq
  %v2064 = vshrl.u32 %v2063, 7
  %v2065 = vsub.s32 0, %v2064
  %v2066 = vrot.slane %v2061, %v2065
  %v2067 = vlaneseq
  %v2068 = vshrl.u32 %v2067, 7
  %v2069 = vsub.s32 1, %v2068
  %v2070 = vrot.slane %v2061, %v2069
  %v2071 = vlaneseq
  %v2072 = vshrl.u32 %v2071, 7
  %v2073 = vsub.s32 2, %v2072
  %v2074 = vrot.slane %v2061, %v2073
  %v2075 = vlaneseq
  %v2076 = vshrl.u32 %v2075, 7
  %v2077 = vsub.s32 3, %v2076
  %v2078 = vrot.slane %v2061, %v2077
  %v2084 = vsel %vm308, %v2043, 0
  %v2087 = vsel %vm308, %v2044, 0
  %2089 = vmatprep.subr.mxu0 0.0
  %2090 = vmatpush1.msra.mxu0 0.0
  %2091 = vmatprep.subr.mxu0 0.0
  %2092 = vmatpush1.msra.mxu0 0.0
  %2093 = vmatprep.subr.mxu0 0.0
  %2094 = vmatpush1.msra.mxu0 0.0
  %2095 = vmatprep.subr.mxu0 0.0
  %2096 = vmatpush1.msra.mxu0 0.0
  %2097 = vmatprep.subr.mxu0 0.0
  %2098 = vmatpush1.msra.mxu0 0.0
  %2099 = vmatprep.subr.mxu0 0.0
  %2100 = vmatpush1.msra.mxu0 0.0
  %2101 = vmatprep.subr.mxu0 0.0
  %2102 = vmatpush1.msra.mxu0 0.0
  %2103 = vmatprep.subr.mxu0 0.0
  %2104 = vmatpush1.msra.mxu0 0.0
  %2105 = vmatprep.subr.mxu0 0.0
  %2106 = vmatpush1.msra.mxu0 0.0
  %2107 = vmatprep.subr.mxu0 0.0
  %2108 = vmatpush1.msra.mxu0 0.0
  %2109 = vmatprep.subr.mxu0 0.0
  %2110 = vmatpush1.msra.mxu0 0.0
  %2111 = vmatprep.subr.mxu0 0.0
  %2112 = vmatpush1.msra.mxu0 0.0
  %2113 = vmatprep.subr.mxu0 %v2058
  %2114 = vmatpush1.msra.mxu0 %v2057
  %2115 = vmatprep.subr.mxu0 %v2054
  %2116 = vmatpush1.msra.mxu0 %v2053
  %2117 = vmatprep.subr.mxu0 %v2050
  %2118 = vmatpush1.msra.mxu0 %v2049
  %2119 = vmatprep.subr.mxu0 %v2046
  %2120 = vmatpush1.msra.mxu0 %v2045
  %2121 = vmatprep.subr.mxu0 0.0
  %2122 = vmatpush2.msra.mxu0 0.0
  %2123 = vmatprep.subr.mxu0 0.0
  %2124 = vmatpush2.msra.mxu0 0.0
  %2125 = vmatprep.subr.mxu0 0.0
  %2126 = vmatpush2.msra.mxu0 0.0
  %2127 = vmatprep.subr.mxu0 0.0
  %2128 = vmatpush2.msra.mxu0 0.0
  %2129 = vmatprep.subr.mxu0 0.0
  %2130 = vmatpush2.msra.mxu0 0.0
  %2131 = vmatprep.subr.mxu0 0.0
  %2132 = vmatpush2.msra.mxu0 0.0
  %2133 = vmatprep.subr.mxu0 0.0
  %2134 = vmatpush2.msra.mxu0 0.0
  %2135 = vmatprep.subr.mxu0 0.0
  %2136 = vmatpush2.msra.mxu0 0.0
  %2137 = vmatprep.subr.mxu0 0.0
  %2138 = vmatpush2.msra.mxu0 0.0
  %2139 = vmatprep.subr.mxu0 0.0
  %2140 = vmatpush2.msra.mxu0 0.0
  %2141 = vmatprep.subr.mxu0 0.0
  %2142 = vmatpush2.msra.mxu0 0.0
  %2143 = vmatprep.subr.mxu0 0.0
  %2144 = vmatpush2.msra.mxu0 0.0
  %2145 = vmatprep.subr.mxu0 0.0
  %2146 = vmatpush2.msra.mxu0 0.0
  %2147 = vmatprep.subr.mxu0 0.0
  %2148 = vmatpush2.msra.mxu0 0.0
  %2149 = vmatprep.subr.mxu0 0.0
  %2150 = vmatpush2.msra.mxu0 0.0
  %2151 = vmatprep.subr.mxu0 0.0
  %2152 = vmatpush2.msra.mxu0 0.0
  %2153 = vmatprep.mubr.f32.mxu0 0.0
  %2154 = vmatmul.mubr.f32.gmra.mxu0 %v2084
  %v2155 = vpop.f32.mrf.mxu0
  %v2156 = vadd.f32 %v2066, %v2155
  %v2157 = vpop.f32.mrf.mxu0
  %v2158 = vadd.f32 %v2070, %v2157
  %2159 = vmatprep.mubr.f32.mxu0 0.0
  %2160 = vmatmul.mubr.f32.gmra.mxu0 %v2087
  %v2161 = vpop.f32.mrf.mxu0
  %v2162 = vadd.f32 %v2066, %v2161
  %v2163 = vpop.f32.mrf.mxu0
  %v2164 = vadd.f32 %v2070, %v2163
  %2165 = vdwg.mxu0
  %2166 = vmatprep.subr.mxu0 0.0
  %2167 = vmatpush1.msra.mxu0 0.0
  %2168 = vmatprep.subr.mxu0 0.0
  %2169 = vmatpush1.msra.mxu0 0.0
  %2170 = vmatprep.subr.mxu0 0.0
  %2171 = vmatpush1.msra.mxu0 0.0
  %2172 = vmatprep.subr.mxu0 0.0
  %2173 = vmatpush1.msra.mxu0 0.0
  %2174 = vmatprep.subr.mxu0 0.0
  %2175 = vmatpush1.msra.mxu0 0.0
  %2176 = vmatprep.subr.mxu0 0.0
  %2177 = vmatpush1.msra.mxu0 0.0
  %2178 = vmatprep.subr.mxu0 0.0
  %2179 = vmatpush1.msra.mxu0 0.0
  %2180 = vmatprep.subr.mxu0 0.0
  %2181 = vmatpush1.msra.mxu0 0.0
  %2182 = vmatprep.subr.mxu0 0.0
  %2183 = vmatpush1.msra.mxu0 0.0
  %2184 = vmatprep.subr.mxu0 0.0
  %2185 = vmatpush1.msra.mxu0 0.0
  %2186 = vmatprep.subr.mxu0 0.0
  %2187 = vmatpush1.msra.mxu0 0.0
  %2188 = vmatprep.subr.mxu0 0.0
  %2189 = vmatpush1.msra.mxu0 0.0
  %2190 = vmatprep.subr.mxu0 %v2060
  %2191 = vmatpush1.msra.mxu0 %v2059
  %2192 = vmatprep.subr.mxu0 %v2056
  %2193 = vmatpush1.msra.mxu0 %v2055
  %2194 = vmatprep.subr.mxu0 %v2052
  %2195 = vmatpush1.msra.mxu0 %v2051
  %2196 = vmatprep.subr.mxu0 %v2048
  %2197 = vmatpush1.msra.mxu0 %v2047
  %2198 = vmatprep.subr.mxu0 0.0
  %2199 = vmatpush2.msra.mxu0 0.0
  %2200 = vmatprep.subr.mxu0 0.0
  %2201 = vmatpush2.msra.mxu0 0.0
  %2202 = vmatprep.subr.mxu0 0.0
  %2203 = vmatpush2.msra.mxu0 0.0
  %2204 = vmatprep.subr.mxu0 0.0
  %2205 = vmatpush2.msra.mxu0 0.0
  %2206 = vmatprep.subr.mxu0 0.0
  %2207 = vmatpush2.msra.mxu0 0.0
  %2208 = vmatprep.subr.mxu0 0.0
  %2209 = vmatpush2.msra.mxu0 0.0
  %2210 = vmatprep.subr.mxu0 0.0
  %2211 = vmatpush2.msra.mxu0 0.0
  %2212 = vmatprep.subr.mxu0 0.0
  %2213 = vmatpush2.msra.mxu0 0.0
  %2214 = vmatprep.subr.mxu0 0.0
  %2215 = vmatpush2.msra.mxu0 0.0
  %2216 = vmatprep.subr.mxu0 0.0
  %2217 = vmatpush2.msra.mxu0 0.0
  %2218 = vmatprep.subr.mxu0 0.0
  %2219 = vmatpush2.msra.mxu0 0.0
  %2220 = vmatprep.subr.mxu0 0.0
  %2221 = vmatpush2.msra.mxu0 0.0
  %2222 = vmatprep.subr.mxu0 0.0
  %2223 = vmatpush2.msra.mxu0 0.0
  %2224 = vmatprep.subr.mxu0 0.0
  %2225 = vmatpush2.msra.mxu0 0.0
  %2226 = vmatprep.subr.mxu0 0.0
  %2227 = vmatpush2.msra.mxu0 0.0
  %2228 = vmatprep.subr.mxu0 0.0
  %2229 = vmatpush2.msra.mxu0 0.0
  %2230 = vmatprep.mubr.f32.mxu0 0.0
  %2231 = vmatmul.mubr.f32.gmra.mxu0 %v2084
  %v2232 = vpop.f32.mrf.mxu0
  %v2233 = vadd.f32 %v2074, %v2232
  %v2234 = vpop.f32.mrf.mxu0
  %v2235 = vadd.f32 %v2078, %v2234
  %2236 = vmatprep.mubr.f32.mxu0 0.0
  %2237 = vmatmul.mubr.f32.gmra.mxu0 %v2087
  %v2238 = vpop.f32.mrf.mxu0
  %v2239 = vadd.f32 %v2074, %v2238
  %v2240 = vpop.f32.mrf.mxu0
  %v2241 = vadd.f32 %v2078, %v2240
  %2242 = vdwg.mxu0
  %2245 = vrot.lane.b32.xlu0 %v2156, 96
  %v2246 = vpop.permute.xlu0 %2245
  %2247 = vrot.lane.b32.xlu0 %v2162, 96
  %v2248 = vpop.permute.xlu0 %2247
  %2251 = vrot.lane.b32.xlu0 %v2156, 64
  %v2252 = vpop.permute.xlu0 %2251
  %2253 = vrot.lane.b32.xlu0 %v2162, 64
  %v2254 = vpop.permute.xlu0 %2253
  %2257 = vrot.lane.b32.xlu0 %v2156, 32
  %v2258 = vpop.permute.xlu0 %2257
  %2259 = vrot.lane.b32.xlu0 %v2162, 32
  %v2260 = vpop.permute.xlu0 %2259
  %v2263 = vmul.f32 %v2156, 0.17677669
  %v2264 = vmul.f32 %v2162, 0.17677669
  %v2265 = vmul.f32 %v2246, 0.17677669
  %v2266 = vmul.f32 %v2248, 0.17677669
  %v2267 = vmul.f32 %v2252, 0.17677669
  %v2268 = vmul.f32 %v2254, 0.17677669
  %v2269 = vmul.f32 %v2258, 0.17677669
  %v2270 = vmul.f32 %v2260, 0.17677669
  %2273 = vrot.lane.b32.xlu0 %v2158, 96
  %v2274 = vpop.permute.xlu0 %2273
  %2275 = vrot.lane.b32.xlu0 %v2164, 96
  %v2276 = vpop.permute.xlu0 %2275
  %2277 = vrot.lane.b32.xlu0 %v2158, 64
  %v2278 = vpop.permute.xlu0 %2277
  %2279 = vrot.lane.b32.xlu0 %v2164, 64
  %v2280 = vpop.permute.xlu0 %2279
  %2281 = vrot.lane.b32.xlu0 %v2158, 32
  %v2282 = vpop.permute.xlu0 %2281
  %2283 = vrot.lane.b32.xlu0 %v2164, 32
  %v2284 = vpop.permute.xlu0 %2283
  %2287 = vrot.lane.b32.xlu0 %v2233, 96
  %v2288 = vpop.permute.xlu0 %2287
  %2289 = vrot.lane.b32.xlu0 %v2239, 96
  %v2290 = vpop.permute.xlu0 %2289
  %2293 = vrot.lane.b32.xlu0 %v2233, 64
  %v2294 = vpop.permute.xlu0 %2293
  %2295 = vrot.lane.b32.xlu0 %v2239, 64
  %v2296 = vpop.permute.xlu0 %2295
  %2299 = vrot.lane.b32.xlu0 %v2233, 32
  %v2300 = vpop.permute.xlu0 %2299
  %2301 = vrot.lane.b32.xlu0 %v2239, 32
  %v2302 = vpop.permute.xlu0 %2301
  %v2306 = vsel %vm308, %v2263, 0
  %v2309 = vsel %vm308, %v2264, 0
  %v2312 = vsel %vm308, %v2265, 0
  %v2315 = vsel %vm308, %v2266, 0
  %v2318 = vsel %vm308, %v2267, 0
  %v2321 = vsel %vm308, %v2268, 0
  %v2324 = vsel %vm308, %v2269, 0
  %v2327 = vsel %vm308, %v2270, 0
  %v2329 = vsel %vm308, %v2158, 0
  %v2331 = vsel %vm308, %v2164, 0
  %v2333 = vsel %vm308, %v2274, 0
  %v2335 = vsel %vm308, %v2276, 0
  %v2337 = vsel %vm308, %v2278, 0
  %v2339 = vsel %vm308, %v2280, 0
  %v2341 = vsel %vm308, %v2282, 0
  %v2343 = vsel %vm308, %v2284, 0
  %2345 = vmatprep.subr.mxu0 0.0
  %2346 = vmatpush1.xpose.msra.mxu0 0.0
  %2347 = vmatprep.subr.mxu0 0.0
  %2348 = vmatpush1.xpose.msra.mxu0 0.0
  %2349 = vmatprep.subr.mxu0 0.0
  %2350 = vmatpush1.xpose.msra.mxu0 0.0
  %2351 = vmatprep.subr.mxu0 0.0
  %2352 = vmatpush1.xpose.msra.mxu0 0.0
  %2353 = vmatprep.subr.mxu0 0.0
  %2354 = vmatpush1.xpose.msra.mxu0 0.0
  %2355 = vmatprep.subr.mxu0 0.0
  %2356 = vmatpush1.xpose.msra.mxu0 0.0
  %2357 = vmatprep.subr.mxu0 0.0
  %2358 = vmatpush1.xpose.msra.mxu0 0.0
  %2359 = vmatprep.subr.mxu0 0.0
  %2360 = vmatpush1.xpose.msra.mxu0 0.0
  %2361 = vmatprep.subr.mxu0 0.0
  %2362 = vmatpush1.xpose.msra.mxu0 %v2343
  %2363 = vmatprep.subr.mxu0 0.0
  %2364 = vmatpush1.xpose.msra.mxu0 %v2341
  %2365 = vmatprep.subr.mxu0 0.0
  %2366 = vmatpush1.xpose.msra.mxu0 %v2339
  %2367 = vmatprep.subr.mxu0 0.0
  %2368 = vmatpush1.xpose.msra.mxu0 %v2337
  %2369 = vmatprep.subr.mxu0 0.0
  %2370 = vmatpush1.xpose.msra.mxu0 %v2335
  %2371 = vmatprep.subr.mxu0 0.0
  %2372 = vmatpush1.xpose.msra.mxu0 %v2333
  %2373 = vmatprep.subr.mxu0 0.0
  %2374 = vmatpush1.xpose.msra.mxu0 %v2331
  %2375 = vmatprep.subr.mxu0 0.0
  %2376 = vmatpush1.xpose.msra.mxu0 %v2329
  %2377 = vmatprep.subr.mxu0 0.0
  %2378 = vmatpush2.xpose.msra.mxu0 0.0
  %2379 = vmatprep.subr.mxu0 0.0
  %2380 = vmatpush2.xpose.msra.mxu0 0.0
  %2381 = vmatprep.subr.mxu0 0.0
  %2382 = vmatpush2.xpose.msra.mxu0 0.0
  %2383 = vmatprep.subr.mxu0 0.0
  %2384 = vmatpush2.xpose.msra.mxu0 0.0
  %2385 = vmatprep.subr.mxu0 0.0
  %2386 = vmatpush2.xpose.msra.mxu0 0.0
  %2387 = vmatprep.subr.mxu0 0.0
  %2388 = vmatpush2.xpose.msra.mxu0 0.0
  %2389 = vmatprep.subr.mxu0 0.0
  %2390 = vmatpush2.xpose.msra.mxu0 0.0
  %2391 = vmatprep.subr.mxu0 0.0
  %2392 = vmatpush2.xpose.msra.mxu0 0.0
  %2393 = vmatprep.subr.mxu0 0.0
  %2394 = vmatpush2.xpose.msra.mxu0 0.0
  %2395 = vmatprep.subr.mxu0 0.0
  %2396 = vmatpush2.xpose.msra.mxu0 0.0
  %2397 = vmatprep.subr.mxu0 0.0
  %2398 = vmatpush2.xpose.msra.mxu0 0.0
  %2399 = vmatprep.subr.mxu0 0.0
  %2400 = vmatpush2.xpose.msra.mxu0 0.0
  %2401 = vmatprep.subr.mxu0 0.0
  %2402 = vmatpush2.xpose.msra.mxu0 0.0
  %2403 = vmatprep.subr.mxu0 0.0
  %2404 = vmatpush2.xpose.msra.mxu0 0.0
  %2405 = vmatprep.subr.mxu0 0.0
  %2406 = vmatpush2.xpose.msra.mxu0 0.0
  %2407 = vmatprep.subr.mxu0 0.0
  %2408 = vmatpush2.xpose.msra.mxu0 0.0
  %2409 = vmatprep.mubr.f32.mxu0 0.0
  %2410 = vmatmul.mubr.f32.gmra.mxu0 %v2306
  %v2411 = vpop.f32.mrf.mxu0
  %v2412 = vadd.f32 %v49, %v2411
  %v2413 = vpop.f32.mrf.mxu0
  %2414 = vmatprep.mubr.f32.mxu0 0.0
  %2415 = vmatmul.mubr.f32.gmra.mxu0 %v2309
  %v2416 = vpop.f32.mrf.mxu0
  %v2417 = vadd.f32 %v50, %v2416
  %v2418 = vpop.f32.mrf.mxu0
  %2419 = vmatprep.mubr.f32.mxu0 0.0
  %2420 = vmatmul.mubr.f32.gmra.mxu0 %v2312
  %v2421 = vpop.f32.mrf.mxu0
  %v2422 = vadd.f32 %v51, %v2421
  %v2423 = vpop.f32.mrf.mxu0
  %2424 = vmatprep.mubr.f32.mxu0 0.0
  %2425 = vmatmul.mubr.f32.gmra.mxu0 %v2315
  %v2426 = vpop.f32.mrf.mxu0
  %v2427 = vadd.f32 %v52, %v2426
  %v2428 = vpop.f32.mrf.mxu0
  %2429 = vmatprep.mubr.f32.mxu0 0.0
  %2430 = vmatmul.mubr.f32.gmra.mxu0 %v2318
  %v2431 = vpop.f32.mrf.mxu0
  %v2432 = vadd.f32 %v53, %v2431
  %v2433 = vpop.f32.mrf.mxu0
  %2434 = vmatprep.mubr.f32.mxu0 0.0
  %2435 = vmatmul.mubr.f32.gmra.mxu0 %v2321
  %v2436 = vpop.f32.mrf.mxu0
  %v2437 = vadd.f32 %v54, %v2436
  %v2438 = vpop.f32.mrf.mxu0
  %2439 = vmatprep.mubr.f32.mxu0 0.0
  %2440 = vmatmul.mubr.f32.gmra.mxu0 %v2324
  %v2441 = vpop.f32.mrf.mxu0
  %v2442 = vadd.f32 %v55, %v2441
  %v2443 = vpop.f32.mrf.mxu0
  %2444 = vmatprep.mubr.f32.mxu0 0.0
  %2445 = vmatmul.mubr.f32.gmra.mxu0 %v2327
  %v2446 = vpop.f32.mrf.mxu0
  %v2447 = vadd.f32 %v56, %v2446
  %v2448 = vpop.f32.mrf.mxu0
  %2449 = vdwg.mxu0
  %v2450 = vsel %vm454, %v2412, -inf
  %2451 = vmax.xlane.f32.xlu0 %v2450
  %v2452 = vpop.xlane.xlu0 %2451
  %v2453 = vsel %vm454, %v2417, -inf
  %2454 = vmax.xlane.f32.xlu0 %v2453
  %v2455 = vpop.xlane.xlu0 %2454
  %v2456 = vsel %vm454, %v2422, -inf
  %2457 = vmax.xlane.f32.xlu0 %v2456
  %v2458 = vpop.xlane.xlu0 %2457
  %v2459 = vsel %vm454, %v2427, -inf
  %2460 = vmax.xlane.f32.xlu0 %v2459
  %v2461 = vpop.xlane.xlu0 %2460
  %v2462 = vsel %vm454, %v2432, -inf
  %2463 = vmax.xlane.f32.xlu0 %v2462
  %v2464 = vpop.xlane.xlu0 %2463
  %v2465 = vsel %vm454, %v2437, -inf
  %2466 = vmax.xlane.f32.xlu0 %v2465
  %v2467 = vpop.xlane.xlu0 %2466
  %v2468 = vsel %vm454, %v2442, -inf
  %2469 = vmax.xlane.f32.xlu0 %v2468
  %v2470 = vpop.xlane.xlu0 %2469
  %v2471 = vsel %vm454, %v2447, -inf
  %2472 = vmax.xlane.f32.xlu0 %v2471
  %v2473 = vpop.xlane.xlu0 %2472
  %v2474 = vsub.f32 %v2412, %v2452
  %v2475 = vsub.f32 %v2417, %v2455
  %v2476 = vsub.f32 %v2422, %v2458
  %v2477 = vsub.f32 %v2427, %v2461
  %v2478 = vsub.f32 %v2432, %v2464
  %v2479 = vsub.f32 %v2437, %v2467
  %v2480 = vsub.f32 %v2442, %v2470
  %v2481 = vsub.f32 %v2447, %v2473
  %v2482 = vmul.f32 %v2474, 1.442695
  %v2483 = vpow.pop %v2482
  %v2484 = vmul.f32 %v2475, 1.442695
  %v2485 = vpow.pop %v2484
  %v2486 = vmul.f32 %v2476, 1.442695
  %v2487 = vpow.pop %v2486
  %v2488 = vmul.f32 %v2477, 1.442695
  %v2489 = vpow.pop %v2488
  %v2490 = vmul.f32 %v2478, 1.442695
  %v2491 = vpow.pop %v2490
  %v2492 = vmul.f32 %v2479, 1.442695
  %v2493 = vpow.pop %v2492
  %v2494 = vmul.f32 %v2480, 1.442695
  %v2495 = vpow.pop %v2494
  %v2496 = vmul.f32 %v2481, 1.442695
  %v2497 = vpow.pop %v2496
  %v2498 = vsel %vm454, %v2483, 0.0
  %2499 = vadd.xlane.f32.xlu0 %v2498
  %v2500 = vpop.xlane.xlu0 %2499
  %v2501 = vsel %vm454, %v2485, 0.0
  %2502 = vadd.xlane.f32.xlu0 %v2501
  %v2503 = vpop.xlane.xlu0 %2502
  %v2504 = vsel %vm454, %v2487, 0.0
  %2505 = vadd.xlane.f32.xlu0 %v2504
  %v2506 = vpop.xlane.xlu0 %2505
  %v2507 = vsel %vm454, %v2489, 0.0
  %2508 = vadd.xlane.f32.xlu0 %v2507
  %v2509 = vpop.xlane.xlu0 %2508
  %v2510 = vsel %vm454, %v2491, 0.0
  %2511 = vadd.xlane.f32.xlu0 %v2510
  %v2512 = vpop.xlane.xlu0 %2511
  %v2513 = vsel %vm454, %v2493, 0.0
  %2514 = vadd.xlane.f32.xlu0 %v2513
  %v2515 = vpop.xlane.xlu0 %2514
  %v2516 = vsel %vm454, %v2495, 0.0
  %2517 = vadd.xlane.f32.xlu0 %v2516
  %v2518 = vpop.xlane.xlu0 %2517
  %v2519 = vsel %vm454, %v2497, 0.0
  %2520 = vadd.xlane.f32.xlu0 %v2519
  %v2521 = vpop.xlane.xlu0 %2520
  %vm2522 = vcmp.gt.f32.partialorder %v2452, -1e+29
  %vm2523 = vcmp.gt.f32.partialorder %v2455, -1e+29
  %vm2524 = vcmp.gt.f32.partialorder %v2458, -1e+29
  %vm2525 = vcmp.gt.f32.partialorder %v2461, -1e+29
  %vm2526 = vcmp.gt.f32.partialorder %v2464, -1e+29
  %vm2527 = vcmp.gt.f32.partialorder %v2467, -1e+29
  %vm2528 = vcmp.gt.f32.partialorder %v2470, -1e+29
  %vm2529 = vcmp.gt.f32.partialorder %v2473, -1e+29
  %v2530 = vrcp.pop %v2500
  %v2531 = vrcp.pop %v2503
  %v2532 = vrcp.pop %v2506
  %v2533 = vrcp.pop %v2509
  %v2534 = vrcp.pop %v2512
  %v2535 = vrcp.pop %v2515
  %v2536 = vrcp.pop %v2518
  %v2537 = vrcp.pop %v2521
  %v2538 = vmul.f32 %v2530, 0.25
  %v2539 = vmul.f32 %v2531, 0.25
  %v2540 = vmul.f32 %v2532, 0.25
  %v2541 = vmul.f32 %v2533, 0.25
  %v2542 = vmul.f32 %v2534, 0.25
  %v2543 = vmul.f32 %v2535, 0.25
  %v2544 = vmul.f32 %v2536, 0.25
  %v2545 = vmul.f32 %v2537, 0.25
  %v2546 = vsel %vm2522, %v2538, 0.0
  %v2547 = vsel %vm2523, %v2539, 0.0
  %v2548 = vsel %vm2524, %v2540, 0.0
  %v2549 = vsel %vm2525, %v2541, 0.0
  %v2550 = vsel %vm2526, %v2542, 0.0
  %v2551 = vsel %vm2527, %v2543, 0.0
  %v2552 = vsel %vm2528, %v2544, 0.0
  %v2553 = vsel %vm2529, %v2545, 0.0
  %v2554 = vmul.f32 %v2483, %v2546
  %v2555 = vmul.f32 %v2485, %v2547
  %v2556 = vmul.f32 %v2487, %v2548
  %v2557 = vmul.f32 %v2489, %v2549
  %v2558 = vmul.f32 %v2491, %v2550
  %v2559 = vmul.f32 %v2493, %v2551
  %v2560 = vmul.f32 %v2495, %v2552
  %v2561 = vmul.f32 %v2497, %v2553
  %v2563 = vsel %vm454, %v2554, 0
  %v2566 = vsel %vm454, %v2555, 0
  %v2569 = vsel %vm454, %v2556, 0
  %v2572 = vsel %vm454, %v2557, 0
  %v2575 = vsel %vm454, %v2558, 0
  %v2578 = vsel %vm454, %v2559, 0
  %v2581 = vsel %vm454, %v2560, 0
  %v2584 = vsel %vm454, %v2561, 0
  %2586 = vmatprep.subr.mxu0 0.0
  %2587 = vmatpush1.msra.mxu0 0.0
  %2588 = vmatprep.subr.mxu0 0.0
  %2589 = vmatpush1.msra.mxu0 0.0
  %2590 = vmatprep.subr.mxu0 0.0
  %2591 = vmatpush1.msra.mxu0 0.0
  %2592 = vmatprep.subr.mxu0 0.0
  %2593 = vmatpush1.msra.mxu0 0.0
  %2594 = vmatprep.subr.mxu0 0.0
  %2595 = vmatpush1.msra.mxu0 0.0
  %2596 = vmatprep.subr.mxu0 0.0
  %2597 = vmatpush1.msra.mxu0 0.0
  %2598 = vmatprep.subr.mxu0 0.0
  %2599 = vmatpush1.msra.mxu0 0.0
  %2600 = vmatprep.subr.mxu0 0.0
  %2601 = vmatpush1.msra.mxu0 0.0
  %2602 = vmatprep.subr.mxu0 0.0
  %2603 = vmatpush1.msra.mxu0 %v2302
  %2604 = vmatprep.subr.mxu0 0.0
  %2605 = vmatpush1.msra.mxu0 %v2300
  %2606 = vmatprep.subr.mxu0 0.0
  %2607 = vmatpush1.msra.mxu0 %v2296
  %2608 = vmatprep.subr.mxu0 0.0
  %2609 = vmatpush1.msra.mxu0 %v2294
  %2610 = vmatprep.subr.mxu0 0.0
  %2611 = vmatpush1.msra.mxu0 %v2290
  %2612 = vmatprep.subr.mxu0 0.0
  %2613 = vmatpush1.msra.mxu0 %v2288
  %2614 = vmatprep.subr.mxu0 0.0
  %2615 = vmatpush1.msra.mxu0 %v2239
  %2616 = vmatprep.subr.mxu0 0.0
  %2617 = vmatpush1.msra.mxu0 %v2233
  %2618 = vmatprep.subr.mxu0 0.0
  %2619 = vmatpush2.msra.mxu0 0.0
  %2620 = vmatprep.subr.mxu0 0.0
  %2621 = vmatpush2.msra.mxu0 0.0
  %2622 = vmatprep.subr.mxu0 0.0
  %2623 = vmatpush2.msra.mxu0 0.0
  %2624 = vmatprep.subr.mxu0 0.0
  %2625 = vmatpush2.msra.mxu0 0.0
  %2626 = vmatprep.subr.mxu0 0.0
  %2627 = vmatpush2.msra.mxu0 0.0
  %2628 = vmatprep.subr.mxu0 0.0
  %2629 = vmatpush2.msra.mxu0 0.0
  %2630 = vmatprep.subr.mxu0 0.0
  %2631 = vmatpush2.msra.mxu0 0.0
  %2632 = vmatprep.subr.mxu0 0.0
  %2633 = vmatpush2.msra.mxu0 0.0
  %2634 = vmatprep.subr.mxu0 0.0
  %2635 = vmatpush2.msra.mxu0 0.0
  %2636 = vmatprep.subr.mxu0 0.0
  %2637 = vmatpush2.msra.mxu0 0.0
  %2638 = vmatprep.subr.mxu0 0.0
  %2639 = vmatpush2.msra.mxu0 0.0
  %2640 = vmatprep.subr.mxu0 0.0
  %2641 = vmatpush2.msra.mxu0 0.0
  %2642 = vmatprep.subr.mxu0 0.0
  %2643 = vmatpush2.msra.mxu0 0.0
  %2644 = vmatprep.subr.mxu0 0.0
  %2645 = vmatpush2.msra.mxu0 0.0
  %2646 = vmatprep.subr.mxu0 0.0
  %2647 = vmatpush2.msra.mxu0 0.0
  %2648 = vmatprep.subr.mxu0 0.0
  %2649 = vmatpush2.msra.mxu0 0.0
  %2650 = vmatprep.mubr.f32.mxu0 0.0
  %2651 = vmatmul.mubr.f32.gmra.mxu0 %v2563
  %v2652 = vpop.f32.mrf.mxu0
  %v2653 = vadd.f32 0.0, %v2652
  %v2654 = vpop.f32.mrf.mxu0
  %2655 = vmatprep.mubr.f32.mxu0 0.0
  %2656 = vmatmul.mubr.f32.gmra.mxu0 %v2566
  %v2657 = vpop.f32.mrf.mxu0
  %v2658 = vadd.f32 0.0, %v2657
  %v2659 = vpop.f32.mrf.mxu0
  %2660 = vmatprep.mubr.f32.mxu0 0.0
  %2661 = vmatmul.mubr.f32.gmra.mxu0 %v2569
  %v2662 = vpop.f32.mrf.mxu0
  %v2663 = vadd.f32 0.0, %v2662
  %v2664 = vpop.f32.mrf.mxu0
  %2665 = vmatprep.mubr.f32.mxu0 0.0
  %2666 = vmatmul.mubr.f32.gmra.mxu0 %v2572
  %v2667 = vpop.f32.mrf.mxu0
  %v2668 = vadd.f32 0.0, %v2667
  %v2669 = vpop.f32.mrf.mxu0
  %2670 = vmatprep.mubr.f32.mxu0 0.0
  %2671 = vmatmul.mubr.f32.gmra.mxu0 %v2575
  %v2672 = vpop.f32.mrf.mxu0
  %v2673 = vadd.f32 0.0, %v2672
  %v2674 = vpop.f32.mrf.mxu0
  %2675 = vmatprep.mubr.f32.mxu0 0.0
  %2676 = vmatmul.mubr.f32.gmra.mxu0 %v2578
  %v2677 = vpop.f32.mrf.mxu0
  %v2678 = vadd.f32 0.0, %v2677
  %v2679 = vpop.f32.mrf.mxu0
  %2680 = vmatprep.mubr.f32.mxu0 0.0
  %2681 = vmatmul.mubr.f32.gmra.mxu0 %v2581
  %v2682 = vpop.f32.mrf.mxu0
  %v2683 = vadd.f32 0.0, %v2682
  %v2684 = vpop.f32.mrf.mxu0
  %2685 = vmatprep.mubr.f32.mxu0 0.0
  %2686 = vmatmul.mubr.f32.gmra.mxu0 %v2584
  %v2687 = vpop.f32.mrf.mxu0
  %v2688 = vadd.f32 0.0, %v2687
  %v2689 = vpop.f32.mrf.mxu0
  %2690 = vdwg.mxu0
  %v2691 = vadd.f32 %v2653, %v2663
  %v2692 = vadd.f32 %v2658, %v2668
  %v2693 = vadd.f32 %v2691, %v2673
  %v2694 = vadd.f32 %v2692, %v2678
  %v2695 = vadd.f32 %v2693, %v2683
  %v2696 = vadd.f32 %v2694, %v2688
  %v2697 = vadd.f32 %v2695, %v2235
  %v2698 = vadd.f32 %v2696, %v2241
  %v2699 = vmax.f32 %v2697, 0.0
  %v2700 = vmax.f32 %v2698, 0.0
  %v2701 = vld [vmem:[%s10] sm:$0xff]
  %v2702 = vld [vmem:[%s10 + $0x8] sm:$0xff]
  %v2703 = vld [vmem:[%s10 + $0x10] sm:$0xff]
  %v2704 = vld [vmem:[%s10 + $0x18] sm:$0xff]
  %v2705 = vld [vmem:[%s10 + $0x20] sm:$0xff]
  %v2706 = vld [vmem:[%s10 + $0x28] sm:$0xff]
  %v2707 = vld [vmem:[%s10 + $0x30] sm:$0xff]
  %v2708 = vld [vmem:[%s10 + $0x38] sm:$0xff]
  %v2709 = vld [vmem:[%s10 + $0x40] sm:$0xff]
  %v2710 = vld [vmem:[%s10 + $0x48] sm:$0xff]
  %v2711 = vld [vmem:[%s10 + $0x50] sm:$0xff]
  %v2712 = vld [vmem:[%s10 + $0x58] sm:$0xff]
  %v2713 = vld [vmem:[%s10 + $0x60] sm:$0xff]
  %v2714 = vld [vmem:[%s10 + $0x68] sm:$0xff]
  %v2715 = vld [vmem:[%s10 + $0x70] sm:$0xff]
  %v2716 = vld [vmem:[%s10 + $0x78] sm:$0xff]
  %v2717 = vld [vmem:[%s11] sm:$0xf]
  %v2719 = vlaneseq
  %v2720 = vshrl.u32 %v2719, 7
  %v2721 = vsub.s32 0, %v2720
  %v2722 = vrot.slane %v2717, %v2721
  %v2723 = vlaneseq
  %v2724 = vshrl.u32 %v2723, 7
  %v2725 = vsub.s32 1, %v2724
  %v2726 = vrot.slane %v2717, %v2725
  %v2727 = vlaneseq
  %v2728 = vshrl.u32 %v2727, 7
  %v2729 = vsub.s32 2, %v2728
  %v2730 = vrot.slane %v2717, %v2729
  %v2731 = vlaneseq
  %v2732 = vshrl.u32 %v2731, 7
  %v2733 = vsub.s32 3, %v2732
  %v2734 = vrot.slane %v2717, %v2733
  %v2740 = vsel %vm308, %v2699, 0
  %v2743 = vsel %vm308, %v2700, 0
  %2745 = vmatprep.subr.mxu0 0.0
  %2746 = vmatpush1.msra.mxu0 0.0
  %2747 = vmatprep.subr.mxu0 0.0
  %2748 = vmatpush1.msra.mxu0 0.0
  %2749 = vmatprep.subr.mxu0 0.0
  %2750 = vmatpush1.msra.mxu0 0.0
  %2751 = vmatprep.subr.mxu0 0.0
  %2752 = vmatpush1.msra.mxu0 0.0
  %2753 = vmatprep.subr.mxu0 0.0
  %2754 = vmatpush1.msra.mxu0 0.0
  %2755 = vmatprep.subr.mxu0 0.0
  %2756 = vmatpush1.msra.mxu0 0.0
  %2757 = vmatprep.subr.mxu0 0.0
  %2758 = vmatpush1.msra.mxu0 0.0
  %2759 = vmatprep.subr.mxu0 0.0
  %2760 = vmatpush1.msra.mxu0 0.0
  %2761 = vmatprep.subr.mxu0 0.0
  %2762 = vmatpush1.msra.mxu0 0.0
  %2763 = vmatprep.subr.mxu0 0.0
  %2764 = vmatpush1.msra.mxu0 0.0
  %2765 = vmatprep.subr.mxu0 0.0
  %2766 = vmatpush1.msra.mxu0 0.0
  %2767 = vmatprep.subr.mxu0 0.0
  %2768 = vmatpush1.msra.mxu0 0.0
  %2769 = vmatprep.subr.mxu0 %v2714
  %2770 = vmatpush1.msra.mxu0 %v2713
  %2771 = vmatprep.subr.mxu0 %v2710
  %2772 = vmatpush1.msra.mxu0 %v2709
  %2773 = vmatprep.subr.mxu0 %v2706
  %2774 = vmatpush1.msra.mxu0 %v2705
  %2775 = vmatprep.subr.mxu0 %v2702
  %2776 = vmatpush1.msra.mxu0 %v2701
  %2777 = vmatprep.subr.mxu0 0.0
  %2778 = vmatpush2.msra.mxu0 0.0
  %2779 = vmatprep.subr.mxu0 0.0
  %2780 = vmatpush2.msra.mxu0 0.0
  %2781 = vmatprep.subr.mxu0 0.0
  %2782 = vmatpush2.msra.mxu0 0.0
  %2783 = vmatprep.subr.mxu0 0.0
  %2784 = vmatpush2.msra.mxu0 0.0
  %2785 = vmatprep.subr.mxu0 0.0
  %2786 = vmatpush2.msra.mxu0 0.0
  %2787 = vmatprep.subr.mxu0 0.0
  %2788 = vmatpush2.msra.mxu0 0.0
  %2789 = vmatprep.subr.mxu0 0.0
  %2790 = vmatpush2.msra.mxu0 0.0
  %2791 = vmatprep.subr.mxu0 0.0
  %2792 = vmatpush2.msra.mxu0 0.0
  %2793 = vmatprep.subr.mxu0 0.0
  %2794 = vmatpush2.msra.mxu0 0.0
  %2795 = vmatprep.subr.mxu0 0.0
  %2796 = vmatpush2.msra.mxu0 0.0
  %2797 = vmatprep.subr.mxu0 0.0
  %2798 = vmatpush2.msra.mxu0 0.0
  %2799 = vmatprep.subr.mxu0 0.0
  %2800 = vmatpush2.msra.mxu0 0.0
  %2801 = vmatprep.subr.mxu0 0.0
  %2802 = vmatpush2.msra.mxu0 0.0
  %2803 = vmatprep.subr.mxu0 0.0
  %2804 = vmatpush2.msra.mxu0 0.0
  %2805 = vmatprep.subr.mxu0 0.0
  %2806 = vmatpush2.msra.mxu0 0.0
  %2807 = vmatprep.subr.mxu0 0.0
  %2808 = vmatpush2.msra.mxu0 0.0
  %2809 = vmatprep.mubr.f32.mxu0 0.0
  %2810 = vmatmul.mubr.f32.gmra.mxu0 %v2740
  %v2811 = vpop.f32.mrf.mxu0
  %v2812 = vadd.f32 %v2722, %v2811
  %v2813 = vpop.f32.mrf.mxu0
  %v2814 = vadd.f32 %v2726, %v2813
  %2815 = vmatprep.mubr.f32.mxu0 0.0
  %2816 = vmatmul.mubr.f32.gmra.mxu0 %v2743
  %v2817 = vpop.f32.mrf.mxu0
  %v2818 = vadd.f32 %v2722, %v2817
  %v2819 = vpop.f32.mrf.mxu0
  %v2820 = vadd.f32 %v2726, %v2819
  %2821 = vdwg.mxu0
  %2822 = vmatprep.subr.mxu0 0.0
  %2823 = vmatpush1.msra.mxu0 0.0
  %2824 = vmatprep.subr.mxu0 0.0
  %2825 = vmatpush1.msra.mxu0 0.0
  %2826 = vmatprep.subr.mxu0 0.0
  %2827 = vmatpush1.msra.mxu0 0.0
  %2828 = vmatprep.subr.mxu0 0.0
  %2829 = vmatpush1.msra.mxu0 0.0
  %2830 = vmatprep.subr.mxu0 0.0
  %2831 = vmatpush1.msra.mxu0 0.0
  %2832 = vmatprep.subr.mxu0 0.0
  %2833 = vmatpush1.msra.mxu0 0.0
  %2834 = vmatprep.subr.mxu0 0.0
  %2835 = vmatpush1.msra.mxu0 0.0
  %2836 = vmatprep.subr.mxu0 0.0
  %2837 = vmatpush1.msra.mxu0 0.0
  %2838 = vmatprep.subr.mxu0 0.0
  %2839 = vmatpush1.msra.mxu0 0.0
  %2840 = vmatprep.subr.mxu0 0.0
  %2841 = vmatpush1.msra.mxu0 0.0
  %2842 = vmatprep.subr.mxu0 0.0
  %2843 = vmatpush1.msra.mxu0 0.0
  %2844 = vmatprep.subr.mxu0 0.0
  %2845 = vmatpush1.msra.mxu0 0.0
  %2846 = vmatprep.subr.mxu0 %v2716
  %2847 = vmatpush1.msra.mxu0 %v2715
  %2848 = vmatprep.subr.mxu0 %v2712
  %2849 = vmatpush1.msra.mxu0 %v2711
  %2850 = vmatprep.subr.mxu0 %v2708
  %2851 = vmatpush1.msra.mxu0 %v2707
  %2852 = vmatprep.subr.mxu0 %v2704
  %2853 = vmatpush1.msra.mxu0 %v2703
  %2854 = vmatprep.subr.mxu0 0.0
  %2855 = vmatpush2.msra.mxu0 0.0
  %2856 = vmatprep.subr.mxu0 0.0
  %2857 = vmatpush2.msra.mxu0 0.0
  %2858 = vmatprep.subr.mxu0 0.0
  %2859 = vmatpush2.msra.mxu0 0.0
  %2860 = vmatprep.subr.mxu0 0.0
  %2861 = vmatpush2.msra.mxu0 0.0
  %2862 = vmatprep.subr.mxu0 0.0
  %2863 = vmatpush2.msra.mxu0 0.0
  %2864 = vmatprep.subr.mxu0 0.0
  %2865 = vmatpush2.msra.mxu0 0.0
  %2866 = vmatprep.subr.mxu0 0.0
  %2867 = vmatpush2.msra.mxu0 0.0
  %2868 = vmatprep.subr.mxu0 0.0
  %2869 = vmatpush2.msra.mxu0 0.0
  %2870 = vmatprep.subr.mxu0 0.0
  %2871 = vmatpush2.msra.mxu0 0.0
  %2872 = vmatprep.subr.mxu0 0.0
  %2873 = vmatpush2.msra.mxu0 0.0
  %2874 = vmatprep.subr.mxu0 0.0
  %2875 = vmatpush2.msra.mxu0 0.0
  %2876 = vmatprep.subr.mxu0 0.0
  %2877 = vmatpush2.msra.mxu0 0.0
  %2878 = vmatprep.subr.mxu0 0.0
  %2879 = vmatpush2.msra.mxu0 0.0
  %2880 = vmatprep.subr.mxu0 0.0
  %2881 = vmatpush2.msra.mxu0 0.0
  %2882 = vmatprep.subr.mxu0 0.0
  %2883 = vmatpush2.msra.mxu0 0.0
  %2884 = vmatprep.subr.mxu0 0.0
  %2885 = vmatpush2.msra.mxu0 0.0
  %2886 = vmatprep.mubr.f32.mxu0 0.0
  %2887 = vmatmul.mubr.f32.gmra.mxu0 %v2740
  %v2888 = vpop.f32.mrf.mxu0
  %v2889 = vadd.f32 %v2730, %v2888
  %v2890 = vpop.f32.mrf.mxu0
  %v2891 = vadd.f32 %v2734, %v2890
  %2892 = vmatprep.mubr.f32.mxu0 0.0
  %2893 = vmatmul.mubr.f32.gmra.mxu0 %v2743
  %v2894 = vpop.f32.mrf.mxu0
  %v2895 = vadd.f32 %v2730, %v2894
  %v2896 = vpop.f32.mrf.mxu0
  %v2897 = vadd.f32 %v2734, %v2896
  %2898 = vdwg.mxu0
  %2901 = vrot.lane.b32.xlu0 %v2812, 96
  %v2902 = vpop.permute.xlu0 %2901
  %2903 = vrot.lane.b32.xlu0 %v2818, 96
  %v2904 = vpop.permute.xlu0 %2903
  %2907 = vrot.lane.b32.xlu0 %v2812, 64
  %v2908 = vpop.permute.xlu0 %2907
  %2909 = vrot.lane.b32.xlu0 %v2818, 64
  %v2910 = vpop.permute.xlu0 %2909
  %2913 = vrot.lane.b32.xlu0 %v2812, 32
  %v2914 = vpop.permute.xlu0 %2913
  %2915 = vrot.lane.b32.xlu0 %v2818, 32
  %v2916 = vpop.permute.xlu0 %2915
  %v2919 = vmul.f32 %v2812, 0.17677669
  %v2920 = vmul.f32 %v2818, 0.17677669
  %v2921 = vmul.f32 %v2902, 0.17677669
  %v2922 = vmul.f32 %v2904, 0.17677669
  %v2923 = vmul.f32 %v2908, 0.17677669
  %v2924 = vmul.f32 %v2910, 0.17677669
  %v2925 = vmul.f32 %v2914, 0.17677669
  %v2926 = vmul.f32 %v2916, 0.17677669
  %2929 = vrot.lane.b32.xlu0 %v2814, 96
  %v2930 = vpop.permute.xlu0 %2929
  %2931 = vrot.lane.b32.xlu0 %v2820, 96
  %v2932 = vpop.permute.xlu0 %2931
  %2933 = vrot.lane.b32.xlu0 %v2814, 64
  %v2934 = vpop.permute.xlu0 %2933
  %2935 = vrot.lane.b32.xlu0 %v2820, 64
  %v2936 = vpop.permute.xlu0 %2935
  %2937 = vrot.lane.b32.xlu0 %v2814, 32
  %v2938 = vpop.permute.xlu0 %2937
  %2939 = vrot.lane.b32.xlu0 %v2820, 32
  %v2940 = vpop.permute.xlu0 %2939
  %2943 = vrot.lane.b32.xlu0 %v2889, 96
  %v2944 = vpop.permute.xlu0 %2943
  %2945 = vrot.lane.b32.xlu0 %v2895, 96
  %v2946 = vpop.permute.xlu0 %2945
  %2949 = vrot.lane.b32.xlu0 %v2889, 64
  %v2950 = vpop.permute.xlu0 %2949
  %2951 = vrot.lane.b32.xlu0 %v2895, 64
  %v2952 = vpop.permute.xlu0 %2951
  %2955 = vrot.lane.b32.xlu0 %v2889, 32
  %v2956 = vpop.permute.xlu0 %2955
  %2957 = vrot.lane.b32.xlu0 %v2895, 32
  %v2958 = vpop.permute.xlu0 %2957
  %v2962 = vsel %vm308, %v2919, 0
  %v2965 = vsel %vm308, %v2920, 0
  %v2968 = vsel %vm308, %v2921, 0
  %v2971 = vsel %vm308, %v2922, 0
  %v2974 = vsel %vm308, %v2923, 0
  %v2977 = vsel %vm308, %v2924, 0
  %v2980 = vsel %vm308, %v2925, 0
  %v2983 = vsel %vm308, %v2926, 0
  %v2985 = vsel %vm308, %v2814, 0
  %v2987 = vsel %vm308, %v2820, 0
  %v2989 = vsel %vm308, %v2930, 0
  %v2991 = vsel %vm308, %v2932, 0
  %v2993 = vsel %vm308, %v2934, 0
  %v2995 = vsel %vm308, %v2936, 0
  %v2997 = vsel %vm308, %v2938, 0
  %v2999 = vsel %vm308, %v2940, 0
  %3001 = vmatprep.subr.mxu0 0.0
  %3002 = vmatpush1.xpose.msra.mxu0 0.0
  %3003 = vmatprep.subr.mxu0 0.0
  %3004 = vmatpush1.xpose.msra.mxu0 0.0
  %3005 = vmatprep.subr.mxu0 0.0
  %3006 = vmatpush1.xpose.msra.mxu0 0.0
  %3007 = vmatprep.subr.mxu0 0.0
  %3008 = vmatpush1.xpose.msra.mxu0 0.0
  %3009 = vmatprep.subr.mxu0 0.0
  %3010 = vmatpush1.xpose.msra.mxu0 0.0
  %3011 = vmatprep.subr.mxu0 0.0
  %3012 = vmatpush1.xpose.msra.mxu0 0.0
  %3013 = vmatprep.subr.mxu0 0.0
  %3014 = vmatpush1.xpose.msra.mxu0 0.0
  %3015 = vmatprep.subr.mxu0 0.0
  %3016 = vmatpush1.xpose.msra.mxu0 0.0
  %3017 = vmatprep.subr.mxu0 0.0
  %3018 = vmatpush1.xpose.msra.mxu0 %v2999
  %3019 = vmatprep.subr.mxu0 0.0
  %3020 = vmatpush1.xpose.msra.mxu0 %v2997
  %3021 = vmatprep.subr.mxu0 0.0
  %3022 = vmatpush1.xpose.msra.mxu0 %v2995
  %3023 = vmatprep.subr.mxu0 0.0
  %3024 = vmatpush1.xpose.msra.mxu0 %v2993
  %3025 = vmatprep.subr.mxu0 0.0
  %3026 = vmatpush1.xpose.msra.mxu0 %v2991
  %3027 = vmatprep.subr.mxu0 0.0
  %3028 = vmatpush1.xpose.msra.mxu0 %v2989
  %3029 = vmatprep.subr.mxu0 0.0
  %3030 = vmatpush1.xpose.msra.mxu0 %v2987
  %3031 = vmatprep.subr.mxu0 0.0
  %3032 = vmatpush1.xpose.msra.mxu0 %v2985
  %3033 = vmatprep.subr.mxu0 0.0
  %3034 = vmatpush2.xpose.msra.mxu0 0.0
  %3035 = vmatprep.subr.mxu0 0.0
  %3036 = vmatpush2.xpose.msra.mxu0 0.0
  %3037 = vmatprep.subr.mxu0 0.0
  %3038 = vmatpush2.xpose.msra.mxu0 0.0
  %3039 = vmatprep.subr.mxu0 0.0
  %3040 = vmatpush2.xpose.msra.mxu0 0.0
  %3041 = vmatprep.subr.mxu0 0.0
  %3042 = vmatpush2.xpose.msra.mxu0 0.0
  %3043 = vmatprep.subr.mxu0 0.0
  %3044 = vmatpush2.xpose.msra.mxu0 0.0
  %3045 = vmatprep.subr.mxu0 0.0
  %3046 = vmatpush2.xpose.msra.mxu0 0.0
  %3047 = vmatprep.subr.mxu0 0.0
  %3048 = vmatpush2.xpose.msra.mxu0 0.0
  %3049 = vmatprep.subr.mxu0 0.0
  %3050 = vmatpush2.xpose.msra.mxu0 0.0
  %3051 = vmatprep.subr.mxu0 0.0
  %3052 = vmatpush2.xpose.msra.mxu0 0.0
  %3053 = vmatprep.subr.mxu0 0.0
  %3054 = vmatpush2.xpose.msra.mxu0 0.0
  %3055 = vmatprep.subr.mxu0 0.0
  %3056 = vmatpush2.xpose.msra.mxu0 0.0
  %3057 = vmatprep.subr.mxu0 0.0
  %3058 = vmatpush2.xpose.msra.mxu0 0.0
  %3059 = vmatprep.subr.mxu0 0.0
  %3060 = vmatpush2.xpose.msra.mxu0 0.0
  %3061 = vmatprep.subr.mxu0 0.0
  %3062 = vmatpush2.xpose.msra.mxu0 0.0
  %3063 = vmatprep.subr.mxu0 0.0
  %3064 = vmatpush2.xpose.msra.mxu0 0.0
  %3065 = vmatprep.mubr.f32.mxu0 0.0
  %3066 = vmatmul.mubr.f32.gmra.mxu0 %v2962
  %v3067 = vpop.f32.mrf.mxu0
  %v3068 = vadd.f32 %v49, %v3067
  %v3069 = vpop.f32.mrf.mxu0
  %3070 = vmatprep.mubr.f32.mxu0 0.0
  %3071 = vmatmul.mubr.f32.gmra.mxu0 %v2965
  %v3072 = vpop.f32.mrf.mxu0
  %v3073 = vadd.f32 %v50, %v3072
  %v3074 = vpop.f32.mrf.mxu0
  %3075 = vmatprep.mubr.f32.mxu0 0.0
  %3076 = vmatmul.mubr.f32.gmra.mxu0 %v2968
  %v3077 = vpop.f32.mrf.mxu0
  %v3078 = vadd.f32 %v51, %v3077
  %v3079 = vpop.f32.mrf.mxu0
  %3080 = vmatprep.mubr.f32.mxu0 0.0
  %3081 = vmatmul.mubr.f32.gmra.mxu0 %v2971
  %v3082 = vpop.f32.mrf.mxu0
  %v3083 = vadd.f32 %v52, %v3082
  %v3084 = vpop.f32.mrf.mxu0
  %3085 = vmatprep.mubr.f32.mxu0 0.0
  %3086 = vmatmul.mubr.f32.gmra.mxu0 %v2974
  %v3087 = vpop.f32.mrf.mxu0
  %v3088 = vadd.f32 %v53, %v3087
  %v3089 = vpop.f32.mrf.mxu0
  %3090 = vmatprep.mubr.f32.mxu0 0.0
  %3091 = vmatmul.mubr.f32.gmra.mxu0 %v2977
  %v3092 = vpop.f32.mrf.mxu0
  %v3093 = vadd.f32 %v54, %v3092
  %v3094 = vpop.f32.mrf.mxu0
  %3095 = vmatprep.mubr.f32.mxu0 0.0
  %3096 = vmatmul.mubr.f32.gmra.mxu0 %v2980
  %v3097 = vpop.f32.mrf.mxu0
  %v3098 = vadd.f32 %v55, %v3097
  %v3099 = vpop.f32.mrf.mxu0
  %3100 = vmatprep.mubr.f32.mxu0 0.0
  %3101 = vmatmul.mubr.f32.gmra.mxu0 %v2983
  %v3102 = vpop.f32.mrf.mxu0
  %v3103 = vadd.f32 %v56, %v3102
  %v3104 = vpop.f32.mrf.mxu0
  %3105 = vdwg.mxu0
  %v3106 = vsel %vm454, %v3068, -inf
  %3107 = vmax.xlane.f32.xlu0 %v3106
  %v3108 = vpop.xlane.xlu0 %3107
  %v3109 = vsel %vm454, %v3073, -inf
  %3110 = vmax.xlane.f32.xlu0 %v3109
  %v3111 = vpop.xlane.xlu0 %3110
  %v3112 = vsel %vm454, %v3078, -inf
  %3113 = vmax.xlane.f32.xlu0 %v3112
  %v3114 = vpop.xlane.xlu0 %3113
  %v3115 = vsel %vm454, %v3083, -inf
  %3116 = vmax.xlane.f32.xlu0 %v3115
  %v3117 = vpop.xlane.xlu0 %3116
  %v3118 = vsel %vm454, %v3088, -inf
  %3119 = vmax.xlane.f32.xlu0 %v3118
  %v3120 = vpop.xlane.xlu0 %3119
  %v3121 = vsel %vm454, %v3093, -inf
  %3122 = vmax.xlane.f32.xlu0 %v3121
  %v3123 = vpop.xlane.xlu0 %3122
  %v3124 = vsel %vm454, %v3098, -inf
  %3125 = vmax.xlane.f32.xlu0 %v3124
  %v3126 = vpop.xlane.xlu0 %3125
  %v3127 = vsel %vm454, %v3103, -inf
  %3128 = vmax.xlane.f32.xlu0 %v3127
  %v3129 = vpop.xlane.xlu0 %3128
  %v3130 = vsub.f32 %v3068, %v3108
  %v3131 = vsub.f32 %v3073, %v3111
  %v3132 = vsub.f32 %v3078, %v3114
  %v3133 = vsub.f32 %v3083, %v3117
  %v3134 = vsub.f32 %v3088, %v3120
  %v3135 = vsub.f32 %v3093, %v3123
  %v3136 = vsub.f32 %v3098, %v3126
  %v3137 = vsub.f32 %v3103, %v3129
  %v3138 = vmul.f32 %v3130, 1.442695
  %v3139 = vpow.pop %v3138
  %v3140 = vmul.f32 %v3131, 1.442695
  %v3141 = vpow.pop %v3140
  %v3142 = vmul.f32 %v3132, 1.442695
  %v3143 = vpow.pop %v3142
  %v3144 = vmul.f32 %v3133, 1.442695
  %v3145 = vpow.pop %v3144
  %v3146 = vmul.f32 %v3134, 1.442695
  %v3147 = vpow.pop %v3146
  %v3148 = vmul.f32 %v3135, 1.442695
  %v3149 = vpow.pop %v3148
  %v3150 = vmul.f32 %v3136, 1.442695
  %v3151 = vpow.pop %v3150
  %v3152 = vmul.f32 %v3137, 1.442695
  %v3153 = vpow.pop %v3152
  %v3154 = vsel %vm454, %v3139, 0.0
  %3155 = vadd.xlane.f32.xlu0 %v3154
  %v3156 = vpop.xlane.xlu0 %3155
  %v3157 = vsel %vm454, %v3141, 0.0
  %3158 = vadd.xlane.f32.xlu0 %v3157
  %v3159 = vpop.xlane.xlu0 %3158
  %v3160 = vsel %vm454, %v3143, 0.0
  %3161 = vadd.xlane.f32.xlu0 %v3160
  %v3162 = vpop.xlane.xlu0 %3161
  %v3163 = vsel %vm454, %v3145, 0.0
  %3164 = vadd.xlane.f32.xlu0 %v3163
  %v3165 = vpop.xlane.xlu0 %3164
  %v3166 = vsel %vm454, %v3147, 0.0
  %3167 = vadd.xlane.f32.xlu0 %v3166
  %v3168 = vpop.xlane.xlu0 %3167
  %v3169 = vsel %vm454, %v3149, 0.0
  %3170 = vadd.xlane.f32.xlu0 %v3169
  %v3171 = vpop.xlane.xlu0 %3170
  %v3172 = vsel %vm454, %v3151, 0.0
  %3173 = vadd.xlane.f32.xlu0 %v3172
  %v3174 = vpop.xlane.xlu0 %3173
  %v3175 = vsel %vm454, %v3153, 0.0
  %3176 = vadd.xlane.f32.xlu0 %v3175
  %v3177 = vpop.xlane.xlu0 %3176
  %vm3178 = vcmp.gt.f32.partialorder %v3108, -1e+29
  %vm3179 = vcmp.gt.f32.partialorder %v3111, -1e+29
  %vm3180 = vcmp.gt.f32.partialorder %v3114, -1e+29
  %vm3181 = vcmp.gt.f32.partialorder %v3117, -1e+29
  %vm3182 = vcmp.gt.f32.partialorder %v3120, -1e+29
  %vm3183 = vcmp.gt.f32.partialorder %v3123, -1e+29
  %vm3184 = vcmp.gt.f32.partialorder %v3126, -1e+29
  %vm3185 = vcmp.gt.f32.partialorder %v3129, -1e+29
  %v3186 = vrcp.pop %v3156
  %v3187 = vrcp.pop %v3159
  %v3188 = vrcp.pop %v3162
  %v3189 = vrcp.pop %v3165
  %v3190 = vrcp.pop %v3168
  %v3191 = vrcp.pop %v3171
  %v3192 = vrcp.pop %v3174
  %v3193 = vrcp.pop %v3177
  %v3194 = vmul.f32 %v3186, 0.25
  %v3195 = vmul.f32 %v3187, 0.25
  %v3196 = vmul.f32 %v3188, 0.25
  %v3197 = vmul.f32 %v3189, 0.25
  %v3198 = vmul.f32 %v3190, 0.25
  %v3199 = vmul.f32 %v3191, 0.25
  %v3200 = vmul.f32 %v3192, 0.25
  %v3201 = vmul.f32 %v3193, 0.25
  %v3202 = vsel %vm3178, %v3194, 0.0
  %v3203 = vsel %vm3179, %v3195, 0.0
  %v3204 = vsel %vm3180, %v3196, 0.0
  %v3205 = vsel %vm3181, %v3197, 0.0
  %v3206 = vsel %vm3182, %v3198, 0.0
  %v3207 = vsel %vm3183, %v3199, 0.0
  %v3208 = vsel %vm3184, %v3200, 0.0
  %v3209 = vsel %vm3185, %v3201, 0.0
  %v3210 = vmul.f32 %v3139, %v3202
  %v3211 = vmul.f32 %v3141, %v3203
  %v3212 = vmul.f32 %v3143, %v3204
  %v3213 = vmul.f32 %v3145, %v3205
  %v3214 = vmul.f32 %v3147, %v3206
  %v3215 = vmul.f32 %v3149, %v3207
  %v3216 = vmul.f32 %v3151, %v3208
  %v3217 = vmul.f32 %v3153, %v3209
  %v3219 = vsel %vm454, %v3210, 0
  %v3222 = vsel %vm454, %v3211, 0
  %v3225 = vsel %vm454, %v3212, 0
  %v3228 = vsel %vm454, %v3213, 0
  %v3231 = vsel %vm454, %v3214, 0
  %v3234 = vsel %vm454, %v3215, 0
  %v3237 = vsel %vm454, %v3216, 0
  %v3240 = vsel %vm454, %v3217, 0
  %3242 = vmatprep.subr.mxu0 0.0
  %3243 = vmatpush1.msra.mxu0 0.0
  %3244 = vmatprep.subr.mxu0 0.0
  %3245 = vmatpush1.msra.mxu0 0.0
  %3246 = vmatprep.subr.mxu0 0.0
  %3247 = vmatpush1.msra.mxu0 0.0
  %3248 = vmatprep.subr.mxu0 0.0
  %3249 = vmatpush1.msra.mxu0 0.0
  %3250 = vmatprep.subr.mxu0 0.0
  %3251 = vmatpush1.msra.mxu0 0.0
  %3252 = vmatprep.subr.mxu0 0.0
  %3253 = vmatpush1.msra.mxu0 0.0
  %3254 = vmatprep.subr.mxu0 0.0
  %3255 = vmatpush1.msra.mxu0 0.0
  %3256 = vmatprep.subr.mxu0 0.0
  %3257 = vmatpush1.msra.mxu0 0.0
  %3258 = vmatprep.subr.mxu0 0.0
  %3259 = vmatpush1.msra.mxu0 %v2958
  %3260 = vmatprep.subr.mxu0 0.0
  %3261 = vmatpush1.msra.mxu0 %v2956
  %3262 = vmatprep.subr.mxu0 0.0
  %3263 = vmatpush1.msra.mxu0 %v2952
  %3264 = vmatprep.subr.mxu0 0.0
  %3265 = vmatpush1.msra.mxu0 %v2950
  %3266 = vmatprep.subr.mxu0 0.0
  %3267 = vmatpush1.msra.mxu0 %v2946
  %3268 = vmatprep.subr.mxu0 0.0
  %3269 = vmatpush1.msra.mxu0 %v2944
  %3270 = vmatprep.subr.mxu0 0.0
  %3271 = vmatpush1.msra.mxu0 %v2895
  %3272 = vmatprep.subr.mxu0 0.0
  %3273 = vmatpush1.msra.mxu0 %v2889
  %3274 = vmatprep.subr.mxu0 0.0
  %3275 = vmatpush2.msra.mxu0 0.0
  %3276 = vmatprep.subr.mxu0 0.0
  %3277 = vmatpush2.msra.mxu0 0.0
  %3278 = vmatprep.subr.mxu0 0.0
  %3279 = vmatpush2.msra.mxu0 0.0
  %3280 = vmatprep.subr.mxu0 0.0
  %3281 = vmatpush2.msra.mxu0 0.0
  %3282 = vmatprep.subr.mxu0 0.0
  %3283 = vmatpush2.msra.mxu0 0.0
  %3284 = vmatprep.subr.mxu0 0.0
  %3285 = vmatpush2.msra.mxu0 0.0
  %3286 = vmatprep.subr.mxu0 0.0
  %3287 = vmatpush2.msra.mxu0 0.0
  %3288 = vmatprep.subr.mxu0 0.0
  %3289 = vmatpush2.msra.mxu0 0.0
  %3290 = vmatprep.subr.mxu0 0.0
  %3291 = vmatpush2.msra.mxu0 0.0
  %3292 = vmatprep.subr.mxu0 0.0
  %3293 = vmatpush2.msra.mxu0 0.0
  %3294 = vmatprep.subr.mxu0 0.0
  %3295 = vmatpush2.msra.mxu0 0.0
  %3296 = vmatprep.subr.mxu0 0.0
  %3297 = vmatpush2.msra.mxu0 0.0
  %3298 = vmatprep.subr.mxu0 0.0
  %3299 = vmatpush2.msra.mxu0 0.0
  %3300 = vmatprep.subr.mxu0 0.0
  %3301 = vmatpush2.msra.mxu0 0.0
  %3302 = vmatprep.subr.mxu0 0.0
  %3303 = vmatpush2.msra.mxu0 0.0
  %3304 = vmatprep.subr.mxu0 0.0
  %3305 = vmatpush2.msra.mxu0 0.0
  %3306 = vmatprep.mubr.f32.mxu0 0.0
  %3307 = vmatmul.mubr.f32.gmra.mxu0 %v3219
  %v3308 = vpop.f32.mrf.mxu0
  %v3309 = vadd.f32 0.0, %v3308
  %v3310 = vpop.f32.mrf.mxu0
  %3311 = vmatprep.mubr.f32.mxu0 0.0
  %3312 = vmatmul.mubr.f32.gmra.mxu0 %v3222
  %v3313 = vpop.f32.mrf.mxu0
  %v3314 = vadd.f32 0.0, %v3313
  %v3315 = vpop.f32.mrf.mxu0
  %3316 = vmatprep.mubr.f32.mxu0 0.0
  %3317 = vmatmul.mubr.f32.gmra.mxu0 %v3225
  %v3318 = vpop.f32.mrf.mxu0
  %v3319 = vadd.f32 0.0, %v3318
  %v3320 = vpop.f32.mrf.mxu0
  %3321 = vmatprep.mubr.f32.mxu0 0.0
  %3322 = vmatmul.mubr.f32.gmra.mxu0 %v3228
  %v3323 = vpop.f32.mrf.mxu0
  %v3324 = vadd.f32 0.0, %v3323
  %v3325 = vpop.f32.mrf.mxu0
  %3326 = vmatprep.mubr.f32.mxu0 0.0
  %3327 = vmatmul.mubr.f32.gmra.mxu0 %v3231
  %v3328 = vpop.f32.mrf.mxu0
  %v3329 = vadd.f32 0.0, %v3328
  %v3330 = vpop.f32.mrf.mxu0
  %3331 = vmatprep.mubr.f32.mxu0 0.0
  %3332 = vmatmul.mubr.f32.gmra.mxu0 %v3234
  %v3333 = vpop.f32.mrf.mxu0
  %v3334 = vadd.f32 0.0, %v3333
  %v3335 = vpop.f32.mrf.mxu0
  %3336 = vmatprep.mubr.f32.mxu0 0.0
  %3337 = vmatmul.mubr.f32.gmra.mxu0 %v3237
  %v3338 = vpop.f32.mrf.mxu0
  %v3339 = vadd.f32 0.0, %v3338
  %v3340 = vpop.f32.mrf.mxu0
  %3341 = vmatprep.mubr.f32.mxu0 0.0
  %3342 = vmatmul.mubr.f32.gmra.mxu0 %v3240
  %v3343 = vpop.f32.mrf.mxu0
  %v3344 = vadd.f32 0.0, %v3343
  %v3345 = vpop.f32.mrf.mxu0
  %3346 = vdwg.mxu0
  %v3347 = vadd.f32 %v3309, %v3319
  %v3348 = vadd.f32 %v3314, %v3324
  %v3349 = vadd.f32 %v3347, %v3329
  %v3350 = vadd.f32 %v3348, %v3334
  %v3351 = vadd.f32 %v3349, %v3339
  %v3352 = vadd.f32 %v3350, %v3344
  %v3353 = vadd.f32 %v3351, %v2891
  %v3354 = vadd.f32 %v3352, %v2897
  %v3355 = vmax.f32 %v3353, 0.0
  %v3356 = vmax.f32 %v3354, 0.0
  %v3357 = vld [vmem:[%s12] sm:$0xff]
  %v3358 = vld [vmem:[%s12 + $0x8] sm:$0xff]
  %v3359 = vld [vmem:[%s12 + $0x10] sm:$0xff]
  %v3360 = vld [vmem:[%s12 + $0x18] sm:$0xff]
  %v3361 = vld [vmem:[%s13] sm:$0x1]
  %v3363 = vlaneseq
  %v3364 = vshrl.u32 %v3363, 7
  %v3365 = vsub.s32 0, %v3364
  %v3366 = vrot.slane %v3361, %v3365
  %v3369 = vsel %vm308, %v3355, 0
  %v3372 = vsel %vm308, %v3356, 0
  %3374 = vmatprep.subr.mxu0 0.0
  %3375 = vmatpush1.msra.mxu0 0.0
  %3376 = vmatprep.subr.mxu0 0.0
  %3377 = vmatpush1.msra.mxu0 0.0
  %3378 = vmatprep.subr.mxu0 0.0
  %3379 = vmatpush1.msra.mxu0 0.0
  %3380 = vmatprep.subr.mxu0 0.0
  %3381 = vmatpush1.msra.mxu0 0.0
  %3382 = vmatprep.subr.mxu0 0.0
  %3383 = vmatpush1.msra.mxu0 0.0
  %3384 = vmatprep.subr.mxu0 0.0
  %3385 = vmatpush1.msra.mxu0 0.0
  %3386 = vmatprep.subr.mxu0 0.0
  %3387 = vmatpush1.msra.mxu0 0.0
  %3388 = vmatprep.subr.mxu0 0.0
  %3389 = vmatpush1.msra.mxu0 0.0
  %3390 = vmatprep.subr.mxu0 0.0
  %3391 = vmatpush1.msra.mxu0 0.0
  %3392 = vmatprep.subr.mxu0 0.0
  %3393 = vmatpush1.msra.mxu0 0.0
  %3394 = vmatprep.subr.mxu0 0.0
  %3395 = vmatpush1.msra.mxu0 0.0
  %3396 = vmatprep.subr.mxu0 0.0
  %3397 = vmatpush1.msra.mxu0 0.0
  %3398 = vmatprep.subr.mxu0 0.0
  %3399 = vmatpush1.msra.mxu0 %v3360
  %3400 = vmatprep.subr.mxu0 0.0
  %3401 = vmatpush1.msra.mxu0 %v3359
  %3402 = vmatprep.subr.mxu0 0.0
  %3403 = vmatpush1.msra.mxu0 %v3358
  %3404 = vmatprep.subr.mxu0 0.0
  %3405 = vmatpush1.msra.mxu0 %v3357
  %3406 = vmatprep.subr.mxu0 0.0
  %3407 = vmatpush2.msra.mxu0 0.0
  %3408 = vmatprep.subr.mxu0 0.0
  %3409 = vmatpush2.msra.mxu0 0.0
  %3410 = vmatprep.subr.mxu0 0.0
  %3411 = vmatpush2.msra.mxu0 0.0
  %3412 = vmatprep.subr.mxu0 0.0
  %3413 = vmatpush2.msra.mxu0 0.0
  %3414 = vmatprep.subr.mxu0 0.0
  %3415 = vmatpush2.msra.mxu0 0.0
  %3416 = vmatprep.subr.mxu0 0.0
  %3417 = vmatpush2.msra.mxu0 0.0
  %3418 = vmatprep.subr.mxu0 0.0
  %3419 = vmatpush2.msra.mxu0 0.0
  %3420 = vmatprep.subr.mxu0 0.0
  %3421 = vmatpush2.msra.mxu0 0.0
  %3422 = vmatprep.subr.mxu0 0.0
  %3423 = vmatpush2.msra.mxu0 0.0
  %3424 = vmatprep.subr.mxu0 0.0
  %3425 = vmatpush2.msra.mxu0 0.0
  %3426 = vmatprep.subr.mxu0 0.0
  %3427 = vmatpush2.msra.mxu0 0.0
  %3428 = vmatprep.subr.mxu0 0.0
  %3429 = vmatpush2.msra.mxu0 0.0
  %3430 = vmatprep.subr.mxu0 0.0
  %3431 = vmatpush2.msra.mxu0 0.0
  %3432 = vmatprep.subr.mxu0 0.0
  %3433 = vmatpush2.msra.mxu0 0.0
  %3434 = vmatprep.subr.mxu0 0.0
  %3435 = vmatpush2.msra.mxu0 0.0
  %3436 = vmatprep.subr.mxu0 0.0
  %3437 = vmatpush2.msra.mxu0 0.0
  %3438 = vmatprep.mubr.f32.mxu0 0.0
  %3439 = vmatmul.mubr.f32.gmra.mxu0 %v3369
  %v3440 = vpop.f32.mrf.mxu0
  %v3441 = vadd.f32 %v3366, %v3440
  %v3442 = vpop.f32.mrf.mxu0
  %3443 = vmatprep.mubr.f32.mxu0 0.0
  %3444 = vmatmul.mubr.f32.gmra.mxu0 %v3372
  %v3445 = vpop.f32.mrf.mxu0
  %v3446 = vadd.f32 %v3366, %v3445
  %v3447 = vpop.f32.mrf.mxu0
  %3448 = vdwg.mxu0
  %3451 = vrot.lane.b32.xlu0 %v3441, 120
  %v3452 = vpop.permute.xlu0 %3451
  %3453 = vrot.lane.b32.xlu0 %v3446, 120
  %v3454 = vpop.permute.xlu0 %3453
  %3457 = vrot.lane.b32.xlu0 %v3441, 112
  %v3458 = vpop.permute.xlu0 %3457
  %3459 = vrot.lane.b32.xlu0 %v3446, 112
  %v3460 = vpop.permute.xlu0 %3459
  %3463 = vrot.lane.b32.xlu0 %v3441, 104
  %v3464 = vpop.permute.xlu0 %3463
  %3465 = vrot.lane.b32.xlu0 %v3446, 104
  %v3466 = vpop.permute.xlu0 %3465
  %v3469 = vmul.f32 %v3441, 0.35355338
  %v3470 = vmul.f32 %v3446, 0.35355338
  %v3471 = vmul.f32 %v3452, 0.35355338
  %v3472 = vmul.f32 %v3454, 0.35355338
  %v3473 = vmul.f32 %v3458, 0.35355338
  %v3474 = vmul.f32 %v3460, 0.35355338
  %v3475 = vmul.f32 %v3464, 0.35355338
  %v3476 = vmul.f32 %v3466, 0.35355338
  %3477 = vrot.lane.b32.xlu0 %v3441, 96
  %v3478 = vpop.permute.xlu0 %3477
  %3479 = vrot.lane.b32.xlu0 %v3446, 96
  %v3480 = vpop.permute.xlu0 %3479
  %3481 = vrot.lane.b32.xlu0 %v3452, 96
  %v3482 = vpop.permute.xlu0 %3481
  %3483 = vrot.lane.b32.xlu0 %v3454, 96
  %v3484 = vpop.permute.xlu0 %3483
  %3485 = vrot.lane.b32.xlu0 %v3458, 96
  %v3486 = vpop.permute.xlu0 %3485
  %3487 = vrot.lane.b32.xlu0 %v3460, 96
  %v3488 = vpop.permute.xlu0 %3487
  %3489 = vrot.lane.b32.xlu0 %v3464, 96
  %v3490 = vpop.permute.xlu0 %3489
  %3491 = vrot.lane.b32.xlu0 %v3466, 96
  %v3492 = vpop.permute.xlu0 %3491
  %v3494 = vsel %vm85, %v3469, 0
  %v3497 = vsel %vm85, %v3470, 0
  %v3500 = vsel %vm85, %v3471, 0
  %v3503 = vsel %vm85, %v3472, 0
  %v3506 = vsel %vm85, %v3473, 0
  %v3509 = vsel %vm85, %v3474, 0
  %v3512 = vsel %vm85, %v3475, 0
  %v3515 = vsel %vm85, %v3476, 0
  %v3517 = vsel %vm85, %v3478, 0
  %v3519 = vsel %vm85, %v3480, 0
  %v3521 = vsel %vm85, %v3482, 0
  %v3523 = vsel %vm85, %v3484, 0
  %v3525 = vsel %vm85, %v3486, 0
  %v3527 = vsel %vm85, %v3488, 0
  %v3529 = vsel %vm85, %v3490, 0
  %v3531 = vsel %vm85, %v3492, 0
  %3533 = vmatprep.subr.mxu0 0.0
  %3534 = vmatpush1.xpose.msra.mxu0 0.0
  %3535 = vmatprep.subr.mxu0 0.0
  %3536 = vmatpush1.xpose.msra.mxu0 0.0
  %3537 = vmatprep.subr.mxu0 0.0
  %3538 = vmatpush1.xpose.msra.mxu0 0.0
  %3539 = vmatprep.subr.mxu0 0.0
  %3540 = vmatpush1.xpose.msra.mxu0 0.0
  %3541 = vmatprep.subr.mxu0 0.0
  %3542 = vmatpush1.xpose.msra.mxu0 0.0
  %3543 = vmatprep.subr.mxu0 0.0
  %3544 = vmatpush1.xpose.msra.mxu0 0.0
  %3545 = vmatprep.subr.mxu0 0.0
  %3546 = vmatpush1.xpose.msra.mxu0 0.0
  %3547 = vmatprep.subr.mxu0 0.0
  %3548 = vmatpush1.xpose.msra.mxu0 0.0
  %3549 = vmatprep.subr.mxu0 0.0
  %3550 = vmatpush1.xpose.msra.mxu0 %v3531
  %3551 = vmatprep.subr.mxu0 0.0
  %3552 = vmatpush1.xpose.msra.mxu0 %v3529
  %3553 = vmatprep.subr.mxu0 0.0
  %3554 = vmatpush1.xpose.msra.mxu0 %v3527
  %3555 = vmatprep.subr.mxu0 0.0
  %3556 = vmatpush1.xpose.msra.mxu0 %v3525
  %3557 = vmatprep.subr.mxu0 0.0
  %3558 = vmatpush1.xpose.msra.mxu0 %v3523
  %3559 = vmatprep.subr.mxu0 0.0
  %3560 = vmatpush1.xpose.msra.mxu0 %v3521
  %3561 = vmatprep.subr.mxu0 0.0
  %3562 = vmatpush1.xpose.msra.mxu0 %v3519
  %3563 = vmatprep.subr.mxu0 0.0
  %3564 = vmatpush1.xpose.msra.mxu0 %v3517
  %3565 = vmatprep.subr.mxu0 0.0
  %3566 = vmatpush2.xpose.msra.mxu0 0.0
  %3567 = vmatprep.subr.mxu0 0.0
  %3568 = vmatpush2.xpose.msra.mxu0 0.0
  %3569 = vmatprep.subr.mxu0 0.0
  %3570 = vmatpush2.xpose.msra.mxu0 0.0
  %3571 = vmatprep.subr.mxu0 0.0
  %3572 = vmatpush2.xpose.msra.mxu0 0.0
  %3573 = vmatprep.subr.mxu0 0.0
  %3574 = vmatpush2.xpose.msra.mxu0 0.0
  %3575 = vmatprep.subr.mxu0 0.0
  %3576 = vmatpush2.xpose.msra.mxu0 0.0
  %3577 = vmatprep.subr.mxu0 0.0
  %3578 = vmatpush2.xpose.msra.mxu0 0.0
  %3579 = vmatprep.subr.mxu0 0.0
  %3580 = vmatpush2.xpose.msra.mxu0 0.0
  %3581 = vmatprep.subr.mxu0 0.0
  %3582 = vmatpush2.xpose.msra.mxu0 0.0
  %3583 = vmatprep.subr.mxu0 0.0
  %3584 = vmatpush2.xpose.msra.mxu0 0.0
  %3585 = vmatprep.subr.mxu0 0.0
  %3586 = vmatpush2.xpose.msra.mxu0 0.0
  %3587 = vmatprep.subr.mxu0 0.0
  %3588 = vmatpush2.xpose.msra.mxu0 0.0
  %3589 = vmatprep.subr.mxu0 0.0
  %3590 = vmatpush2.xpose.msra.mxu0 0.0
  %3591 = vmatprep.subr.mxu0 0.0
  %3592 = vmatpush2.xpose.msra.mxu0 0.0
  %3593 = vmatprep.subr.mxu0 0.0
  %3594 = vmatpush2.xpose.msra.mxu0 0.0
  %3595 = vmatprep.subr.mxu0 0.0
  %3596 = vmatpush2.xpose.msra.mxu0 0.0
  %3597 = vmatprep.mubr.f32.mxu0 0.0
  %3598 = vmatmul.mubr.f32.gmra.mxu0 %v3494
  %v3599 = vpop.f32.mrf.mxu0
  %v3600 = vadd.f32 %v49, %v3599
  %v3601 = vpop.f32.mrf.mxu0
  %3602 = vmatprep.mubr.f32.mxu0 0.0
  %3603 = vmatmul.mubr.f32.gmra.mxu0 %v3497
  %v3604 = vpop.f32.mrf.mxu0
  %v3605 = vadd.f32 %v50, %v3604
  %v3606 = vpop.f32.mrf.mxu0
  %3607 = vmatprep.mubr.f32.mxu0 0.0
  %3608 = vmatmul.mubr.f32.gmra.mxu0 %v3500
  %v3609 = vpop.f32.mrf.mxu0
  %v3610 = vadd.f32 %v51, %v3609
  %v3611 = vpop.f32.mrf.mxu0
  %3612 = vmatprep.mubr.f32.mxu0 0.0
  %3613 = vmatmul.mubr.f32.gmra.mxu0 %v3503
  %v3614 = vpop.f32.mrf.mxu0
  %v3615 = vadd.f32 %v52, %v3614
  %v3616 = vpop.f32.mrf.mxu0
  %3617 = vmatprep.mubr.f32.mxu0 0.0
  %3618 = vmatmul.mubr.f32.gmra.mxu0 %v3506
  %v3619 = vpop.f32.mrf.mxu0
  %v3620 = vadd.f32 %v53, %v3619
  %v3621 = vpop.f32.mrf.mxu0
  %3622 = vmatprep.mubr.f32.mxu0 0.0
  %3623 = vmatmul.mubr.f32.gmra.mxu0 %v3509
  %v3624 = vpop.f32.mrf.mxu0
  %v3625 = vadd.f32 %v54, %v3624
  %v3626 = vpop.f32.mrf.mxu0
  %3627 = vmatprep.mubr.f32.mxu0 0.0
  %3628 = vmatmul.mubr.f32.gmra.mxu0 %v3512
  %v3629 = vpop.f32.mrf.mxu0
  %v3630 = vadd.f32 %v55, %v3629
  %v3631 = vpop.f32.mrf.mxu0
  %3632 = vmatprep.mubr.f32.mxu0 0.0
  %3633 = vmatmul.mubr.f32.gmra.mxu0 %v3515
  %v3634 = vpop.f32.mrf.mxu0
  %v3635 = vadd.f32 %v56, %v3634
  %v3636 = vpop.f32.mrf.mxu0
  %3637 = vdwg.mxu0
  %v3638 = vsel %vm454, %v3600, -inf
  %3639 = vmax.xlane.f32.xlu0 %v3638
  %v3640 = vpop.xlane.xlu0 %3639
  %v3641 = vsel %vm454, %v3605, -inf
  %3642 = vmax.xlane.f32.xlu0 %v3641
  %v3643 = vpop.xlane.xlu0 %3642
  %v3644 = vsel %vm454, %v3610, -inf
  %3645 = vmax.xlane.f32.xlu0 %v3644
  %v3646 = vpop.xlane.xlu0 %3645
  %v3647 = vsel %vm454, %v3615, -inf
  %3648 = vmax.xlane.f32.xlu0 %v3647
  %v3649 = vpop.xlane.xlu0 %3648
  %v3650 = vsel %vm454, %v3620, -inf
  %3651 = vmax.xlane.f32.xlu0 %v3650
  %v3652 = vpop.xlane.xlu0 %3651
  %v3653 = vsel %vm454, %v3625, -inf
  %3654 = vmax.xlane.f32.xlu0 %v3653
  %v3655 = vpop.xlane.xlu0 %3654
  %v3656 = vsel %vm454, %v3630, -inf
  %3657 = vmax.xlane.f32.xlu0 %v3656
  %v3658 = vpop.xlane.xlu0 %3657
  %v3659 = vsel %vm454, %v3635, -inf
  %3660 = vmax.xlane.f32.xlu0 %v3659
  %v3661 = vpop.xlane.xlu0 %3660
  %v3662 = vsub.f32 %v3600, %v3640
  %v3663 = vsub.f32 %v3605, %v3643
  %v3664 = vsub.f32 %v3610, %v3646
  %v3665 = vsub.f32 %v3615, %v3649
  %v3666 = vsub.f32 %v3620, %v3652
  %v3667 = vsub.f32 %v3625, %v3655
  %v3668 = vsub.f32 %v3630, %v3658
  %v3669 = vsub.f32 %v3635, %v3661
  %v3670 = vmul.f32 %v3662, 1.442695
  %v3671 = vpow.pop %v3670
  %v3672 = vmul.f32 %v3663, 1.442695
  %v3673 = vpow.pop %v3672
  %v3674 = vmul.f32 %v3664, 1.442695
  %v3675 = vpow.pop %v3674
  %v3676 = vmul.f32 %v3665, 1.442695
  %v3677 = vpow.pop %v3676
  %v3678 = vmul.f32 %v3666, 1.442695
  %v3679 = vpow.pop %v3678
  %v3680 = vmul.f32 %v3667, 1.442695
  %v3681 = vpow.pop %v3680
  %v3682 = vmul.f32 %v3668, 1.442695
  %v3683 = vpow.pop %v3682
  %v3684 = vmul.f32 %v3669, 1.442695
  %v3685 = vpow.pop %v3684
  %v3686 = vsel %vm454, %v3671, 0.0
  %3687 = vadd.xlane.f32.xlu0 %v3686
  %v3688 = vpop.xlane.xlu0 %3687
  %v3689 = vsel %vm454, %v3673, 0.0
  %3690 = vadd.xlane.f32.xlu0 %v3689
  %v3691 = vpop.xlane.xlu0 %3690
  %v3692 = vsel %vm454, %v3675, 0.0
  %3693 = vadd.xlane.f32.xlu0 %v3692
  %v3694 = vpop.xlane.xlu0 %3693
  %v3695 = vsel %vm454, %v3677, 0.0
  %3696 = vadd.xlane.f32.xlu0 %v3695
  %v3697 = vpop.xlane.xlu0 %3696
  %v3698 = vsel %vm454, %v3679, 0.0
  %3699 = vadd.xlane.f32.xlu0 %v3698
  %v3700 = vpop.xlane.xlu0 %3699
  %v3701 = vsel %vm454, %v3681, 0.0
  %3702 = vadd.xlane.f32.xlu0 %v3701
  %v3703 = vpop.xlane.xlu0 %3702
  %v3704 = vsel %vm454, %v3683, 0.0
  %3705 = vadd.xlane.f32.xlu0 %v3704
  %v3706 = vpop.xlane.xlu0 %3705
  %v3707 = vsel %vm454, %v3685, 0.0
  %3708 = vadd.xlane.f32.xlu0 %v3707
  %v3709 = vpop.xlane.xlu0 %3708
  %vm3710 = vcmp.gt.f32.partialorder %v3640, -1e+29
  %vm3711 = vcmp.gt.f32.partialorder %v3643, -1e+29
  %vm3712 = vcmp.gt.f32.partialorder %v3646, -1e+29
  %vm3713 = vcmp.gt.f32.partialorder %v3649, -1e+29
  %vm3714 = vcmp.gt.f32.partialorder %v3652, -1e+29
  %vm3715 = vcmp.gt.f32.partialorder %v3655, -1e+29
  %vm3716 = vcmp.gt.f32.partialorder %v3658, -1e+29
  %vm3717 = vcmp.gt.f32.partialorder %v3661, -1e+29
  %v3718 = vrcp.pop %v3688
  %v3719 = vrcp.pop %v3691
  %v3720 = vrcp.pop %v3694
  %v3721 = vrcp.pop %v3697
  %v3722 = vrcp.pop %v3700
  %v3723 = vrcp.pop %v3703
  %v3724 = vrcp.pop %v3706
  %v3725 = vrcp.pop %v3709
  %v3726 = vmul.f32 %v3718, 0.25
  %v3727 = vmul.f32 %v3719, 0.25
  %v3728 = vmul.f32 %v3720, 0.25
  %v3729 = vmul.f32 %v3721, 0.25
  %v3730 = vmul.f32 %v3722, 0.25
  %v3731 = vmul.f32 %v3723, 0.25
  %v3732 = vmul.f32 %v3724, 0.25
  %v3733 = vmul.f32 %v3725, 0.25
  %v3734 = vsel %vm3710, %v3726, 0.0
  %v3735 = vsel %vm3711, %v3727, 0.0
  %v3736 = vsel %vm3712, %v3728, 0.0
  %v3737 = vsel %vm3713, %v3729, 0.0
  %v3738 = vsel %vm3714, %v3730, 0.0
  %v3739 = vsel %vm3715, %v3731, 0.0
  %v3740 = vsel %vm3716, %v3732, 0.0
  %v3741 = vsel %vm3717, %v3733, 0.0
  %v3742 = vmul.f32 %v3671, %v3734
  %v3743 = vmul.f32 %v3673, %v3735
  %v3744 = vmul.f32 %v3675, %v3736
  %v3745 = vmul.f32 %v3677, %v3737
  %v3746 = vmul.f32 %v3679, %v3738
  %v3747 = vmul.f32 %v3681, %v3739
  %v3748 = vmul.f32 %v3683, %v3740
  %v3749 = vmul.f32 %v3685, %v3741
  %3750 = vrot.lane.b32.xlu0 %v3441, 64
  %v3751 = vpop.permute.xlu0 %3750
  %3752 = vrot.lane.b32.xlu0 %v3446, 64
  %v3753 = vpop.permute.xlu0 %3752
  %3754 = vrot.lane.b32.xlu0 %v3452, 64
  %v3755 = vpop.permute.xlu0 %3754
  %3756 = vrot.lane.b32.xlu0 %v3454, 64
  %v3757 = vpop.permute.xlu0 %3756
  %3758 = vrot.lane.b32.xlu0 %v3458, 64
  %v3759 = vpop.permute.xlu0 %3758
  %3760 = vrot.lane.b32.xlu0 %v3460, 64
  %v3761 = vpop.permute.xlu0 %3760
  %3762 = vrot.lane.b32.xlu0 %v3464, 64
  %v3763 = vpop.permute.xlu0 %3762
  %3764 = vrot.lane.b32.xlu0 %v3466, 64
  %v3765 = vpop.permute.xlu0 %3764
  %v3775 = vsel %vm454, %v3742, 0
  %v3778 = vsel %vm454, %v3743, 0
  %v3781 = vsel %vm454, %v3744, 0
  %v3784 = vsel %vm454, %v3745, 0
  %v3787 = vsel %vm454, %v3746, 0
  %v3790 = vsel %vm454, %v3747, 0
  %v3793 = vsel %vm454, %v3748, 0
  %v3796 = vsel %vm454, %v3749, 0
  %3798 = vmatprep.subr.mxu0 0.0
  %3799 = vmatpush1.msra.mxu0 0.0
  %3800 = vmatprep.subr.mxu0 0.0
  %3801 = vmatpush1.msra.mxu0 0.0
  %3802 = vmatprep.subr.mxu0 0.0
  %3803 = vmatpush1.msra.mxu0 0.0
  %3804 = vmatprep.subr.mxu0 0.0
  %3805 = vmatpush1.msra.mxu0 0.0
  %3806 = vmatprep.subr.mxu0 0.0
  %3807 = vmatpush1.msra.mxu0 0.0
  %3808 = vmatprep.subr.mxu0 0.0
  %3809 = vmatpush1.msra.mxu0 0.0
  %3810 = vmatprep.subr.mxu0 0.0
  %3811 = vmatpush1.msra.mxu0 0.0
  %3812 = vmatprep.subr.mxu0 0.0
  %3813 = vmatpush1.msra.mxu0 0.0
  %3814 = vmatprep.subr.mxu0 0.0
  %3815 = vmatpush1.msra.mxu0 %v3765
  %3816 = vmatprep.subr.mxu0 0.0
  %3817 = vmatpush1.msra.mxu0 %v3763
  %3818 = vmatprep.subr.mxu0 0.0
  %3819 = vmatpush1.msra.mxu0 %v3761
  %3820 = vmatprep.subr.mxu0 0.0
  %3821 = vmatpush1.msra.mxu0 %v3759
  %3822 = vmatprep.subr.mxu0 0.0
  %3823 = vmatpush1.msra.mxu0 %v3757
  %3824 = vmatprep.subr.mxu0 0.0
  %3825 = vmatpush1.msra.mxu0 %v3755
  %3826 = vmatprep.subr.mxu0 0.0
  %3827 = vmatpush1.msra.mxu0 %v3753
  %3828 = vmatprep.subr.mxu0 0.0
  %3829 = vmatpush1.msra.mxu0 %v3751
  %3830 = vmatprep.subr.mxu0 0.0
  %3831 = vmatpush2.msra.mxu0 0.0
  %3832 = vmatprep.subr.mxu0 0.0
  %3833 = vmatpush2.msra.mxu0 0.0
  %3834 = vmatprep.subr.mxu0 0.0
  %3835 = vmatpush2.msra.mxu0 0.0
  %3836 = vmatprep.subr.mxu0 0.0
  %3837 = vmatpush2.msra.mxu0 0.0
  %3838 = vmatprep.subr.mxu0 0.0
  %3839 = vmatpush2.msra.mxu0 0.0
  %3840 = vmatprep.subr.mxu0 0.0
  %3841 = vmatpush2.msra.mxu0 0.0
  %3842 = vmatprep.subr.mxu0 0.0
  %3843 = vmatpush2.msra.mxu0 0.0
  %3844 = vmatprep.subr.mxu0 0.0
  %3845 = vmatpush2.msra.mxu0 0.0
  %3846 = vmatprep.subr.mxu0 0.0
  %3847 = vmatpush2.msra.mxu0 0.0
  %3848 = vmatprep.subr.mxu0 0.0
  %3849 = vmatpush2.msra.mxu0 0.0
  %3850 = vmatprep.subr.mxu0 0.0
  %3851 = vmatpush2.msra.mxu0 0.0
  %3852 = vmatprep.subr.mxu0 0.0
  %3853 = vmatpush2.msra.mxu0 0.0
  %3854 = vmatprep.subr.mxu0 0.0
  %3855 = vmatpush2.msra.mxu0 0.0
  %3856 = vmatprep.subr.mxu0 0.0
  %3857 = vmatpush2.msra.mxu0 0.0
  %3858 = vmatprep.subr.mxu0 0.0
  %3859 = vmatpush2.msra.mxu0 0.0
  %3860 = vmatprep.subr.mxu0 0.0
  %3861 = vmatpush2.msra.mxu0 0.0
  %3862 = vmatprep.mubr.f32.mxu0 0.0
  %3863 = vmatmul.mubr.f32.gmra.mxu0 %v3775
  %v3864 = vpop.f32.mrf.mxu0
  %v3865 = vadd.f32 0.0, %v3864
  %v3866 = vpop.f32.mrf.mxu0
  %3867 = vmatprep.mubr.f32.mxu0 0.0
  %3868 = vmatmul.mubr.f32.gmra.mxu0 %v3778
  %v3869 = vpop.f32.mrf.mxu0
  %v3870 = vadd.f32 0.0, %v3869
  %v3871 = vpop.f32.mrf.mxu0
  %3872 = vmatprep.mubr.f32.mxu0 0.0
  %3873 = vmatmul.mubr.f32.gmra.mxu0 %v3781
  %v3874 = vpop.f32.mrf.mxu0
  %v3875 = vadd.f32 0.0, %v3874
  %v3876 = vpop.f32.mrf.mxu0
  %3877 = vmatprep.mubr.f32.mxu0 0.0
  %3878 = vmatmul.mubr.f32.gmra.mxu0 %v3784
  %v3879 = vpop.f32.mrf.mxu0
  %v3880 = vadd.f32 0.0, %v3879
  %v3881 = vpop.f32.mrf.mxu0
  %3882 = vmatprep.mubr.f32.mxu0 0.0
  %3883 = vmatmul.mubr.f32.gmra.mxu0 %v3787
  %v3884 = vpop.f32.mrf.mxu0
  %v3885 = vadd.f32 0.0, %v3884
  %v3886 = vpop.f32.mrf.mxu0
  %3887 = vmatprep.mubr.f32.mxu0 0.0
  %3888 = vmatmul.mubr.f32.gmra.mxu0 %v3790
  %v3889 = vpop.f32.mrf.mxu0
  %v3890 = vadd.f32 0.0, %v3889
  %v3891 = vpop.f32.mrf.mxu0
  %3892 = vmatprep.mubr.f32.mxu0 0.0
  %3893 = vmatmul.mubr.f32.gmra.mxu0 %v3793
  %v3894 = vpop.f32.mrf.mxu0
  %v3895 = vadd.f32 0.0, %v3894
  %v3896 = vpop.f32.mrf.mxu0
  %3897 = vmatprep.mubr.f32.mxu0 0.0
  %3898 = vmatmul.mubr.f32.gmra.mxu0 %v3796
  %v3899 = vpop.f32.mrf.mxu0
  %v3900 = vadd.f32 0.0, %v3899
  %v3901 = vpop.f32.mrf.mxu0
  %3902 = vdwg.mxu0
  %v3903 = vadd.f32 %v3865, %v3875
  %v3904 = vadd.f32 %v3870, %v3880
  %v3905 = vadd.f32 %v3903, %v3885
  %v3906 = vadd.f32 %v3904, %v3890
  %v3907 = vadd.f32 %v3905, %v3895
  %v3908 = vadd.f32 %v3906, %v3900
  %3909 = vrot.lane.b32.xlu0 %v3441, 32
  %v3910 = vpop.permute.xlu0 %3909
  %3911 = vrot.lane.b32.xlu0 %v3446, 32
  %v3912 = vpop.permute.xlu0 %3911
  %v3915 = vadd.f32 %v3907, %v3910
  %v3916 = vadd.f32 %v3908, %v3912
  %v3917 = vmax.f32 %v3915, 0.0
  %v3918 = vmax.f32 %v3916, 0.0
  %v3919 = vsel %vm85, %v3917, -inf
  %3920 = vmax.xlane.f32.xlu0 %v3919
  %v3921 = vpop.xlane.xlu0 %3920
  %v3922 = vsel %vm85, %v3918, -inf
  %3923 = vmax.xlane.f32.xlu0 %v3922
  %v3924 = vpop.xlane.xlu0 %3923
  %v3925 = vsub.f32 %v3917, %v3921
  %v3926 = vsub.f32 %v3918, %v3924
  %v3927 = vmul.f32 %v3925, 1.442695
  %v3928 = vpow.pop %v3927
  %v3929 = vmul.f32 %v3926, 1.442695
  %v3930 = vpow.pop %v3929
  %v3931 = vsel %vm85, %v3928, 0.0
  %3932 = vadd.xlane.f32.xlu0 %v3931
  %v3933 = vpop.xlane.xlu0 %3932
  %v3934 = vsel %vm85, %v3930, 0.0
  %3935 = vadd.xlane.f32.xlu0 %v3934
  %v3936 = vpop.xlane.xlu0 %3935
  %v3937 = vrcp.pop %v3933
  %v3938 = vmul.f32 %v3928, %v3937
  %v3939 = vrcp.pop %v3936
  %v3940 = vmul.f32 %v3930, %v3939
  %3941 = vst.msk [vmem:[%s15] sm:$0xff] %vm85, %v3938
  %3942 = vst.msk [vmem:[%s15 + $0x8] sm:$0xff] %vm85, %v3940
  // Predicated region
  $region58: #{coloring_transformer_forward.1} parent=0 // pred_check
    _
  $region59: #{coloring_transformer_forward.1} parent=0 // pred_check_branch
    %3944 = sbr.rel (0) target = $region61
  $region60: #{coloring_transformer_forward.1} parent=0 // pred_region
    _
  $region61: #{coloring_transformer_forward.1} parent=0 // pred_fallthru
    _
  // Predicated region
  $region62: #{coloring_transformer_forward.1} parent=0 // pred_check
    _
  $region63: #{coloring_transformer_forward.1} parent=0 // pred_check_branch
    %3946 = sbr.rel (0) target = $region65
  $region64: #{coloring_transformer_forward.1} parent=0 // pred_region
    _
  $region65: #{coloring_transformer_forward.1} parent=0 // pred_fallthru
    _
  // Predicated region
  $region66: #{coloring_transformer_forward.1} parent=0 // pred_check
    _
  $region67: #{coloring_transformer_forward.1} parent=0 // pred_check_branch
    %3948 = sbr.rel (0) target = $region69
  $region68: #{coloring_transformer_forward.1} parent=0 // pred_region
    _
  $region69: #{coloring_transformer_forward.1} parent=0 // pred_fallthru
    _
  // Predicated region
  $region70: #{coloring_transformer_forward.1} parent=0 // pred_check
    _
  $region71: #{coloring_transformer_forward.1} parent=0 // pred_check_branch
    %3950 = sbr.rel (0) target = $region73
  $region72: #{coloring_transformer_forward.1} parent=0 // pred_region
    _
  $region73: #{coloring_transformer_forward.1} parent=0 // pred_fallthru
    _

</llo_original>
